<compile_context>
chip_gen: v7x
topology: tpu7x:2x2x1
jax: 0.10.0
libtpu: 0.0.40
codegen_flags: <defaults>
</compile_context>

<pallas_src>
import jax
import jax.numpy as jnp
from jax.experimental import pallas as pl
from jax.experimental.pallas import tpu as pltpu

# ----------------------------- hyper-parameters -----------------------------
D = 32            # hp.module_out_dim
EMB = 32          # hp.embedding_size
VOCAB_PROT = 26   # vocab_protein_size
VOCAB_DRUG = 65   # vocab_drug_size
OUT_DIM = 1
OUT_PAD = 128     # lane-dense padded output width (sliced back to OUT_DIM)

B = 2             # example batch
LP = 16           # protein sequence length
LS = 8            # SMILES sequence length
KMER_DIM = 64     # k-mer feature width
N_NODES = 8       # graph nodes per molecule
GRAPH_F = 22      # num_input_features of Drug_Graph_Representation
MIXED_DIM = 64    # mixed fingerprint width
H1, H2, H3 = 1024, 1024, 256   # classifier hidden sizes (from nn.Sequential)


def _round_up(x, m):
    return ((x + m - 1) // m) * m


# ------------------------------ Pallas kernel -------------------------------
def _head_kernel(ds_ref, dg_ref, rest_ref,
                 wvo_ref, bvo_ref, lng_ref, lnb_ref,
                 w1_ref, b1_ref, w2_ref, b2_ref,
                 w3_ref, b3_ref, w4_ref, b4_ref,
                 out_ref):
    """Fused: drug cross-attention + 4-way concat + 4-layer classifier (eval)."""
    f32, bf16 = jnp.float32, jnp.bfloat16
    ds = ds_ref[...]      # drug semantics feature (BT, D) f32

    # ---- Drug_CrossAttentionBlock -----------------------------------------
    # TODO(synk): Drug_CrossAttentionBlock source not provided; standard MHA
    # (Q from semantics, K/V from graph) + residual + LayerNorm is assumed.
    # Each sample is a length-1 sequence, so softmax over the single key is
    # identically 1; the attended value reduces exactly to dg @ Wv @ Wo, which
    # is pre-folded outside the kernel into a single (D, D) matrix Wvo.
    attn = jnp.dot(dg_ref[...], wvo_ref[...],
                   preferred_element_type=f32) + bvo_ref[...]

    x = ds + attn                                    # residual (dropout = id, eval)
    mu = jnp.mean(x, axis=-1, keepdims=True)
    var = jnp.mean((x - mu) * (x - mu), axis=-1, keepdims=True)
    x = (x - mu) * jax.lax.rsqrt(var + 1e-5) * lng_ref[...] + lnb_ref[...]

    # ---- torch.cat([x, mixedFP, protein_seq, protein_kmer], -1) @ W1 -------
    # mixedFP/protein_seq/protein_kmer arrive pre-concatenated (BT, 3D) bf16;
    # single lane concat to K = 4*D = 128 and one MXU pass.
    feat = jnp.concatenate([x.astype(bf16), rest_ref[...]], axis=-1)
    h = jnp.dot(feat, w1_ref[...], preferred_element_type=f32) + b1_ref[...]
    h = jnp.maximum(h, 0.0)                          # ReLU (dropout = identity, eval)
    h = jnp.maximum(jnp.dot(h.astype(bf16), w2_ref[...], preferred_element_type=f32)
                    + b2_ref[...], 0.0)
    h = jnp.maximum(jnp.dot(h.astype(bf16), w3_ref[...], preferred_element_type=f32)
                    + b3_ref[...], 0.0)
    # final Linear(256, 1) done against a zero-padded lane-dense (H3, 128)
    # weight; column 0 is the real logit, sliced outside the kernel.  Output
    # stored bf16 to halve writeback traffic.
    out_ref[...] = (jnp.dot(h.astype(bf16), w4_ref[...], preferred_element_type=f32)
                    + b4_ref[...]).astype(out_ref.dtype)


def dtanet_head(feats, p, *, max_batch_tile=256):
    """feats: dict of the five (B, D) f32 features; p: f32 parameter dict."""
    Bq = feats["drug_semantics"].shape[0]
    B8 = _round_up(max(Bq, 8), 8)
    # Megacore-aware tiling: with >= 16 padded rows, split into >= 2 tiles so
    # the "parallel" grid axis can shard across both v7x TensorCores.
    if B8 >= 16:
        BT = min(max_batch_tile, _round_up((B8 + 1) // 2, 8))
    else:
        BT = B8
    B_pad = _round_up(B8, BT)
    n_tiles = B_pad // BT

    f32, bf16 = jnp.float32, jnp.bfloat16

    def pad_rows(a):
        return jnp.pad(a, ((0, B_pad - Bq), (0, 0)))

    # ---- feature consolidation: 3 kernel inputs instead of 5 ---------------
    ds = pad_rows(feats["drug_semantics"])                      # f32 (residual + LN)
    dg = pad_rows(feats["drug_graph"]).astype(bf16)             # only feeds one dot
    rest = pad_rows(jnp.concatenate(
        [feats["mixedFP"], feats["protein_seq"], feats["protein_kmer"]],
        axis=-1)).astype(bf16)                                  # (B_pad, 3D)

    # ---- weight prep --------------------------------------------------------
    # Fold the two linear attention projections (f32) into one, then cast bf16.
    wvo = (p["wv"] @ p["wo"]).astype(bf16)
    bvo = (p["bv"] @ p["wo"] + p["bo"]).astype(f32)
    # TODO(synk): on v5e/v6e the 1024x1024 w2 could additionally be int8
    # quantized (per-column scale folded into b2); v7x MXU is fp8-only, skipped.
    w1, w2, w3 = p["w1"].astype(bf16), p["w2"].astype(bf16), p["w3"].astype(bf16)
    w4 = jnp.pad(p["w4"], ((0, 0), (0, OUT_PAD - OUT_DIM))).astype(bf16)
    b4 = jnp.pad(p["b4"], ((0, 0), (0, OUT_PAD - OUT_DIM)))

    features = (ds, dg, rest)
    weights = (wvo, bvo, p["ln_g"], p["ln_b"],
               w1, p["b1"], w2, p["b2"], w3, p["b3"], w4, b4)

    feat_specs = [
        pl.BlockSpec((BT, D), lambda i: (i, 0)),
        pl.BlockSpec((BT, D), lambda i: (i, 0)),
        pl.BlockSpec((BT, 3 * D), lambda i: (i, 0)),
    ]
    # weights/biases: full-array block, constant index_map, single-buffered
    # (Buffered(1)) -> DMA'd once, VMEM-resident across every batch tile.
    weight_specs = [
        pl.BlockSpec(a.shape, lambda i: (0, 0), pipeline_mode=pl.Buffered(1))
        for a in weights
    ]

    flops = 2 * B_pad * (D * D + 4 * D * H1 + H1 * H2 + H2 * H3 + H3 * OUT_PAD)
    bytes_accessed = (sum(int(a.size) * a.dtype.itemsize for a in weights)
                      + sum(int(a.size) * a.dtype.itemsize for a in features)
                      + B_pad * OUT_PAD * 2)
    cost = pl.CostEstimate(flops=flops, transcendentals=B_pad,
                           bytes_accessed=bytes_accessed)

    out = pl.pallas_call(
        _head_kernel,
        out_shape=jax.ShapeDtypeStruct((B_pad, OUT_PAD), bf16),
        grid=(n_tiles,),
        in_specs=feat_specs + weight_specs,
        out_specs=pl.BlockSpec((BT, OUT_PAD), lambda i: (i, 0)),
        compiler_params=pltpu.CompilerParams(
            dimension_semantics=("parallel",),       # megacore batch split (v7x)
            vmem_limit_bytes=32 * 1024 * 1024),
        cost_estimate=cost,
    )(*features, *weights)
    return out[:Bq, :OUT_DIM].astype(f32)


# -------------------------- parameter construction --------------------------
def make_params(key):
    ks = iter(jax.random.split(key, 64))
    n = lambda shape, s=0.05: (s * jax.random.normal(next(ks), shape)).astype(jnp.float32)
    p = {}
    # encoder glue parameters
    p["prot_emb"] = n((VOCAB_PROT, EMB))
    p["prot_w"], p["prot_b"] = n((EMB, D)), n((1, D))
    p["kmer_w"], p["kmer_b"] = n((KMER_DIM, D)), n((1, D))
    p["graph_w"], p["graph_b"] = n((GRAPH_F, D)), n((1, D))
    p["drug_emb"] = n((VOCAB_DRUG, EMB))              # drug_semantics_embedder
    p["sem_w"], p["sem_b"] = n((EMB, D)), n((1, D))
    p["mixed_w"], p["mixed_b"] = n((MIXED_DIM, D)), n((1, D))
    # cross-attention: length-1 sequence => only V/O projections are live.
    # TODO(synk): a faithful Drug_CrossAttentionBlock with seq_len > 1 would
    # also need Wq/Wk, per-head split, 1/sqrt(head_dim) scaling and softmax.
    p["wv"], p["bv"] = n((D, D)), n((1, D))
    p["wo"], p["bo"] = n((D, D)), n((1, D))
    p["ln_g"] = jnp.ones((1, D), jnp.float32)
    p["ln_b"] = jnp.zeros((1, D), jnp.float32)
    # classifier: Linear(4D,1024) ReLU Linear(1024,1024) ReLU Linear(1024,256) ReLU Linear(256,1)
    p["w1"], p["b1"] = n((4 * D, H1)), n((1, H1))
    p["w2"], p["b2"] = n((H1, H2)), n((1, H2))
    p["w3"], p["b3"] = n((H2, H3)), n((1, H3))
    p["w4"], p["b4"] = n((H3, OUT_DIM)), n((1, OUT_DIM))
    return p


# ------------------------------ encoders (glue) -----------------------------
def run_encoders(p, data):
    # TODO(synk): Protein_Seq_Representation (conv blocks) source not provided;
    # replaced by embed -> mean-pool -> linear projection to module_out_dim.
    pe = jnp.take(p["prot_emb"], data["target"], axis=0)            # (B, LP, EMB)
    protein_seq = jax.nn.relu(pe.mean(axis=1) @ p["prot_w"] + p["prot_b"])

    # TODO(synk): Protein_Kmer_Representation source not provided; linear proj.
    protein_kmer = jax.nn.relu(data["kmer"] @ p["kmer_w"] + p["kmer_b"])

    # TODO(synk): Drug_Graph_Representation (DenseNet-style GNN) source not
    # provided; replaced by mean node pooling + linear projection.
    drug_graph = jax.nn.relu(data["graph_x"].mean(axis=1) @ p["graph_w"] + p["graph_b"])

    # drug semantics: nn.Embedding(vocab_drug_size, embedding_size) then encoder.
    se = jnp.take(p["drug_emb"], data["smiles"], axis=0)            # (B, LS, EMB)
    # TODO(synk): Drug_Semantics_Representation source not provided; mean-pool + linear.
    drug_semantics = jax.nn.relu(se.mean(axis=1) @ p["sem_w"] + p["sem_b"])

    # TODO(synk): Drug_MixedFP_Representation source not provided; linear proj.
    mixedFP = jax.nn.relu(data["mixedFP"] @ p["mixed_w"] + p["mixed_b"])

    return {
        "protein_seq": protein_seq.astype(jnp.float32),
        "protein_kmer": protein_kmer.astype(jnp.float32),
        "drug_graph": drug_graph.astype(jnp.float32),
        "drug_semantics": drug_semantics.astype(jnp.float32),
        "mixedFP": mixedFP.astype(jnp.float32),
    }


# ------------------------------- reference ----------------------------------
def head_reference(feats, p):
    """Plain-JAX mirror of the kernel math (same bf16 weight / dot-input cast)."""
    bf16, f32 = jnp.bfloat16, jnp.float32

    def bdot(a, w):
        return jnp.dot(a.astype(bf16), w.astype(bf16), preferred_element_type=f32)

    wvo = p["wv"] @ p["wo"]                       # folded V->O projection (f32)
    bvo = p["bv"] @ p["wo"] + p["bo"]
    attn = bdot(feats["drug_graph"], wvo) + bvo
    x = feats["drug_semantics"] + attn
    mu = x.mean(-1, keepdims=True)
    var = ((x - mu) ** 2).mean(-1, keepdims=True)
    x = (x - mu) * jax.lax.rsqrt(var + 1e-5) * p["ln_g"] + p["ln_b"]
    feat = jnp.concatenate([x, feats["mixedFP"], feats["protein_seq"],
                            feats["protein_kmer"]], axis=-1)
    h = jax.nn.relu(bdot(feat, p["w1"]) + p["b1"])
    h = jax.nn.relu(bdot(h, p["w2"]) + p["b2"])
    h = jax.nn.relu(bdot(h, p["w3"]) + p["b3"])
    logits = bdot(h, p["w4"]) + p["b4"]
    return logits.astype(bf16).astype(f32)        # mirror bf16 output writeback


# --------------------------------- main --------------------------------------
if __name__ == "__main__":
    key = jax.random.PRNGKey(0)
    kp, kd1, kd2, kd3, kd4, kd5 = jax.random.split(key, 6)

    params = make_params(kp)
    data = {
        "target":  jax.random.randint(kd1, (B, LP), 0, VOCAB_PROT),
        "kmer":    jax.random.normal(kd2, (B, KMER_DIM), jnp.float32),
        "graph_x": jax.random.normal(kd3, (B, N_NODES, GRAPH_F), jnp.float32),
        "smiles":  jax.random.randint(kd4, (B, LS), 0, VOCAB_DRUG),
        "mixedFP": jax.random.normal(kd5, (B, MIXED_DIM), jnp.float32),
    }

    feats = run_encoders(params, data)
    out = dtanet_head(feats, params)
    out = jax.block_until_ready(out)

    ref = head_reference(feats, params)
    assert out.shape == (B, OUT_DIM)
    assert jnp.allclose(out, ref, atol=3e-3, rtol=3e-3), (out, ref)
    print("KERNEL_OK")
</pallas_src>

<mosaic_0001>
module attributes {stable_mosaic.version = 11 : i64} {
  func.func @_head_kernel(%arg0: i32, %arg1: memref<8x32xf32, #tpu.memory_space<vmem>>, %arg2: memref<8x32xbf16, #tpu.memory_space<vmem>>, %arg3: memref<8x96xbf16, #tpu.memory_space<vmem>>, %arg4: memref<32x32xbf16, #tpu.memory_space<vmem>>, %arg5: memref<1x32xf32, #tpu.memory_space<vmem>>, %arg6: memref<1x32xf32, #tpu.memory_space<vmem>>, %arg7: memref<1x32xf32, #tpu.memory_space<vmem>>, %arg8: memref<128x1024xbf16, #tpu.memory_space<vmem>>, %arg9: memref<1x1024xf32, #tpu.memory_space<vmem>>, %arg10: memref<1024x1024xbf16, #tpu.memory_space<vmem>>, %arg11: memref<1x1024xf32, #tpu.memory_space<vmem>>, %arg12: memref<1024x256xbf16, #tpu.memory_space<vmem>>, %arg13: memref<1x256xf32, #tpu.memory_space<vmem>>, %arg14: memref<256x128xbf16, #tpu.memory_space<vmem>>, %arg15: memref<1x128xf32, #tpu.memory_space<vmem>>, %arg16: memref<8x128xbf16, #tpu.memory_space<vmem>>) attributes {dimension_semantics = [#tpu.dimension_semantics<parallel>], iteration_bounds = array<i64: 1>, scalar_prefetch = 0 : i64, scratch_operands = 0 : i64, tpu.core_type = #tpu.core_type<tc>, window_params = [{transform_indices = @transform_0, window_bounds = array<i64: 8, 32>}, {transform_indices = @transform_1, window_bounds = array<i64: 8, 32>}, {transform_indices = @transform_2, window_bounds = array<i64: 8, 96>}, {pipeline_mode = #tpu.pipeline_mode<synchronous>, transform_indices = @transform_3, window_bounds = array<i64: 32, 32>}, {pipeline_mode = #tpu.pipeline_mode<synchronous>, transform_indices = @transform_4, window_bounds = array<i64: 1, 32>}, {pipeline_mode = #tpu.pipeline_mode<synchronous>, transform_indices = @transform_5, window_bounds = array<i64: 1, 32>}, {pipeline_mode = #tpu.pipeline_mode<synchronous>, transform_indices = @transform_6, window_bounds = array<i64: 1, 32>}, {pipeline_mode = #tpu.pipeline_mode<synchronous>, transform_indices = @transform_7, window_bounds = array<i64: 128, 1024>}, {pipeline_mode = #tpu.pipeline_mode<synchronous>, transform_indices = @transform_8, window_bounds = array<i64: 1, 1024>}, {pipeline_mode = #tpu.pipeline_mode<synchronous>, transform_indices = @transform_9, window_bounds = array<i64: 1024, 1024>}, {pipeline_mode = #tpu.pipeline_mode<synchronous>, transform_indices = @transform_10, window_bounds = array<i64: 1, 1024>}, {pipeline_mode = #tpu.pipeline_mode<synchronous>, transform_indices = @transform_11, window_bounds = array<i64: 1024, 256>}, {pipeline_mode = #tpu.pipeline_mode<synchronous>, transform_indices = @transform_12, window_bounds = array<i64: 1, 256>}, {pipeline_mode = #tpu.pipeline_mode<synchronous>, transform_indices = @transform_13, window_bounds = array<i64: 256, 128>}, {pipeline_mode = #tpu.pipeline_mode<synchronous>, transform_indices = @transform_14, window_bounds = array<i64: 1, 128>}, {transform_indices = @transform_15, window_bounds = array<i64: 8, 128>}]} {
    %c0 = arith.constant 0 : index
    %c0_0 = arith.constant 0 : index
    %0 = vector.load %arg1[%c0, %c0_0] : memref<8x32xf32, #tpu.memory_space<vmem>>, vector<8x32xf32>
    %c0_1 = arith.constant 0 : index
    %c0_2 = arith.constant 0 : index
    %1 = vector.load %arg2[%c0_1, %c0_2] : memref<8x32xbf16, #tpu.memory_space<vmem>>, vector<8x32xbf16>
    %c0_3 = arith.constant 0 : index
    %c0_4 = arith.constant 0 : index
    %2 = vector.load %arg4[%c0_3, %c0_4] : memref<32x32xbf16, #tpu.memory_space<vmem>>, vector<32x32xbf16>
    %cst = arith.constant dense<0.000000e+00> : vector<8x32xf32>
    %3 = tpu.matmul %1, %2, %cst {dimension_numbers = #tpu.dot_dimension_numbers<[1], [0], [0], [1], [0, 0, 1, 1], [], []>} : vector<8x32xbf16>, vector<32x32xbf16>, vector<8x32xf32> -> vector<8x32xf32>
    %c0_5 = arith.constant 0 : index
    %c0_6 = arith.constant 0 : index
    %4 = vector.load %arg5[%c0_5, %c0_6] : memref<1x32xf32, #tpu.memory_space<vmem>>, vector<1x32xf32>
    %5 = vector.broadcast %4 : vector<1x32xf32> to vector<8x32xf32>
    %6 = arith.addf %3, %5 : vector<8x32xf32>
    %7 = arith.addf %0, %6 : vector<8x32xf32>
    %cst_7 = arith.constant dense<0.000000e+00> : vector<8xf32>
    %8 = vector.multi_reduction <add>, %7, %cst_7 [1] : vector<8x32xf32> to vector<8xf32>
    %9 = vector.shape_cast %8 : vector<8xf32> to vector<8x1xf32>
    %cst_8 = arith.constant 3.200000e+01 : f32
    %10 = vector.broadcast %cst_8 : f32 to vector<8x1xf32>
    %11 = arith.divf %9, %10 : vector<8x1xf32>
    %12 = vector.broadcast %11 : vector<8x1xf32> to vector<8x32xf32>
    %13 = arith.subf %7, %12 : vector<8x32xf32>
    %14 = vector.broadcast %11 : vector<8x1xf32> to vector<8x32xf32>
    %15 = arith.subf %7, %14 : vector<8x32xf32>
    %16 = arith.mulf %13, %15 : vector<8x32xf32>
    %cst_9 = arith.constant dense<0.000000e+00> : vector<8xf32>
    %17 = vector.multi_reduction <add>, %16, %cst_9 [1] : vector<8x32xf32> to vector<8xf32>
    %18 = vector.shape_cast %17 : vector<8xf32> to vector<8x1xf32>
    %cst_10 = arith.constant 3.200000e+01 : f32
    %19 = vector.broadcast %cst_10 : f32 to vector<8x1xf32>
    %20 = arith.divf %18, %19 : vector<8x1xf32>
    %21 = vector.broadcast %11 : vector<8x1xf32> to vector<8x32xf32>
    %22 = arith.subf %7, %21 : vector<8x32xf32>
    %cst_11 = arith.constant 9.99999974E-6 : f32
    %23 = vector.broadcast %cst_11 : f32 to vector<8x1xf32>
    %24 = arith.addf %20, %23 : vector<8x1xf32>
    %25 = math.rsqrt %24 : vector<8x1xf32>
    %26 = vector.broadcast %25 : vector<8x1xf32> to vector<8x32xf32>
    %27 = arith.mulf %22, %26 : vector<8x32xf32>
    %c0_12 = arith.constant 0 : index
    %c0_13 = arith.constant 0 : index
    %28 = vector.load %arg6[%c0_12, %c0_13] : memref<1x32xf32, #tpu.memory_space<vmem>>, vector<1x32xf32>
    %29 = vector.broadcast %28 : vector<1x32xf32> to vector<8x32xf32>
    %30 = arith.mulf %27, %29 : vector<8x32xf32>
    %c0_14 = arith.constant 0 : index
    %c0_15 = arith.constant 0 : index
    %31 = vector.load %arg7[%c0_14, %c0_15] : memref<1x32xf32, #tpu.memory_space<vmem>>, vector<1x32xf32>
    %32 = vector.broadcast %31 : vector<1x32xf32> to vector<8x32xf32>
    %33 = arith.addf %30, %32 : vector<8x32xf32>
    %34 = arith.truncf %33 : vector<8x32xf32> to vector<8x32xbf16>
    %c0_16 = arith.constant 0 : index
    %c0_17 = arith.constant 0 : index
    %35 = vector.load %arg3[%c0_16, %c0_17] : memref<8x96xbf16, #tpu.memory_space<vmem>>, vector<8x96xbf16>
    %36 = tpu.concatenate %34, %35 in 1 : vector<8x32xbf16>, vector<8x96xbf16> -> vector<8x128xbf16>
    %c0_18 = arith.constant 0 : index
    %c0_19 = arith.constant 0 : index
    %37 = vector.load %arg8[%c0_18, %c0_19] : memref<128x1024xbf16, #tpu.memory_space<vmem>>, vector<128x1024xbf16>
    %cst_20 = arith.constant dense<0.000000e+00> : vector<8x1024xf32>
    %38 = tpu.matmul %36, %37, %cst_20 {dimension_numbers = #tpu.dot_dimension_numbers<[1], [0], [0], [1], [0, 0, 1, 1], [], []>} : vector<8x128xbf16>, vector<128x1024xbf16>, vector<8x1024xf32> -> vector<8x1024xf32>
    %c0_21 = arith.constant 0 : index
    %c0_22 = arith.constant 0 : index
    %39 = vector.load %arg9[%c0_21, %c0_22] : memref<1x1024xf32, #tpu.memory_space<vmem>>, vector<1x1024xf32>
    %40 = vector.broadcast %39 : vector<1x1024xf32> to vector<8x1024xf32>
    %41 = arith.addf %38, %40 : vector<8x1024xf32>
    %cst_23 = arith.constant 0.000000e+00 : f32
    %42 = vector.broadcast %cst_23 : f32 to vector<8x1024xf32>
    %43 = arith.maximumf %41, %42 : vector<8x1024xf32>
    %44 = arith.truncf %43 : vector<8x1024xf32> to vector<8x1024xbf16>
    %c0_24 = arith.constant 0 : index
    %c0_25 = arith.constant 0 : index
    %45 = vector.load %arg10[%c0_24, %c0_25] : memref<1024x1024xbf16, #tpu.memory_space<vmem>>, vector<1024x1024xbf16>
    %cst_26 = arith.constant dense<0.000000e+00> : vector<8x1024xf32>
    %46 = tpu.matmul %44, %45, %cst_26 {dimension_numbers = #tpu.dot_dimension_numbers<[1], [0], [0], [1], [0, 0, 1, 1], [], []>} : vector<8x1024xbf16>, vector<1024x1024xbf16>, vector<8x1024xf32> -> vector<8x1024xf32>
    %c0_27 = arith.constant 0 : index
    %c0_28 = arith.constant 0 : index
    %47 = vector.load %arg11[%c0_27, %c0_28] : memref<1x1024xf32, #tpu.memory_space<vmem>>, vector<1x1024xf32>
    %48 = vector.broadcast %47 : vector<1x1024xf32> to vector<8x1024xf32>
    %49 = arith.addf %46, %48 : vector<8x1024xf32>
    %cst_29 = arith.constant 0.000000e+00 : f32
    %50 = vector.broadcast %cst_29 : f32 to vector<8x1024xf32>
    %51 = arith.maximumf %49, %50 : vector<8x1024xf32>
    %52 = arith.truncf %51 : vector<8x1024xf32> to vector<8x1024xbf16>
    %c0_30 = arith.constant 0 : index
    %c0_31 = arith.constant 0 : index
    %53 = vector.load %arg12[%c0_30, %c0_31] : memref<1024x256xbf16, #tpu.memory_space<vmem>>, vector<1024x256xbf16>
    %cst_32 = arith.constant dense<0.000000e+00> : vector<8x256xf32>
    %54 = tpu.matmul %52, %53, %cst_32 {dimension_numbers = #tpu.dot_dimension_numbers<[1], [0], [0], [1], [0, 0, 1, 1], [], []>} : vector<8x1024xbf16>, vector<1024x256xbf16>, vector<8x256xf32> -> vector<8x256xf32>
    %c0_33 = arith.constant 0 : index
    %c0_34 = arith.constant 0 : index
    %55 = vector.load %arg13[%c0_33, %c0_34] : memref<1x256xf32, #tpu.memory_space<vmem>>, vector<1x256xf32>
    %56 = vector.broadcast %55 : vector<1x256xf32> to vector<8x256xf32>
    %57 = arith.addf %54, %56 : vector<8x256xf32>
    %cst_35 = arith.constant 0.000000e+00 : f32
    %58 = vector.broadcast %cst_35 : f32 to vector<8x256xf32>
    %59 = arith.maximumf %57, %58 : vector<8x256xf32>
    %60 = arith.truncf %59 : vector<8x256xf32> to vector<8x256xbf16>
    %c0_36 = arith.constant 0 : index
    %c0_37 = arith.constant 0 : index
    %61 = vector.load %arg14[%c0_36, %c0_37] : memref<256x128xbf16, #tpu.memory_space<vmem>>, vector<256x128xbf16>
    %cst_38 = arith.constant dense<0.000000e+00> : vector<8x128xf32>
    %62 = tpu.matmul %60, %61, %cst_38 {dimension_numbers = #tpu.dot_dimension_numbers<[1], [0], [0], [1], [0, 0, 1, 1], [], []>} : vector<8x256xbf16>, vector<256x128xbf16>, vector<8x128xf32> -> vector<8x128xf32>
    %c0_39 = arith.constant 0 : index
    %c0_40 = arith.constant 0 : index
    %63 = vector.load %arg15[%c0_39, %c0_40] : memref<1x128xf32, #tpu.memory_space<vmem>>, vector<1x128xf32>
    %64 = vector.broadcast %63 : vector<1x128xf32> to vector<8x128xf32>
    %65 = arith.addf %62, %64 : vector<8x128xf32>
    %66 = arith.truncf %65 : vector<8x128xf32> to vector<8x128xbf16>
    %c0_41 = arith.constant 0 : index
    %c0_42 = arith.constant 0 : index
    %67 = vector.load %arg16[%c0_41, %c0_42] : memref<8x128xbf16, #tpu.memory_space<vmem>>, vector<8x128xbf16>
    tpu.vector_store %arg16[%c0_41, %c0_42], %66 {strides = array<i32>} : memref<8x128xbf16, #tpu.memory_space<vmem>>, vector<8x128xbf16>,
    return
  }
  func.func @transform_0(%arg0: i32) -> (i32, i32) {
    %c0_i32 = arith.constant 0 : i32
    %c0_i32_0 = arith.constant 0 : i32
    return %arg0, %c0_i32 : i32, i32
  }
  func.func @transform_1(%arg0: i32) -> (i32, i32) {
    %c0_i32 = arith.constant 0 : i32
    %c0_i32_0 = arith.constant 0 : i32
    return %arg0, %c0_i32 : i32, i32
  }
  func.func @transform_2(%arg0: i32) -> (i32, i32) {
    %c0_i32 = arith.constant 0 : i32
    %c0_i32_0 = arith.constant 0 : i32
    return %arg0, %c0_i32 : i32, i32
  }
  func.func @transform_3(%arg0: i32) -> (i32, i32) {
    %c0_i32 = arith.constant 0 : i32
    %c0_i32_0 = arith.constant 0 : i32
    %c0_i32_1 = arith.constant 0 : i32
    return %c0_i32, %c0_i32_0 : i32, i32
  }
  func.func @transform_4(%arg0: i32) -> (i32, i32) {
    %c0_i32 = arith.constant 0 : i32
    %c0_i32_0 = arith.constant 0 : i32
    %c0_i32_1 = arith.constant 0 : i32
    return %c0_i32, %c0_i32_0 : i32, i32
  }
  func.func @transform_5(%arg0: i32) -> (i32, i32) {
    %c0_i32 = arith.constant 0 : i32
    %c0_i32_0 = arith.constant 0 : i32
    %c0_i32_1 = arith.constant 0 : i32
    return %c0_i32, %c0_i32_0 : i32, i32
  }
  func.func @transform_6(%arg0: i32) -> (i32, i32) {
    %c0_i32 = arith.constant 0 : i32
    %c0_i32_0 = arith.constant 0 : i32
    %c0_i32_1 = arith.constant 0 : i32
    return %c0_i32, %c0_i32_0 : i32, i32
  }
  func.func @transform_7(%arg0: i32) -> (i32, i32) {
    %c0_i32 = arith.constant 0 : i32
    %c0_i32_0 = arith.constant 0 : i32
    %c0_i32_1 = arith.constant 0 : i32
    return %c0_i32, %c0_i32_0 : i32, i32
  }
  func.func @transform_8(%arg0: i32) -> (i32, i32) {
    %c0_i32 = arith.constant 0 : i32
    %c0_i32_0 = arith.constant 0 : i32
    %c0_i32_1 = arith.constant 0 : i32
    return %c0_i32, %c0_i32_0 : i32, i32
  }
  func.func @transform_9(%arg0: i32) -> (i32, i32) {
    %c0_i32 = arith.constant 0 : i32
    %c0_i32_0 = arith.constant 0 : i32
    %c0_i32_1 = arith.constant 0 : i32
    return %c0_i32, %c0_i32_0 : i32, i32
  }
  func.func @transform_10(%arg0: i32) -> (i32, i32) {
    %c0_i32 = arith.constant 0 : i32
    %c0_i32_0 = arith.constant 0 : i32
    %c0_i32_1 = arith.constant 0 : i32
    return %c0_i32, %c0_i32_0 : i32, i32
  }
  func.func @transform_11(%arg0: i32) -> (i32, i32) {
    %c0_i32 = arith.constant 0 : i32
    %c0_i32_0 = arith.constant 0 : i32
    %c0_i32_1 = arith.constant 0 : i32
    return %c0_i32, %c0_i32_0 : i32, i32
  }
  func.func @transform_12(%arg0: i32) -> (i32, i32) {
    %c0_i32 = arith.constant 0 : i32
    %c0_i32_0 = arith.constant 0 : i32
    %c0_i32_1 = arith.constant 0 : i32
    return %c0_i32, %c0_i32_0 : i32, i32
  }
  func.func @transform_13(%arg0: i32) -> (i32, i32) {
    %c0_i32 = arith.constant 0 : i32
    %c0_i32_0 = arith.constant 0 : i32
    %c0_i32_1 = arith.constant 0 : i32
    return %c0_i32, %c0_i32_0 : i32, i32
  }
  func.func @transform_14(%arg0: i32) -> (i32, i32) {
    %c0_i32 = arith.constant 0 : i32
    %c0_i32_0 = arith.constant 0 : i32
    %c0_i32_1 = arith.constant 0 : i32
    return %c0_i32, %c0_i32_0 : i32, i32
  }
  func.func @transform_15(%arg0: i32) -> (i32, i32) {
    %c0_i32 = arith.constant 0 : i32
    %c0_i32_0 = arith.constant 0 : i32
    return %arg0, %c0_i32 : i32, i32
  }
}

</mosaic_0001>

<llo_original>
// kernel: tpu_custom_call.1
$region0: #{tpu_custom_call.1}
  #allocation0 [shape = 'u32[]', space=smem, size = 0x4, offset = 0x4, fixed_abs, tag = 'smem constant byte address 0x4 - core index']
  #allocation1 [shape = 'u32[144,128]{1,0:T(1,128)}', space=vmem, size = 0x12000, scoped, tag = 'internal scratch']
  %s0 = inlined_call_operand.hbm [shape: f32[8,32], index: 0, kind: input, shape index: {}]
  %s1 = inlined_call_operand.hbm [shape: bf16[8,32], index: 1, kind: input, shape index: {}]
  %s2 = inlined_call_operand.hbm [shape: bf16[8,96], index: 2, kind: input, shape index: {}]
  %s3 = inlined_call_operand.hbm [shape: bf16[32,32], index: 3, kind: input, shape index: {}]
  %s4 = inlined_call_operand.hbm [shape: f32[1,32], index: 4, kind: input, shape index: {}]
  %s5 = inlined_call_operand.hbm [shape: f32[1,32], index: 5, kind: input, shape index: {}]
  %s6 = inlined_call_operand.hbm [shape: f32[1,32], index: 6, kind: input, shape index: {}]
  %s7 = inlined_call_operand.hbm [shape: bf16[128,1024], index: 7, kind: input, shape index: {}]
  %s8 = inlined_call_operand.hbm [shape: f32[1,1024], index: 8, kind: input, shape index: {}]
  %s9 = inlined_call_operand.hbm [shape: bf16[1024,1024], index: 9, kind: input, shape index: {}]
  %s10 = inlined_call_operand.hbm [shape: f32[1,1024], index: 10, kind: input, shape index: {}]
  %s11 = inlined_call_operand.hbm [shape: bf16[1024,256], index: 11, kind: input, shape index: {}]
  %s12 = inlined_call_operand.hbm [shape: f32[1,256], index: 12, kind: input, shape index: {}]
  %s13 = inlined_call_operand.hbm [shape: bf16[256,128], index: 13, kind: input, shape index: {}]
  %s14 = inlined_call_operand.hbm [shape: f32[1,128], index: 14, kind: input, shape index: {}]
  %s15 = inlined_call_operand.hbm [shape: bf16[8,128], index: 15, kind: output, shape index: {}]
  %s16 = sld [smem:[#allocation0]]
  $region130: #{tpu_custom_call.1} parent=0
    _
  %s18 = ssub.s32 1, %s16
  %s19 = scalar_select 0, %s18, %s16
  $region1: #{tpu_custom_call.1} parent=0
    #allocation2 [shape = 'u8[4096]{0}', space=vmem, size = 0x1000, scoped, tag = 'input window, operand 0, single buffered']
    #allocation3 [shape = 's32[1]{0}', space=sflag, size = 0x4, scoped, tag = 'scoped memory for tpu_custom_call.1']
    #allocation4 [shape = 's32[1]{0}', space=sflag, size = 0x4, scoped, tag = 'scoped memory for tpu_custom_call.1']
    #allocation5 [shape = 'u8[2048]{0}', space=vmem, size = 0x800, scoped, tag = 'input window, operand 1, single buffered']
    #allocation6 [shape = 's32[1]{0}', space=sflag, size = 0x4, scoped, tag = 'scoped memory for tpu_custom_call.1']
    #allocation7 [shape = 'u8[2048]{0}', space=vmem, size = 0x800, scoped, tag = 'input window, operand 2, single buffered']
    #allocation8 [shape = 'u8[8192]{0}', space=vmem, size = 0x2000, scoped, tag = 'input window, operand 3, single buffered']
    #allocation9 [shape = 's32[1]{0}', space=sflag, size = 0x4, scoped, tag = 'scoped memory for tpu_custom_call.1']
    #allocation10 [shape = 'u8[512]{0}', space=vmem, size = 0x400, scoped, tag = 'input window, operand 4, single buffered']
    #allocation11 [shape = 'u8[512]{0}', space=vmem, size = 0x400, scoped, tag = 'input window, operand 5, single buffered']
    #allocation12 [shape = 's32[1]{0}', space=sflag, size = 0x4, scoped, tag = 'scoped memory for tpu_custom_call.1']
    #allocation13 [shape = 'u8[512]{0}', space=vmem, size = 0x400, scoped, tag = 'input window, operand 6, single buffered']
    #allocation14 [shape = 'u8[262144]{0}', space=vmem, size = 0x40000, scoped, tag = 'input window, operand 7, single buffered']
    #allocation15 [shape = 's32[1]{0}', space=sflag, size = 0x4, scoped, tag = 'scoped memory for tpu_custom_call.1']
    #allocation16 [shape = 'u8[4096]{0}', space=vmem, size = 0x1000, scoped, tag = 'input window, operand 8, single buffered']
    #allocation17 [shape = 'u8[2097152]{0}', space=vmem, size = 0x200000, scoped, tag = 'input window, operand 9, single buffered']
    #allocation18 [shape = 's32[1]{0}', space=sflag, size = 0x4, scoped, tag = 'scoped memory for tpu_custom_call.1']
    #allocation19 [shape = 'u8[4096]{0}', space=vmem, size = 0x1000, scoped, tag = 'input window, operand 10, single buffered']
    #allocation20 [shape = 'u8[524288]{0}', space=vmem, size = 0x80000, scoped, tag = 'input window, operand 11, single buffered']
    #allocation21 [shape = 's32[1]{0}', space=sflag, size = 0x4, scoped, tag = 'scoped memory for tpu_custom_call.1']
    #allocation22 [shape = 'u8[1024]{0}', space=vmem, size = 0x400, scoped, tag = 'input window, operand 12, single buffered']
    #allocation23 [shape = 'u8[65536]{0}', space=vmem, size = 0x10000, scoped, tag = 'input window, operand 13, single buffered']
    #allocation24 [shape = 's32[1]{0}', space=sflag, size = 0x4, scoped, tag = 'scoped memory for tpu_custom_call.1']
    #allocation25 [shape = 'u8[512]{0}', space=vmem, size = 0x400, scoped, tag = 'input window, operand 14, single buffered']
    #allocation26 [shape = 'u8[2048]{0}', space=vmem, size = 0x800, scoped, tag = 'output window, operand 0, single buffered']
    %20 = vsyncpa [#allocation3], 0
    %21 = vsyncpa [#allocation6], 0
    %22 = vsyncpa [#allocation9], 0
    %23 = vsyncpa [#allocation12], 0
    %24 = vsyncpa [#allocation15], 0
    %25 = vsyncpa [#allocation18], 0
    %26 = vsyncpa [#allocation21], 0
    %27 = vsyncpa [#allocation24], 0
    %28 = vsyncpa [#allocation4], 0
    // Predicated region
    $region2: #{tpu_custom_call.1} parent=1 // pred_check
      _
    $region3: #{tpu_custom_call.1} parent=1 // pred_check_branch
      %30 = sbr.rel (0) target = $region5
    $region4: #{tpu_custom_call.1} parent=1 // pred_region
      %s32 = ssub.s32 128, 128
      %33 = vsyncadd [#allocation3], %s32
      %s35 = sshll.u32 [#allocation2], 4
      %s36 = int_to_ptr.vmem [resolvable:$true] %s35
      %38 = dma.hbm_to_vmem [thread:$0]  %s0, 128, %s36, [#allocation3]
    $region5: #{tpu_custom_call.1} parent=1 // pred_fallthru
      _
    // Predicated region
    $region6: #{tpu_custom_call.1} parent=1 // pred_check
      _
    $region7: #{tpu_custom_call.1} parent=1 // pred_check_branch
      %40 = sbr.rel (0) target = $region9
    $region8: #{tpu_custom_call.1} parent=1 // pred_region
      %s42 = ssub.s32 64, 64
      %43 = vsyncadd [#allocation6], %s42
      %s45 = sshll.u32 [#allocation5], 4
      %s46 = int_to_ptr.vmem [resolvable:$true] %s45
      %48 = dma.hbm_to_vmem [thread:$0]  %s1, 64, %s46, [#allocation6]
    $region9: #{tpu_custom_call.1} parent=1 // pred_fallthru
      _
    // Predicated region
    $region10: #{tpu_custom_call.1} parent=1 // pred_check
      _
    $region11: #{tpu_custom_call.1} parent=1 // pred_check_branch
      %50 = sbr.rel (0) target = $region13
    $region12: #{tpu_custom_call.1} parent=1 // pred_region
      %s52 = ssub.s32 64, 64
      %53 = vsyncadd [#allocation6], %s52
      %s55 = sshll.u32 [#allocation7], 4
      %s56 = int_to_ptr.vmem [resolvable:$true] %s55
      %58 = dma.hbm_to_vmem [thread:$0]  %s2, 64, %s56, [#allocation6]
    $region13: #{tpu_custom_call.1} parent=1 // pred_fallthru
      _
    // Predicated region
    $region14: #{tpu_custom_call.1} parent=1 // pred_check
      _
    $region15: #{tpu_custom_call.1} parent=1 // pred_check_branch
      %60 = sbr.rel (0) target = $region17
    $region16: #{tpu_custom_call.1} parent=1 // pred_region
      %s62 = ssub.s32 256, 256
      %63 = vsyncadd [#allocation9], %s62
      %s64 = sshll.u32 [#allocation8], 4
      %s65 = int_to_ptr.vmem [resolvable:$true] %s64
      %70 = dma.hbm_to_vmem [thread:$0]  %s3, 256, %s65, [#allocation9], 64, 64, 4
    $region17: #{tpu_custom_call.1} parent=1 // pred_fallthru
      _
    // Predicated region
    $region18: #{tpu_custom_call.1} parent=1 // pred_check
      _
    $region19: #{tpu_custom_call.1} parent=1 // pred_check_branch
      %72 = sbr.rel (0) target = $region21
    $region20: #{tpu_custom_call.1} parent=1 // pred_region
      %s74 = ssub.s32 16, 16
      %75 = vsyncadd [#allocation9], %s74
      %s77 = sshll.u32 [#allocation10], 4
      %s78 = int_to_ptr.vmem [resolvable:$true] %s77
      %80 = dma.hbm_to_vmem [thread:$0]  %s4, 16, %s78, [#allocation9]
    $region21: #{tpu_custom_call.1} parent=1 // pred_fallthru
      _
    // Predicated region
    $region22: #{tpu_custom_call.1} parent=1 // pred_check
      _
    $region23: #{tpu_custom_call.1} parent=1 // pred_check_branch
      %82 = sbr.rel (0) target = $region25
    $region24: #{tpu_custom_call.1} parent=1 // pred_region
      %s84 = ssub.s32 16, 16
      %85 = vsyncadd [#allocation12], %s84
      %s87 = sshll.u32 [#allocation11], 4
      %s88 = int_to_ptr.vmem [resolvable:$true] %s87
      %90 = dma.hbm_to_vmem [thread:$0]  %s5, 16, %s88, [#allocation12]
    $region25: #{tpu_custom_call.1} parent=1 // pred_fallthru
      _
    // Predicated region
    $region26: #{tpu_custom_call.1} parent=1 // pred_check
      _
    $region27: #{tpu_custom_call.1} parent=1 // pred_check_branch
      %92 = sbr.rel (0) target = $region29
    $region28: #{tpu_custom_call.1} parent=1 // pred_region
      %s94 = ssub.s32 16, 16
      %95 = vsyncadd [#allocation12], %s94
      %s97 = sshll.u32 [#allocation13], 4
      %s98 = int_to_ptr.vmem [resolvable:$true] %s97
      %100 = dma.hbm_to_vmem [thread:$0]  %s6, 16, %s98, [#allocation12]
    $region29: #{tpu_custom_call.1} parent=1 // pred_fallthru
      _
    // Predicated region
    $region30: #{tpu_custom_call.1} parent=1 // pred_check
      _
    $region31: #{tpu_custom_call.1} parent=1 // pred_check_branch
      %102 = sbr.rel (0) target = $region33
    $region32: #{tpu_custom_call.1} parent=1 // pred_region
      %s104 = ssub.s32 8192, 8192
      %105 = vsyncadd [#allocation15], %s104
      %s106 = sshll.u32 [#allocation14], 4
      %s107 = int_to_ptr.vmem [resolvable:$true] %s106
      %112 = dma.hbm_to_vmem [thread:$0]  %s7, 8192, %s107, [#allocation15], 512, 512, 32
    $region33: #{tpu_custom_call.1} parent=1 // pred_fallthru
      _
    // Predicated region
    $region34: #{tpu_custom_call.1} parent=1 // pred_check
      _
    $region35: #{tpu_custom_call.1} parent=1 // pred_check_branch
      %114 = sbr.rel (0) target = $region37
    $region36: #{tpu_custom_call.1} parent=1 // pred_region
      %s116 = ssub.s32 128, 128
      %117 = vsyncadd [#allocation15], %s116
      %s119 = sshll.u32 [#allocation16], 4
      %s120 = int_to_ptr.vmem [resolvable:$true] %s119
      %122 = dma.hbm_to_vmem [thread:$0]  %s8, 128, %s120, [#allocation15]
    $region37: #{tpu_custom_call.1} parent=1 // pred_fallthru
      _
    // Predicated region
    $region38: #{tpu_custom_call.1} parent=1 // pred_check
      _
    $region39: #{tpu_custom_call.1} parent=1 // pred_check_branch
      %124 = sbr.rel (0) target = $region41
    $region40: #{tpu_custom_call.1} parent=1 // pred_region
      %s126 = ssub.s32 65536, 65536
      %127 = vsyncadd [#allocation18], %s126
      %s128 = sshll.u32 [#allocation17], 4
      %s129 = int_to_ptr.vmem [resolvable:$true] %s128
      %134 = dma.hbm_to_vmem [thread:$0]  %s9, 65536, %s129, [#allocation18], 512, 512, 32
    $region41: #{tpu_custom_call.1} parent=1 // pred_fallthru
      _
    // Predicated region
    $region42: #{tpu_custom_call.1} parent=1 // pred_check
      _
    $region43: #{tpu_custom_call.1} parent=1 // pred_check_branch
      %136 = sbr.rel (0) target = $region45
    $region44: #{tpu_custom_call.1} parent=1 // pred_region
      %s138 = ssub.s32 128, 128
      %139 = vsyncadd [#allocation18], %s138
      %s141 = sshll.u32 [#allocation19], 4
      %s142 = int_to_ptr.vmem [resolvable:$true] %s141
      %144 = dma.hbm_to_vmem [thread:$0]  %s10, 128, %s142, [#allocation18]
    $region45: #{tpu_custom_call.1} parent=1 // pred_fallthru
      _
    // Predicated region
    $region46: #{tpu_custom_call.1} parent=1 // pred_check
      _
    $region47: #{tpu_custom_call.1} parent=1 // pred_check_branch
      %146 = sbr.rel (0) target = $region49
    $region48: #{tpu_custom_call.1} parent=1 // pred_region
      %s148 = ssub.s32 16384, 16384
      %149 = vsyncadd [#allocation21], %s148
      %s150 = sshll.u32 [#allocation20], 4
      %s151 = int_to_ptr.vmem [resolvable:$true] %s150
      %156 = dma.hbm_to_vmem [thread:$0]  %s11, 16384, %s151, [#allocation21], 128, 128, 8
    $region49: #{tpu_custom_call.1} parent=1 // pred_fallthru
      _
    // Predicated region
    $region50: #{tpu_custom_call.1} parent=1 // pred_check
      _
    $region51: #{tpu_custom_call.1} parent=1 // pred_check_branch
      %158 = sbr.rel (0) target = $region53
    $region52: #{tpu_custom_call.1} parent=1 // pred_region
      %s160 = ssub.s32 32, 32
      %161 = vsyncadd [#allocation21], %s160
      %s163 = sshll.u32 [#allocation22], 4
      %s164 = int_to_ptr.vmem [resolvable:$true] %s163
      %166 = dma.hbm_to_vmem [thread:$0]  %s12, 32, %s164, [#allocation21]
    $region53: #{tpu_custom_call.1} parent=1 // pred_fallthru
      _
    // Predicated region
    $region54: #{tpu_custom_call.1} parent=1 // pred_check
      _
    $region55: #{tpu_custom_call.1} parent=1 // pred_check_branch
      %168 = sbr.rel (0) target = $region57
    $region56: #{tpu_custom_call.1} parent=1 // pred_region
      %s170 = ssub.s32 2048, 2048
      %171 = vsyncadd [#allocation24], %s170
      %s172 = sshll.u32 [#allocation23], 4
      %s173 = int_to_ptr.vmem [resolvable:$true] %s172
      %178 = dma.hbm_to_vmem [thread:$0]  %s13, 2048, %s173, [#allocation24], 64, 64, 4
    $region57: #{tpu_custom_call.1} parent=1 // pred_fallthru
      _
    // Predicated region
    $region58: #{tpu_custom_call.1} parent=1 // pred_check
      _
    $region59: #{tpu_custom_call.1} parent=1 // pred_check_branch
      %180 = sbr.rel (0) target = $region61
    $region60: #{tpu_custom_call.1} parent=1 // pred_region
      %s182 = ssub.s32 16, 16
      %183 = vsyncadd [#allocation24], %s182
      %s185 = sshll.u32 [#allocation25], 4
      %s186 = int_to_ptr.vmem [resolvable:$true] %s185
      %188 = dma.hbm_to_vmem [thread:$0]  %s14, 16, %s186, [#allocation24]
    $region61: #{tpu_custom_call.1} parent=1 // pred_fallthru
      _
    // Predicated region
    $region62: #{tpu_custom_call.1} parent=1 // pred_check
      _
    $region63: #{tpu_custom_call.1} parent=1 // pred_check_branch
      %190 = sbr.rel (0) target = $region65
    $region64: #{tpu_custom_call.1} parent=1 // pred_region
      %191 = dma.done [#allocation3], 128
    $region65: #{tpu_custom_call.1} parent=1 // pred_fallthru
      _
    // Predicated region
    $region66: #{tpu_custom_call.1} parent=1 // pred_check
      _
    $region67: #{tpu_custom_call.1} parent=1 // pred_check_branch
      %193 = sbr.rel (0) target = $region69
    $region68: #{tpu_custom_call.1} parent=1 // pred_region
      %194 = dma.done [#allocation6], 64
    $region69: #{tpu_custom_call.1} parent=1 // pred_fallthru
      _
    // Predicated region
    $region70: #{tpu_custom_call.1} parent=1 // pred_check
      _
    $region71: #{tpu_custom_call.1} parent=1 // pred_check_branch
      %196 = sbr.rel (0) target = $region73
    $region72: #{tpu_custom_call.1} parent=1 // pred_region
      %197 = dma.done [#allocation6], 64
    $region73: #{tpu_custom_call.1} parent=1 // pred_fallthru
      _
    // Predicated region
    $region74: #{tpu_custom_call.1} parent=1 // pred_check
      _
    $region75: #{tpu_custom_call.1} parent=1 // pred_check_branch
      %199 = sbr.rel (0) target = $region77
    $region76: #{tpu_custom_call.1} parent=1 // pred_region
      %200 = dma.done [#allocation9], 256
    $region77: #{tpu_custom_call.1} parent=1 // pred_fallthru
      _
    // Predicated region
    $region78: #{tpu_custom_call.1} parent=1 // pred_check
      _
    $region79: #{tpu_custom_call.1} parent=1 // pred_check_branch
      %202 = sbr.rel (0) target = $region81
    $region80: #{tpu_custom_call.1} parent=1 // pred_region
      %203 = dma.done [#allocation9], 16
    $region81: #{tpu_custom_call.1} parent=1 // pred_fallthru
      _
    // Predicated region
    $region82: #{tpu_custom_call.1} parent=1 // pred_check
      _
    $region83: #{tpu_custom_call.1} parent=1 // pred_check_branch
      %205 = sbr.rel (0) target = $region85
    $region84: #{tpu_custom_call.1} parent=1 // pred_region
      %206 = dma.done [#allocation12], 16
    $region85: #{tpu_custom_call.1} parent=1 // pred_fallthru
      _
    // Predicated region
    $region86: #{tpu_custom_call.1} parent=1 // pred_check
      _
    $region87: #{tpu_custom_call.1} parent=1 // pred_check_branch
      %208 = sbr.rel (0) target = $region89
    $region88: #{tpu_custom_call.1} parent=1 // pred_region
      %209 = dma.done [#allocation12], 16
    $region89: #{tpu_custom_call.1} parent=1 // pred_fallthru
      _
    // Predicated region
    $region90: #{tpu_custom_call.1} parent=1 // pred_check
      _
    $region91: #{tpu_custom_call.1} parent=1 // pred_check_branch
      %211 = sbr.rel (0) target = $region93
    $region92: #{tpu_custom_call.1} parent=1 // pred_region
      %212 = dma.done [#allocation15], 8192
    $region93: #{tpu_custom_call.1} parent=1 // pred_fallthru
      _
    // Predicated region
    $region94: #{tpu_custom_call.1} parent=1 // pred_check
      _
    $region95: #{tpu_custom_call.1} parent=1 // pred_check_branch
      %214 = sbr.rel (0) target = $region97
    $region96: #{tpu_custom_call.1} parent=1 // pred_region
      %215 = dma.done [#allocation15], 128
    $region97: #{tpu_custom_call.1} parent=1 // pred_fallthru
      _
    // Predicated region
    $region98: #{tpu_custom_call.1} parent=1 // pred_check
      _
    $region99: #{tpu_custom_call.1} parent=1 // pred_check_branch
      %217 = sbr.rel (0) target = $region101
    $region100: #{tpu_custom_call.1} parent=1 // pred_region
      %218 = dma.done [#allocation18], 65536
    $region101: #{tpu_custom_call.1} parent=1 // pred_fallthru
      _
    // Predicated region
    $region102: #{tpu_custom_call.1} parent=1 // pred_check
      _
    $region103: #{tpu_custom_call.1} parent=1 // pred_check_branch
      %220 = sbr.rel (0) target = $region105
    $region104: #{tpu_custom_call.1} parent=1 // pred_region
      %221 = dma.done [#allocation18], 128
    $region105: #{tpu_custom_call.1} parent=1 // pred_fallthru
      _
    // Predicated region
    $region106: #{tpu_custom_call.1} parent=1 // pred_check
      _
    $region107: #{tpu_custom_call.1} parent=1 // pred_check_branch
      %223 = sbr.rel (0) target = $region109
    $region108: #{tpu_custom_call.1} parent=1 // pred_region
      %224 = dma.done [#allocation21], 16384
    $region109: #{tpu_custom_call.1} parent=1 // pred_fallthru
      _
    // Predicated region
    $region110: #{tpu_custom_call.1} parent=1 // pred_check
      _
    $region111: #{tpu_custom_call.1} parent=1 // pred_check_branch
      %226 = sbr.rel (0) target = $region113
    $region112: #{tpu_custom_call.1} parent=1 // pred_region
      %227 = dma.done [#allocation21], 32
    $region113: #{tpu_custom_call.1} parent=1 // pred_fallthru
      _
    // Predicated region
    $region114: #{tpu_custom_call.1} parent=1 // pred_check
      _
    $region115: #{tpu_custom_call.1} parent=1 // pred_check_branch
      %229 = sbr.rel (0) target = $region117
    $region116: #{tpu_custom_call.1} parent=1 // pred_region
      %230 = dma.done [#allocation24], 2048
    $region117: #{tpu_custom_call.1} parent=1 // pred_fallthru
      _
    // Predicated region
    $region118: #{tpu_custom_call.1} parent=1 // pred_check
      _
    $region119: #{tpu_custom_call.1} parent=1 // pred_check_branch
      %232 = sbr.rel (0) target = $region121
    $region120: #{tpu_custom_call.1} parent=1 // pred_region
      %233 = dma.done [#allocation24], 16
    $region121: #{tpu_custom_call.1} parent=1 // pred_fallthru
      _
    %v235 = vld [vmem:[#allocation2] sm:$0xff]
    %v236 = vld [vmem:[#allocation5] sm:$0xf]
    %v237 = vld [vmem:[#allocation8] sm:$0xf]
    %v238 = vld [vmem:[#allocation8 + $0x4] sm:$0xf]
    %v239 = vld [vmem:[#allocation8 + $0x8] sm:$0xf]
    %v240 = vld [vmem:[#allocation8 + $0xc] sm:$0xf]
    %v241 = vld [vmem:[#allocation10] sm:$0x1]
    %v243 = vlaneseq
    %v244 = vshrl.u32 %v243, 7
    %v245 = vsub.s32 0, %v244
    %v246 = vrot.slane %v241, %v245
    %v252 = vunpack.c.l.b16 %v237
    %v253 = vunpack.c.l.b16 %v238
    %v254 = vunpack.c.l.b16 %v239
    %v255 = vunpack.c.l.b16 %v240
    %v256 = vpack.c.b16 %v253, %v252
    %v257 = vpack.c.b16 %v255, %v254
    %vm260 = vcmask 261120
    %v262 = vsel %vm260, %v236, 0
    %264 = vmatprep.subr.bf16.mxu0 0
    %265 = vmatpush1.bf16.msra.mxu0 %v256
    %266 = vmatprep.subr.bf16.mxu0 0
    %267 = vmatpush1.bf16.msra.mxu0 %v257
    %268 = vmatprep.subr.bf16.mxu0 0
    %269 = vmatpush1.bf16.msra.mxu0 0
    %270 = vmatprep.subr.bf16.mxu0 0
    %271 = vmatpush1.bf16.msra.mxu0 0
    %272 = vmatprep.subr.bf16.mxu0 0
    %273 = vmatpush1.bf16.msra.mxu0 0
    %274 = vmatprep.subr.bf16.mxu0 0
    %275 = vmatpush1.bf16.msra.mxu0 0
    %276 = vmatprep.subr.bf16.mxu0 0
    %277 = vmatpush1.bf16.msra.mxu0 0
    %278 = vmatprep.subr.bf16.mxu0 0
    %279 = vmatpush1.bf16.msra.mxu0 0
    %280 = vmatprep.subr.bf16.mxu0 0
    %281 = vmatpush1.bf16.msra.mxu0 0
    %282 = vmatprep.subr.bf16.mxu0 0
    %283 = vmatpush1.bf16.msra.mxu0 0
    %284 = vmatprep.subr.bf16.mxu0 0
    %285 = vmatpush1.bf16.msra.mxu0 0
    %286 = vmatprep.subr.bf16.mxu0 0
    %287 = vmatpush1.bf16.msra.mxu0 0
    %288 = vmatprep.subr.bf16.mxu0 0
    %289 = vmatpush1.bf16.msra.mxu0 0
    %290 = vmatprep.subr.bf16.mxu0 0
    %291 = vmatpush1.bf16.msra.mxu0 0
    %292 = vmatprep.subr.bf16.mxu0 0
    %293 = vmatpush1.bf16.msra.mxu0 0
    %294 = vmatprep.subr.bf16.mxu0 0
    %295 = vmatpush1.bf16.msra.mxu0 0
    %296 = vmatprep.mubr.bf16.mxu0 0
    %297 = vmatmul.mubr.bf16.gmra.mrb[0].mxu0 %v262
    %v298 = vpop.f32.mrb[0].mxu0
    %v299 = vadd.f32 %v246, %v298
    %v300 = vpop.f32.mrb[0].mxu0
    %v301 = vpop.f32.mrb[0].mxu0
    %v302 = vpop.f32.mrb[0].mxu0
    %303 = vdwg.mxu0
    %v304 = vadd.f32 %v235, %v299
    %v305 = vsel %vm260, %v304, 0.0
    %306 = vadd.xlane.f32.xlu0 %v305
    %v307 = vpop.xlane.xlu0 %306
    %v308 = vrcp.pop 32.0
    %v309 = vmul.f32 %v307, %v308
    %v310 = vsub.f32 %v304, %v309
    %v311 = vmul.f32 %v310, %v310
    %v312 = vsel %vm260, %v311, 0.0
    %313 = vadd.xlane.f32.xlu0 %v312
    %v314 = vpop.xlane.xlu0 %313
    %v315 = vmul.f32 %v314, %v308
    %v316 = vadd.f32 %v315, 1e-05
    %v317 = vrsqrt.pop %v316
    %v318 = vmul.f32 %v310, %v317
    %v319 = vld [vmem:[#allocation11] sm:$0x1]
    %v321 = vlaneseq
    %v322 = vshrl.u32 %v321, 7
    %v323 = vsub.s32 0, %v322
    %v324 = vrot.slane %v319, %v323
    %v326 = vmul.f32 %v318, %v324
    %v327 = vld [vmem:[#allocation13] sm:$0x1]
    %v329 = vlaneseq
    %v330 = vshrl.u32 %v329, 7
    %v331 = vsub.s32 0, %v330
    %v332 = vrot.slane %v327, %v331
    %v334 = vadd.f32 %v326, %v332
    %v335 = vpack.c.bf16 %v334, %v334
    %v336 = vld [vmem:[#allocation7] sm:$0xf]
    %v338 = vunpack.c.l.b16 %v336
    %v339 = vpack.c.b16 %v338, %v338
    %340 = vrot.lane.b32.xlu0 %v339, 32
    %v341 = vpop.permute.xlu0 %340
    %v344 = vsel %vm260, %v335, %v341
    %v346 = vld [vmem:[#allocation14] sm:$0xff]
    %v347 = vld [vmem:[#allocation14 + $0x8] sm:$0xff]
    %v348 = vld [vmem:[#allocation14 + $0x10] sm:$0xff]
    %v349 = vld [vmem:[#allocation14 + $0x18] sm:$0xff]
    %v350 = vld [vmem:[#allocation14 + $0x20] sm:$0xff]
    %v351 = vld [vmem:[#allocation14 + $0x28] sm:$0xff]
    %v352 = vld [vmem:[#allocation14 + $0x30] sm:$0xff]
    %v353 = vld [vmem:[#allocation14 + $0x38] sm:$0xff]
    %v354 = vld [vmem:[#allocation14 + $0x40] sm:$0xff]
    %v355 = vld [vmem:[#allocation14 + $0x48] sm:$0xff]
    %v356 = vld [vmem:[#allocation14 + $0x50] sm:$0xff]
    %v357 = vld [vmem:[#allocation14 + $0x58] sm:$0xff]
    %v358 = vld [vmem:[#allocation14 + $0x60] sm:$0xff]
    %v359 = vld [vmem:[#allocation14 + $0x68] sm:$0xff]
    %v360 = vld [vmem:[#allocation14 + $0x70] sm:$0xff]
    %v361 = vld [vmem:[#allocation14 + $0x78] sm:$0xff]
    %v362 = vld [vmem:[#allocation14 + $0x80] sm:$0xff]
    %v363 = vld [vmem:[#allocation14 + $0x88] sm:$0xff]
    %v364 = vld [vmem:[#allocation14 + $0x90] sm:$0xff]
    %v365 = vld [vmem:[#allocation14 + $0x98] sm:$0xff]
    %v366 = vld [vmem:[#allocation14 + $0xa0] sm:$0xff]
    %v367 = vld [vmem:[#allocation14 + $0xa8] sm:$0xff]
    %v368 = vld [vmem:[#allocation14 + $0xb0] sm:$0xff]
    %v369 = vld [vmem:[#allocation14 + $0xb8] sm:$0xff]
    %v370 = vld [vmem:[#allocation14 + $0xc0] sm:$0xff]
    %v371 = vld [vmem:[#allocation14 + $0xc8] sm:$0xff]
    %v372 = vld [vmem:[#allocation14 + $0xd0] sm:$0xff]
    %v373 = vld [vmem:[#allocation14 + $0xd8] sm:$0xff]
    %v374 = vld [vmem:[#allocation14 + $0xe0] sm:$0xff]
    %v375 = vld [vmem:[#allocation14 + $0xe8] sm:$0xff]
    %v376 = vld [vmem:[#allocation14 + $0xf0] sm:$0xff]
    %v377 = vld [vmem:[#allocation14 + $0xf8] sm:$0xff]
    %v378 = vld [vmem:[#allocation14 + $0x100] sm:$0xff]
    %v379 = vld [vmem:[#allocation14 + $0x108] sm:$0xff]
    %v380 = vld [vmem:[#allocation14 + $0x110] sm:$0xff]
    %v381 = vld [vmem:[#allocation14 + $0x118] sm:$0xff]
    %v382 = vld [vmem:[#allocation14 + $0x120] sm:$0xff]
    %v383 = vld [vmem:[#allocation14 + $0x128] sm:$0xff]
    %v384 = vld [vmem:[#allocation14 + $0x130] sm:$0xff]
    %v385 = vld [vmem:[#allocation14 + $0x138] sm:$0xff]
    %v386 = vld [vmem:[#allocation14 + $0x140] sm:$0xff]
    %v387 = vld [vmem:[#allocation14 + $0x148] sm:$0xff]
    %v388 = vld [vmem:[#allocation14 + $0x150] sm:$0xff]
    %v389 = vld [vmem:[#allocation14 + $0x158] sm:$0xff]
    %v390 = vld [vmem:[#allocation14 + $0x160] sm:$0xff]
    %v391 = vld [vmem:[#allocation14 + $0x168] sm:$0xff]
    %v392 = vld [vmem:[#allocation14 + $0x170] sm:$0xff]
    %v393 = vld [vmem:[#allocation14 + $0x178] sm:$0xff]
    %v394 = vld [vmem:[#allocation14 + $0x180] sm:$0xff]
    %v395 = vld [vmem:[#allocation14 + $0x188] sm:$0xff]
    %v396 = vld [vmem:[#allocation14 + $0x190] sm:$0xff]
    %v397 = vld [vmem:[#allocation14 + $0x198] sm:$0xff]
    %v398 = vld [vmem:[#allocation14 + $0x1a0] sm:$0xff]
    %v399 = vld [vmem:[#allocation14 + $0x1a8] sm:$0xff]
    %v400 = vld [vmem:[#allocation14 + $0x1b0] sm:$0xff]
    %v401 = vld [vmem:[#allocation14 + $0x1b8] sm:$0xff]
    %v402 = vld [vmem:[#allocation14 + $0x1c0] sm:$0xff]
    %v403 = vld [vmem:[#allocation14 + $0x1c8] sm:$0xff]
    %v404 = vld [vmem:[#allocation14 + $0x1d0] sm:$0xff]
    %v405 = vld [vmem:[#allocation14 + $0x1d8] sm:$0xff]
    %v406 = vld [vmem:[#allocation14 + $0x1e0] sm:$0xff]
    %v407 = vld [vmem:[#allocation14 + $0x1e8] sm:$0xff]
    %v408 = vld [vmem:[#allocation14 + $0x1f0] sm:$0xff]
    %v409 = vld [vmem:[#allocation14 + $0x1f8] sm:$0xff]
    %v410 = vld [vmem:[#allocation16] sm:$0xff]
    %v412 = vlaneseq
    %v413 = vshrl.u32 %v412, 7
    %v414 = vsub.s32 0, %v413
    %v415 = vrot.slane %v410, %v414
    %v416 = vlaneseq
    %v417 = vshrl.u32 %v416, 7
    %v418 = vsub.s32 1, %v417
    %v419 = vrot.slane %v410, %v418
    %v420 = vlaneseq
    %v421 = vshrl.u32 %v420, 7
    %v422 = vsub.s32 2, %v421
    %v423 = vrot.slane %v410, %v422
    %v424 = vlaneseq
    %v425 = vshrl.u32 %v424, 7
    %v426 = vsub.s32 3, %v425
    %v427 = vrot.slane %v410, %v426
    %v428 = vlaneseq
    %v429 = vshrl.u32 %v428, 7
    %v430 = vsub.s32 4, %v429
    %v431 = vrot.slane %v410, %v430
    %v432 = vlaneseq
    %v433 = vshrl.u32 %v432, 7
    %v434 = vsub.s32 5, %v433
    %v435 = vrot.slane %v410, %v434
    %v436 = vlaneseq
    %v437 = vshrl.u32 %v436, 7
    %v438 = vsub.s32 6, %v437
    %v439 = vrot.slane %v410, %v438
    %v440 = vlaneseq
    %v441 = vshrl.u32 %v440, 7
    %v442 = vsub.s32 7, %v441
    %v443 = vrot.slane %v410, %v442
    %v516 = vunpack.c.l.b16 %v346
    %v517 = vunpack.c.h.b16 %v346
    %v518 = vunpack.c.l.b16 %v347
    %v519 = vunpack.c.h.b16 %v347
    %v520 = vunpack.c.l.b16 %v348
    %v521 = vunpack.c.h.b16 %v348
    %v522 = vunpack.c.l.b16 %v349
    %v523 = vunpack.c.h.b16 %v349
    %v524 = vunpack.c.l.b16 %v350
    %v525 = vunpack.c.h.b16 %v350
    %v526 = vunpack.c.l.b16 %v351
    %v527 = vunpack.c.h.b16 %v351
    %v528 = vunpack.c.l.b16 %v352
    %v529 = vunpack.c.h.b16 %v352
    %v530 = vunpack.c.l.b16 %v353
    %v531 = vunpack.c.h.b16 %v353
    %v532 = vunpack.c.l.b16 %v354
    %v533 = vunpack.c.h.b16 %v354
    %v534 = vunpack.c.l.b16 %v355
    %v535 = vunpack.c.h.b16 %v355
    %v536 = vunpack.c.l.b16 %v356
    %v537 = vunpack.c.h.b16 %v356
    %v538 = vunpack.c.l.b16 %v357
    %v539 = vunpack.c.h.b16 %v357
    %v540 = vunpack.c.l.b16 %v358
    %v541 = vunpack.c.h.b16 %v358
    %v542 = vunpack.c.l.b16 %v359
    %v543 = vunpack.c.h.b16 %v359
    %v544 = vunpack.c.l.b16 %v360
    %v545 = vunpack.c.h.b16 %v360
    %v546 = vunpack.c.l.b16 %v361
    %v547 = vunpack.c.h.b16 %v361
    %v548 = vunpack.c.l.b16 %v362
    %v549 = vunpack.c.h.b16 %v362
    %v550 = vunpack.c.l.b16 %v363
    %v551 = vunpack.c.h.b16 %v363
    %v552 = vunpack.c.l.b16 %v364
    %v553 = vunpack.c.h.b16 %v364
    %v554 = vunpack.c.l.b16 %v365
    %v555 = vunpack.c.h.b16 %v365
    %v556 = vunpack.c.l.b16 %v366
    %v557 = vunpack.c.h.b16 %v366
    %v558 = vunpack.c.l.b16 %v367
    %v559 = vunpack.c.h.b16 %v367
    %v560 = vunpack.c.l.b16 %v368
    %v561 = vunpack.c.h.b16 %v368
    %v562 = vunpack.c.l.b16 %v369
    %v563 = vunpack.c.h.b16 %v369
    %v564 = vunpack.c.l.b16 %v370
    %v565 = vunpack.c.h.b16 %v370
    %v566 = vunpack.c.l.b16 %v371
    %v567 = vunpack.c.h.b16 %v371
    %v568 = vunpack.c.l.b16 %v372
    %v569 = vunpack.c.h.b16 %v372
    %v570 = vunpack.c.l.b16 %v373
    %v571 = vunpack.c.h.b16 %v373
    %v572 = vunpack.c.l.b16 %v374
    %v573 = vunpack.c.h.b16 %v374
    %v574 = vunpack.c.l.b16 %v375
    %v575 = vunpack.c.h.b16 %v375
    %v576 = vunpack.c.l.b16 %v376
    %v577 = vunpack.c.h.b16 %v376
    %v578 = vunpack.c.l.b16 %v377
    %v579 = vunpack.c.h.b16 %v377
    %v580 = vunpack.c.l.b16 %v378
    %v581 = vunpack.c.h.b16 %v378
    %v582 = vunpack.c.l.b16 %v379
    %v583 = vunpack.c.h.b16 %v379
    %v584 = vunpack.c.l.b16 %v380
    %v585 = vunpack.c.h.b16 %v380
    %v586 = vunpack.c.l.b16 %v381
    %v587 = vunpack.c.h.b16 %v381
    %v588 = vunpack.c.l.b16 %v382
    %v589 = vunpack.c.h.b16 %v382
    %v590 = vunpack.c.l.b16 %v383
    %v591 = vunpack.c.h.b16 %v383
    %v592 = vunpack.c.l.b16 %v384
    %v593 = vunpack.c.h.b16 %v384
    %v594 = vunpack.c.l.b16 %v385
    %v595 = vunpack.c.h.b16 %v385
    %v596 = vunpack.c.l.b16 %v386
    %v597 = vunpack.c.h.b16 %v386
    %v598 = vunpack.c.l.b16 %v387
    %v599 = vunpack.c.h.b16 %v387
    %v600 = vunpack.c.l.b16 %v388
    %v601 = vunpack.c.h.b16 %v388
    %v602 = vunpack.c.l.b16 %v389
    %v603 = vunpack.c.h.b16 %v389
    %v604 = vunpack.c.l.b16 %v390
    %v605 = vunpack.c.h.b16 %v390
    %v606 = vunpack.c.l.b16 %v391
    %v607 = vunpack.c.h.b16 %v391
    %v608 = vunpack.c.l.b16 %v392
    %v609 = vunpack.c.h.b16 %v392
    %v610 = vunpack.c.l.b16 %v393
    %v611 = vunpack.c.h.b16 %v393
    %v612 = vunpack.c.l.b16 %v394
    %v613 = vunpack.c.h.b16 %v394
    %v614 = vunpack.c.l.b16 %v395
    %v615 = vunpack.c.h.b16 %v395
    %v616 = vunpack.c.l.b16 %v396
    %v617 = vunpack.c.h.b16 %v396
    %v618 = vunpack.c.l.b16 %v397
    %v619 = vunpack.c.h.b16 %v397
    %v620 = vunpack.c.l.b16 %v398
    %v621 = vunpack.c.h.b16 %v398
    %v622 = vunpack.c.l.b16 %v399
    %v623 = vunpack.c.h.b16 %v399
    %v624 = vunpack.c.l.b16 %v400
    %v625 = vunpack.c.h.b16 %v400
    %v626 = vunpack.c.l.b16 %v401
    %v627 = vunpack.c.h.b16 %v401
    %v628 = vunpack.c.l.b16 %v402
    %v629 = vunpack.c.h.b16 %v402
    %v630 = vunpack.c.l.b16 %v403
    %v631 = vunpack.c.h.b16 %v403
    %v632 = vunpack.c.l.b16 %v404
    %v633 = vunpack.c.h.b16 %v404
    %v634 = vunpack.c.l.b16 %v405
    %v635 = vunpack.c.h.b16 %v405
    %v636 = vunpack.c.l.b16 %v406
    %v637 = vunpack.c.h.b16 %v406
    %v638 = vunpack.c.l.b16 %v407
    %v639 = vunpack.c.h.b16 %v407
    %v640 = vunpack.c.l.b16 %v408
    %v641 = vunpack.c.h.b16 %v408
    %v642 = vunpack.c.l.b16 %v409
    %v643 = vunpack.c.h.b16 %v409
    %v644 = vpack.c.b16 %v524, %v516
    %v645 = vpack.c.b16 %v525, %v517
    %v646 = vpack.c.b16 %v526, %v518
    %v647 = vpack.c.b16 %v527, %v519
    %v648 = vpack.c.b16 %v528, %v520
    %v649 = vpack.c.b16 %v529, %v521
    %v650 = vpack.c.b16 %v530, %v522
    %v651 = vpack.c.b16 %v531, %v523
    %v652 = vpack.c.b16 %v540, %v532
    %v653 = vpack.c.b16 %v541, %v533
    %v654 = vpack.c.b16 %v542, %v534
    %v655 = vpack.c.b16 %v543, %v535
    %v656 = vpack.c.b16 %v544, %v536
    %v657 = vpack.c.b16 %v545, %v537
    %v658 = vpack.c.b16 %v546, %v538
    %v659 = vpack.c.b16 %v547, %v539
    %v660 = vpack.c.b16 %v556, %v548
    %v661 = vpack.c.b16 %v557, %v549
    %v662 = vpack.c.b16 %v558, %v550
    %v663 = vpack.c.b16 %v559, %v551
    %v664 = vpack.c.b16 %v560, %v552
    %v665 = vpack.c.b16 %v561, %v553
    %v666 = vpack.c.b16 %v562, %v554
    %v667 = vpack.c.b16 %v563, %v555
    %v668 = vpack.c.b16 %v572, %v564
    %v669 = vpack.c.b16 %v573, %v565
    %v670 = vpack.c.b16 %v574, %v566
    %v671 = vpack.c.b16 %v575, %v567
    %v672 = vpack.c.b16 %v576, %v568
    %v673 = vpack.c.b16 %v577, %v569
    %v674 = vpack.c.b16 %v578, %v570
    %v675 = vpack.c.b16 %v579, %v571
    %v676 = vpack.c.b16 %v588, %v580
    %v677 = vpack.c.b16 %v589, %v581
    %v678 = vpack.c.b16 %v590, %v582
    %v679 = vpack.c.b16 %v591, %v583
    %v680 = vpack.c.b16 %v592, %v584
    %v681 = vpack.c.b16 %v593, %v585
    %v682 = vpack.c.b16 %v594, %v586
    %v683 = vpack.c.b16 %v595, %v587
    %v684 = vpack.c.b16 %v604, %v596
    %v685 = vpack.c.b16 %v605, %v597
    %v686 = vpack.c.b16 %v606, %v598
    %v687 = vpack.c.b16 %v607, %v599
    %v688 = vpack.c.b16 %v608, %v600
    %v689 = vpack.c.b16 %v609, %v601
    %v690 = vpack.c.b16 %v610, %v602
    %v691 = vpack.c.b16 %v611, %v603
    %v692 = vpack.c.b16 %v620, %v612
    %v693 = vpack.c.b16 %v621, %v613
    %v694 = vpack.c.b16 %v622, %v614
    %v695 = vpack.c.b16 %v623, %v615
    %v696 = vpack.c.b16 %v624, %v616
    %v697 = vpack.c.b16 %v625, %v617
    %v698 = vpack.c.b16 %v626, %v618
    %v699 = vpack.c.b16 %v627, %v619
    %v700 = vpack.c.b16 %v636, %v628
    %v701 = vpack.c.b16 %v637, %v629
    %v702 = vpack.c.b16 %v638, %v630
    %v703 = vpack.c.b16 %v639, %v631
    %v704 = vpack.c.b16 %v640, %v632
    %v705 = vpack.c.b16 %v641, %v633
    %v706 = vpack.c.b16 %v642, %v634
    %v707 = vpack.c.b16 %v643, %v635
    %772 = vmatprep.subr.bf16.mxu0 %v645
    %773 = vmatpush1.bf16.msra.mxu0 %v644
    %774 = vmatprep.subr.bf16.mxu0 %v653
    %775 = vmatpush1.bf16.msra.mxu0 %v652
    %776 = vmatprep.subr.bf16.mxu0 %v661
    %777 = vmatpush1.bf16.msra.mxu0 %v660
    %778 = vmatprep.subr.bf16.mxu0 %v669
    %779 = vmatpush1.bf16.msra.mxu0 %v668
    %780 = vmatprep.subr.bf16.mxu0 %v677
    %781 = vmatpush1.bf16.msra.mxu0 %v676
    %782 = vmatprep.subr.bf16.mxu0 %v685
    %783 = vmatpush1.bf16.msra.mxu0 %v684
    %784 = vmatprep.subr.bf16.mxu0 %v693
    %785 = vmatpush1.bf16.msra.mxu0 %v692
    %786 = vmatprep.subr.bf16.mxu0 %v701
    %787 = vmatpush1.bf16.msra.mxu0 %v700
    %788 = vmatprep.subr.bf16.mxu0 0
    %789 = vmatpush1.bf16.msra.mxu0 0
    %790 = vmatprep.subr.bf16.mxu0 0
    %791 = vmatpush1.bf16.msra.mxu0 0
    %792 = vmatprep.subr.bf16.mxu0 0
    %793 = vmatpush1.bf16.msra.mxu0 0
    %794 = vmatprep.subr.bf16.mxu0 0
    %795 = vmatpush1.bf16.msra.mxu0 0
    %796 = vmatprep.subr.bf16.mxu0 0
    %797 = vmatpush1.bf16.msra.mxu0 0
    %798 = vmatprep.subr.bf16.mxu0 0
    %799 = vmatpush1.bf16.msra.mxu0 0
    %800 = vmatprep.subr.bf16.mxu0 0
    %801 = vmatpush1.bf16.msra.mxu0 0
    %802 = vmatprep.subr.bf16.mxu0 0
    %803 = vmatpush1.bf16.msra.mxu0 0
    %804 = vmatprep.mubr.bf16.mxu0 0
    %805 = vmatmul.mubr.bf16.gmra.mrb[0].mxu0 %v344
    %v806 = vpop.f32.mrb[0].mxu0
    %v807 = vadd.f32 %v415, %v806
    %v808 = vpop.f32.mrb[0].mxu0
    %v809 = vadd.f32 %v419, %v808
    %v810 = vpop.f32.mrb[0].mxu0
    %v811 = vpop.f32.mrb[0].mxu0
    %812 = vdwg.mxu0
    %813 = vmatprep.subr.bf16.mxu0 %v647
    %814 = vmatpush1.bf16.msra.mxu0 %v646
    %815 = vmatprep.subr.bf16.mxu0 %v655
    %816 = vmatpush1.bf16.msra.mxu0 %v654
    %817 = vmatprep.subr.bf16.mxu0 %v663
    %818 = vmatpush1.bf16.msra.mxu0 %v662
    %819 = vmatprep.subr.bf16.mxu0 %v671
    %820 = vmatpush1.bf16.msra.mxu0 %v670
    %821 = vmatprep.subr.bf16.mxu0 %v679
    %822 = vmatpush1.bf16.msra.mxu0 %v678
    %823 = vmatprep.subr.bf16.mxu0 %v687
    %824 = vmatpush1.bf16.msra.mxu0 %v686
    %825 = vmatprep.subr.bf16.mxu0 %v695
    %826 = vmatpush1.bf16.msra.mxu0 %v694
    %827 = vmatprep.subr.bf16.mxu0 %v703
    %828 = vmatpush1.bf16.msra.mxu0 %v702
    %829 = vmatprep.subr.bf16.mxu0 0
    %830 = vmatpush1.bf16.msra.mxu0 0
    %831 = vmatprep.subr.bf16.mxu0 0
    %832 = vmatpush1.bf16.msra.mxu0 0
    %833 = vmatprep.subr.bf16.mxu0 0
    %834 = vmatpush1.bf16.msra.mxu0 0
    %835 = vmatprep.subr.bf16.mxu0 0
    %836 = vmatpush1.bf16.msra.mxu0 0
    %837 = vmatprep.subr.bf16.mxu0 0
    %838 = vmatpush1.bf16.msra.mxu0 0
    %839 = vmatprep.subr.bf16.mxu0 0
    %840 = vmatpush1.bf16.msra.mxu0 0
    %841 = vmatprep.subr.bf16.mxu0 0
    %842 = vmatpush1.bf16.msra.mxu0 0
    %843 = vmatprep.subr.bf16.mxu0 0
    %844 = vmatpush1.bf16.msra.mxu0 0
    %845 = vmatprep.mubr.bf16.mxu0 0
    %846 = vmatmul.mubr.bf16.gmra.mrb[0].mxu0 %v344
    %v847 = vpop.f32.mrb[0].mxu0
    %v848 = vadd.f32 %v423, %v847
    %v849 = vpop.f32.mrb[0].mxu0
    %v850 = vadd.f32 %v427, %v849
    %v851 = vpop.f32.mrb[0].mxu0
    %v852 = vpop.f32.mrb[0].mxu0
    %853 = vdwg.mxu0
    %854 = vmatprep.subr.bf16.mxu0 %v649
    %855 = vmatpush1.bf16.msra.mxu0 %v648
    %856 = vmatprep.subr.bf16.mxu0 %v657
    %857 = vmatpush1.bf16.msra.mxu0 %v656
    %858 = vmatprep.subr.bf16.mxu0 %v665
    %859 = vmatpush1.bf16.msra.mxu0 %v664
    %860 = vmatprep.subr.bf16.mxu0 %v673
    %861 = vmatpush1.bf16.msra.mxu0 %v672
    %862 = vmatprep.subr.bf16.mxu0 %v681
    %863 = vmatpush1.bf16.msra.mxu0 %v680
    %864 = vmatprep.subr.bf16.mxu0 %v689
    %865 = vmatpush1.bf16.msra.mxu0 %v688
    %866 = vmatprep.subr.bf16.mxu0 %v697
    %867 = vmatpush1.bf16.msra.mxu0 %v696
    %868 = vmatprep.subr.bf16.mxu0 %v705
    %869 = vmatpush1.bf16.msra.mxu0 %v704
    %870 = vmatprep.subr.bf16.mxu0 0
    %871 = vmatpush1.bf16.msra.mxu0 0
    %872 = vmatprep.subr.bf16.mxu0 0
    %873 = vmatpush1.bf16.msra.mxu0 0
    %874 = vmatprep.subr.bf16.mxu0 0
    %875 = vmatpush1.bf16.msra.mxu0 0
    %876 = vmatprep.subr.bf16.mxu0 0
    %877 = vmatpush1.bf16.msra.mxu0 0
    %878 = vmatprep.subr.bf16.mxu0 0
    %879 = vmatpush1.bf16.msra.mxu0 0
    %880 = vmatprep.subr.bf16.mxu0 0
    %881 = vmatpush1.bf16.msra.mxu0 0
    %882 = vmatprep.subr.bf16.mxu0 0
    %883 = vmatpush1.bf16.msra.mxu0 0
    %884 = vmatprep.subr.bf16.mxu0 0
    %885 = vmatpush1.bf16.msra.mxu0 0
    %886 = vmatprep.mubr.bf16.mxu0 0
    %887 = vmatmul.mubr.bf16.gmra.mrb[0].mxu0 %v344
    %v888 = vpop.f32.mrb[0].mxu0
    %v889 = vadd.f32 %v431, %v888
    %v890 = vpop.f32.mrb[0].mxu0
    %v891 = vadd.f32 %v435, %v890
    %v892 = vpop.f32.mrb[0].mxu0
    %v893 = vpop.f32.mrb[0].mxu0
    %894 = vdwg.mxu0
    %895 = vmatprep.subr.bf16.mxu0 %v651
    %896 = vmatpush1.bf16.msra.mxu0 %v650
    %897 = vmatprep.subr.bf16.mxu0 %v659
    %898 = vmatpush1.bf16.msra.mxu0 %v658
    %899 = vmatprep.subr.bf16.mxu0 %v667
    %900 = vmatpush1.bf16.msra.mxu0 %v666
    %901 = vmatprep.subr.bf16.mxu0 %v675
    %902 = vmatpush1.bf16.msra.mxu0 %v674
    %903 = vmatprep.subr.bf16.mxu0 %v683
    %904 = vmatpush1.bf16.msra.mxu0 %v682
    %905 = vmatprep.subr.bf16.mxu0 %v691
    %906 = vmatpush1.bf16.msra.mxu0 %v690
    %907 = vmatprep.subr.bf16.mxu0 %v699
    %908 = vmatpush1.bf16.msra.mxu0 %v698
    %909 = vmatprep.subr.bf16.mxu0 %v707
    %910 = vmatpush1.bf16.msra.mxu0 %v706
    %911 = vmatprep.subr.bf16.mxu0 0
    %912 = vmatpush1.bf16.msra.mxu0 0
    %913 = vmatprep.subr.bf16.mxu0 0
    %914 = vmatpush1.bf16.msra.mxu0 0
    %915 = vmatprep.subr.bf16.mxu0 0
    %916 = vmatpush1.bf16.msra.mxu0 0
    %917 = vmatprep.subr.bf16.mxu0 0
    %918 = vmatpush1.bf16.msra.mxu0 0
    %919 = vmatprep.subr.bf16.mxu0 0
    %920 = vmatpush1.bf16.msra.mxu0 0
    %921 = vmatprep.subr.bf16.mxu0 0
    %922 = vmatpush1.bf16.msra.mxu0 0
    %923 = vmatprep.subr.bf16.mxu0 0
    %924 = vmatpush1.bf16.msra.mxu0 0
    %925 = vmatprep.subr.bf16.mxu0 0
    %926 = vmatpush1.bf16.msra.mxu0 0
    %927 = vmatprep.mubr.bf16.mxu0 0
    %928 = vmatmul.mubr.bf16.gmra.mrb[0].mxu0 %v344
    %v929 = vpop.f32.mrb[0].mxu0
    %v930 = vadd.f32 %v439, %v929
    %v931 = vpop.f32.mrb[0].mxu0
    %v932 = vadd.f32 %v443, %v931
    %v933 = vpop.f32.mrb[0].mxu0
    %v934 = vpop.f32.mrb[0].mxu0
    %935 = vdwg.mxu0
    %v936 = vmax.f32 %v807, 0.0
    %v937 = vmax.f32 %v809, 0.0
    %v938 = vmax.f32 %v848, 0.0
    %v939 = vmax.f32 %v850, 0.0
    %v940 = vmax.f32 %v889, 0.0
    %v941 = vmax.f32 %v891, 0.0
    %v942 = vmax.f32 %v930, 0.0
    %v943 = vmax.f32 %v932, 0.0
    %v944 = vpack.c.bf16 %v936, %v936
    %v945 = vpack.c.bf16 %v937, %v937
    %v946 = vpack.c.bf16 %v938, %v938
    %v947 = vpack.c.bf16 %v939, %v939
    %v948 = vpack.c.bf16 %v940, %v940
    %v949 = vpack.c.bf16 %v941, %v941
    %v950 = vpack.c.bf16 %v942, %v942
    %v951 = vpack.c.bf16 %v943, %v943
    %v952 = vld [vmem:[#allocation17] sm:$0xff]
    %v953 = vld [vmem:[#allocation17 + $0x8] sm:$0xff]
    %v954 = vld [vmem:[#allocation17 + $0x10] sm:$0xff]
    %v955 = vld [vmem:[#allocation17 + $0x18] sm:$0xff]
    %v956 = vld [vmem:[#allocation17 + $0x20] sm:$0xff]
    %v957 = vld [vmem:[#allocation17 + $0x28] sm:$0xff]
    %v958 = vld [vmem:[#allocation17 + $0x30] sm:$0xff]
    %v959 = vld [vmem:[#allocation17 + $0x38] sm:$0xff]
    %v960 = vld [vmem:[#allocation17 + $0x40] sm:$0xff]
    %v961 = vld [vmem:[#allocation17 + $0x48] sm:$0xff]
    %v962 = vld [vmem:[#allocation17 + $0x50] sm:$0xff]
    %v963 = vld [vmem:[#allocation17 + $0x58] sm:$0xff]
    %v964 = vld [vmem:[#allocation17 + $0x60] sm:$0xff]
    %v965 = vld [vmem:[#allocation17 + $0x68] sm:$0xff]
    %v966 = vld [vmem:[#allocation17 + $0x70] sm:$0xff]
    %v967 = vld [vmem:[#allocation17 + $0x78] sm:$0xff]
    %v968 = vld [vmem:[#allocation17 + $0x80] sm:$0xff]
    %v969 = vld [vmem:[#allocation17 + $0x88] sm:$0xff]
    %v970 = vld [vmem:[#allocation17 + $0x90] sm:$0xff]
    %v971 = vld [vmem:[#allocation17 + $0x98] sm:$0xff]
    %v972 = vld [vmem:[#allocation17 + $0xa0] sm:$0xff]
    %v973 = vld [vmem:[#allocation17 + $0xa8] sm:$0xff]
    %v974 = vld [vmem:[#allocation17 + $0xb0] sm:$0xff]
    %v975 = vld [vmem:[#allocation17 + $0xb8] sm:$0xff]
    %v976 = vld [vmem:[#allocation17 + $0xc0] sm:$0xff]
    %v977 = vld [vmem:[#allocation17 + $0xc8] sm:$0xff]
    %v978 = vld [vmem:[#allocation17 + $0xd0] sm:$0xff]
    %v979 = vld [vmem:[#allocation17 + $0xd8] sm:$0xff]
    %v980 = vld [vmem:[#allocation17 + $0xe0] sm:$0xff]
    %v981 = vld [vmem:[#allocation17 + $0xe8] sm:$0xff]
    %v982 = vld [vmem:[#allocation17 + $0xf0] sm:$0xff]
    %v983 = vld [vmem:[#allocation17 + $0xf8] sm:$0xff]
    %v984 = vld [vmem:[#allocation17 + $0x100] sm:$0xff]
    %v985 = vld [vmem:[#allocation17 + $0x108] sm:$0xff]
    %v986 = vld [vmem:[#allocation17 + $0x110] sm:$0xff]
    %v987 = vld [vmem:[#allocation17 + $0x118] sm:$0xff]
    %v988 = vld [vmem:[#allocation17 + $0x120] sm:$0xff]
    %v989 = vld [vmem:[#allocation17 + $0x128] sm:$0xff]
    %v990 = vld [vmem:[#allocation17 + $0x130] sm:$0xff]
    %v991 = vld [vmem:[#allocation17 + $0x138] sm:$0xff]
    %v992 = vld [vmem:[#allocation17 + $0x140] sm:$0xff]
    %v993 = vld [vmem:[#allocation17 + $0x148] sm:$0xff]
    %v994 = vld [vmem:[#allocation17 + $0x150] sm:$0xff]
    %v995 = vld [vmem:[#allocation17 + $0x158] sm:$0xff]
    %v996 = vld [vmem:[#allocation17 + $0x160] sm:$0xff]
    %v997 = vld [vmem:[#allocation17 + $0x168] sm:$0xff]
    %v998 = vld [vmem:[#allocation17 + $0x170] sm:$0xff]
    %v999 = vld [vmem:[#allocation17 + $0x178] sm:$0xff]
    %v1000 = vld [vmem:[#allocation17 + $0x180] sm:$0xff]
    %v1001 = vld [vmem:[#allocation17 + $0x188] sm:$0xff]
    %v1002 = vld [vmem:[#allocation17 + $0x190] sm:$0xff]
    %v1003 = vld [vmem:[#allocation17 + $0x198] sm:$0xff]
    %v1004 = vld [vmem:[#allocation17 + $0x1a0] sm:$0xff]
    %v1005 = vld [vmem:[#allocation17 + $0x1a8] sm:$0xff]
    %v1006 = vld [vmem:[#allocation17 + $0x1b0] sm:$0xff]
    %v1007 = vld [vmem:[#allocation17 + $0x1b8] sm:$0xff]
    %v1008 = vld [vmem:[#allocation17 + $0x1c0] sm:$0xff]
    %v1009 = vld [vmem:[#allocation17 + $0x1c8] sm:$0xff]
    %v1010 = vld [vmem:[#allocation17 + $0x1d0] sm:$0xff]
    %v1011 = vld [vmem:[#allocation17 + $0x1d8] sm:$0xff]
    %v1012 = vld [vmem:[#allocation17 + $0x1e0] sm:$0xff]
    %v1013 = vld [vmem:[#allocation17 + $0x1e8] sm:$0xff]
    %v1014 = vld [vmem:[#allocation17 + $0x1f0] sm:$0xff]
    %v1015 = vld [vmem:[#allocation17 + $0x1f8] sm:$0xff]
    %v1016 = vld [vmem:[#allocation17 + $0x200] sm:$0xff]
    %v1017 = vld [vmem:[#allocation17 + $0x208] sm:$0xff]
    %v1018 = vld [vmem:[#allocation17 + $0x210] sm:$0xff]
    %v1019 = vld [vmem:[#allocation17 + $0x218] sm:$0xff]
    %v1020 = vld [vmem:[#allocation17 + $0x220] sm:$0xff]
    %v1021 = vld [vmem:[#allocation17 + $0x228] sm:$0xff]
    %v1022 = vld [vmem:[#allocation17 + $0x230] sm:$0xff]
    %v1023 = vld [vmem:[#allocation17 + $0x238] sm:$0xff]
    %v1024 = vld [vmem:[#allocation17 + $0x240] sm:$0xff]
    %v1025 = vld [vmem:[#allocation17 + $0x248] sm:$0xff]
    %v1026 = vld [vmem:[#allocation17 + $0x250] sm:$0xff]
    %v1027 = vld [vmem:[#allocation17 + $0x258] sm:$0xff]
    %v1028 = vld [vmem:[#allocation17 + $0x260] sm:$0xff]
    %v1029 = vld [vmem:[#allocation17 + $0x268] sm:$0xff]
    %v1030 = vld [vmem:[#allocation17 + $0x270] sm:$0xff]
    %v1031 = vld [vmem:[#allocation17 + $0x278] sm:$0xff]
    %v1032 = vld [vmem:[#allocation17 + $0x280] sm:$0xff]
    %v1033 = vld [vmem:[#allocation17 + $0x288] sm:$0xff]
    %v1034 = vld [vmem:[#allocation17 + $0x290] sm:$0xff]
    %v1035 = vld [vmem:[#allocation17 + $0x298] sm:$0xff]
    %v1036 = vld [vmem:[#allocation17 + $0x2a0] sm:$0xff]
    %v1037 = vld [vmem:[#allocation17 + $0x2a8] sm:$0xff]
    %v1038 = vld [vmem:[#allocation17 + $0x2b0] sm:$0xff]
    %v1039 = vld [vmem:[#allocation17 + $0x2b8] sm:$0xff]
    %v1040 = vld [vmem:[#allocation17 + $0x2c0] sm:$0xff]
    %v1041 = vld [vmem:[#allocation17 + $0x2c8] sm:$0xff]
    %v1042 = vld [vmem:[#allocation17 + $0x2d0] sm:$0xff]
    %v1043 = vld [vmem:[#allocation17 + $0x2d8] sm:$0xff]
    %v1044 = vld [vmem:[#allocation17 + $0x2e0] sm:$0xff]
    %v1045 = vld [vmem:[#allocation17 + $0x2e8] sm:$0xff]
    %v1046 = vld [vmem:[#allocation17 + $0x2f0] sm:$0xff]
    %v1047 = vld [vmem:[#allocation17 + $0x2f8] sm:$0xff]
    %v1048 = vld [vmem:[#allocation17 + $0x300] sm:$0xff]
    %v1049 = vld [vmem:[#allocation17 + $0x308] sm:$0xff]
    %v1050 = vld [vmem:[#allocation17 + $0x310] sm:$0xff]
    %v1051 = vld [vmem:[#allocation17 + $0x318] sm:$0xff]
    %v1052 = vld [vmem:[#allocation17 + $0x320] sm:$0xff]
    %v1053 = vld [vmem:[#allocation17 + $0x328] sm:$0xff]
    %v1054 = vld [vmem:[#allocation17 + $0x330] sm:$0xff]
    %v1055 = vld [vmem:[#allocation17 + $0x338] sm:$0xff]
    %v1056 = vld [vmem:[#allocation17 + $0x340] sm:$0xff]
    %v1057 = vld [vmem:[#allocation17 + $0x348] sm:$0xff]
    %v1058 = vld [vmem:[#allocation17 + $0x350] sm:$0xff]
    %v1059 = vld [vmem:[#allocation17 + $0x358] sm:$0xff]
    %v1060 = vld [vmem:[#allocation17 + $0x360] sm:$0xff]
    %v1061 = vld [vmem:[#allocation17 + $0x368] sm:$0xff]
    %v1062 = vld [vmem:[#allocation17 + $0x370] sm:$0xff]
    %v1063 = vld [vmem:[#allocation17 + $0x378] sm:$0xff]
    %v1064 = vld [vmem:[#allocation17 + $0x380] sm:$0xff]
    %v1065 = vld [vmem:[#allocation17 + $0x388] sm:$0xff]
    %v1066 = vld [vmem:[#allocation17 + $0x390] sm:$0xff]
    %v1067 = vld [vmem:[#allocation17 + $0x398] sm:$0xff]
    %v1068 = vld [vmem:[#allocation17 + $0x3a0] sm:$0xff]
    %v1069 = vld [vmem:[#allocation17 + $0x3a8] sm:$0xff]
    %v1070 = vld [vmem:[#allocation17 + $0x3b0] sm:$0xff]
    %v1071 = vld [vmem:[#allocation17 + $0x3b8] sm:$0xff]
    %v1072 = vld [vmem:[#allocation17 + $0x3c0] sm:$0xff]
    %v1073 = vld [vmem:[#allocation17 + $0x3c8] sm:$0xff]
    %v1074 = vld [vmem:[#allocation17 + $0x3d0] sm:$0xff]
    %v1075 = vld [vmem:[#allocation17 + $0x3d8] sm:$0xff]
    %v1076 = vld [vmem:[#allocation17 + $0x3e0] sm:$0xff]
    %v1077 = vld [vmem:[#allocation17 + $0x3e8] sm:$0xff]
    %v1078 = vld [vmem:[#allocation17 + $0x3f0] sm:$0xff]
    %v1079 = vld [vmem:[#allocation17 + $0x3f8] sm:$0xff]
    %v1080 = vld [vmem:[#allocation17 + $0x400] sm:$0xff]
    %v1081 = vld [vmem:[#allocation17 + $0x408] sm:$0xff]
    %v1082 = vld [vmem:[#allocation17 + $0x410] sm:$0xff]
    %v1083 = vld [vmem:[#allocation17 + $0x418] sm:$0xff]
    %v1084 = vld [vmem:[#allocation17 + $0x420] sm:$0xff]
    %v1085 = vld [vmem:[#allocation17 + $0x428] sm:$0xff]
    %v1086 = vld [vmem:[#allocation17 + $0x430] sm:$0xff]
    %v1087 = vld [vmem:[#allocation17 + $0x438] sm:$0xff]
    %v1088 = vld [vmem:[#allocation17 + $0x440] sm:$0xff]
    %v1089 = vld [vmem:[#allocation17 + $0x448] sm:$0xff]
    %v1090 = vld [vmem:[#allocation17 + $0x450] sm:$0xff]
    %v1091 = vld [vmem:[#allocation17 + $0x458] sm:$0xff]
    %v1092 = vld [vmem:[#allocation17 + $0x460] sm:$0xff]
    %v1093 = vld [vmem:[#allocation17 + $0x468] sm:$0xff]
    %v1094 = vld [vmem:[#allocation17 + $0x470] sm:$0xff]
    %v1095 = vld [vmem:[#allocation17 + $0x478] sm:$0xff]
    %v1096 = vld [vmem:[#allocation17 + $0x480] sm:$0xff]
    %v1097 = vld [vmem:[#allocation17 + $0x488] sm:$0xff]
    %v1098 = vld [vmem:[#allocation17 + $0x490] sm:$0xff]
    %v1099 = vld [vmem:[#allocation17 + $0x498] sm:$0xff]
    %v1100 = vld [vmem:[#allocation17 + $0x4a0] sm:$0xff]
    %v1101 = vld [vmem:[#allocation17 + $0x4a8] sm:$0xff]
    %v1102 = vld [vmem:[#allocation17 + $0x4b0] sm:$0xff]
    %v1103 = vld [vmem:[#allocation17 + $0x4b8] sm:$0xff]
    %v1104 = vld [vmem:[#allocation17 + $0x4c0] sm:$0xff]
    %v1105 = vld [vmem:[#allocation17 + $0x4c8] sm:$0xff]
    %v1106 = vld [vmem:[#allocation17 + $0x4d0] sm:$0xff]
    %v1107 = vld [vmem:[#allocation17 + $0x4d8] sm:$0xff]
    %v1108 = vld [vmem:[#allocation17 + $0x4e0] sm:$0xff]
    %v1109 = vld [vmem:[#allocation17 + $0x4e8] sm:$0xff]
    %v1110 = vld [vmem:[#allocation17 + $0x4f0] sm:$0xff]
    %v1111 = vld [vmem:[#allocation17 + $0x4f8] sm:$0xff]
    %v1112 = vld [vmem:[#allocation17 + $0x500] sm:$0xff]
    %v1113 = vld [vmem:[#allocation17 + $0x508] sm:$0xff]
    %v1114 = vld [vmem:[#allocation17 + $0x510] sm:$0xff]
    %v1115 = vld [vmem:[#allocation17 + $0x518] sm:$0xff]
    %v1116 = vld [vmem:[#allocation17 + $0x520] sm:$0xff]
    %v1117 = vld [vmem:[#allocation17 + $0x528] sm:$0xff]
    %v1118 = vld [vmem:[#allocation17 + $0x530] sm:$0xff]
    %v1119 = vld [vmem:[#allocation17 + $0x538] sm:$0xff]
    %v1120 = vld [vmem:[#allocation17 + $0x540] sm:$0xff]
    %v1121 = vld [vmem:[#allocation17 + $0x548] sm:$0xff]
    %v1122 = vld [vmem:[#allocation17 + $0x550] sm:$0xff]
    %v1123 = vld [vmem:[#allocation17 + $0x558] sm:$0xff]
    %v1124 = vld [vmem:[#allocation17 + $0x560] sm:$0xff]
    %v1125 = vld [vmem:[#allocation17 + $0x568] sm:$0xff]
    %v1126 = vld [vmem:[#allocation17 + $0x570] sm:$0xff]
    %v1127 = vld [vmem:[#allocation17 + $0x578] sm:$0xff]
    %v1128 = vld [vmem:[#allocation17 + $0x580] sm:$0xff]
    %v1129 = vld [vmem:[#allocation17 + $0x588] sm:$0xff]
    %v1130 = vld [vmem:[#allocation17 + $0x590] sm:$0xff]
    %v1131 = vld [vmem:[#allocation17 + $0x598] sm:$0xff]
    %v1132 = vld [vmem:[#allocation17 + $0x5a0] sm:$0xff]
    %v1133 = vld [vmem:[#allocation17 + $0x5a8] sm:$0xff]
    %v1134 = vld [vmem:[#allocation17 + $0x5b0] sm:$0xff]
    %v1135 = vld [vmem:[#allocation17 + $0x5b8] sm:$0xff]
    %v1136 = vld [vmem:[#allocation17 + $0x5c0] sm:$0xff]
    %v1137 = vld [vmem:[#allocation17 + $0x5c8] sm:$0xff]
    %v1138 = vld [vmem:[#allocation17 + $0x5d0] sm:$0xff]
    %v1139 = vld [vmem:[#allocation17 + $0x5d8] sm:$0xff]
    %v1140 = vld [vmem:[#allocation17 + $0x5e0] sm:$0xff]
    %v1141 = vld [vmem:[#allocation17 + $0x5e8] sm:$0xff]
    %v1142 = vld [vmem:[#allocation17 + $0x5f0] sm:$0xff]
    %v1143 = vld [vmem:[#allocation17 + $0x5f8] sm:$0xff]
    %v1144 = vld [vmem:[#allocation17 + $0x600] sm:$0xff]
    %v1145 = vld [vmem:[#allocation17 + $0x608] sm:$0xff]
    %v1146 = vld [vmem:[#allocation17 + $0x610] sm:$0xff]
    %v1147 = vld [vmem:[#allocation17 + $0x618] sm:$0xff]
    %v1148 = vld [vmem:[#allocation17 + $0x620] sm:$0xff]
    %v1149 = vld [vmem:[#allocation17 + $0x628] sm:$0xff]
    %v1150 = vld [vmem:[#allocation17 + $0x630] sm:$0xff]
    %v1151 = vld [vmem:[#allocation17 + $0x638] sm:$0xff]
    %v1152 = vld [vmem:[#allocation17 + $0x640] sm:$0xff]
    %v1153 = vld [vmem:[#allocation17 + $0x648] sm:$0xff]
    %v1154 = vld [vmem:[#allocation17 + $0x650] sm:$0xff]
    %v1155 = vld [vmem:[#allocation17 + $0x658] sm:$0xff]
    %v1156 = vld [vmem:[#allocation17 + $0x660] sm:$0xff]
    %v1157 = vld [vmem:[#allocation17 + $0x668] sm:$0xff]
    %v1158 = vld [vmem:[#allocation17 + $0x670] sm:$0xff]
    %v1159 = vld [vmem:[#allocation17 + $0x678] sm:$0xff]
    %v1160 = vld [vmem:[#allocation17 + $0x680] sm:$0xff]
    %v1161 = vld [vmem:[#allocation17 + $0x688] sm:$0xff]
    %v1162 = vld [vmem:[#allocation17 + $0x690] sm:$0xff]
    %v1163 = vld [vmem:[#allocation17 + $0x698] sm:$0xff]
    %v1164 = vld [vmem:[#allocation17 + $0x6a0] sm:$0xff]
    %v1165 = vld [vmem:[#allocation17 + $0x6a8] sm:$0xff]
    %v1166 = vld [vmem:[#allocation17 + $0x6b0] sm:$0xff]
    %v1167 = vld [vmem:[#allocation17 + $0x6b8] sm:$0xff]
    %v1168 = vld [vmem:[#allocation17 + $0x6c0] sm:$0xff]
    %v1169 = vld [vmem:[#allocation17 + $0x6c8] sm:$0xff]
    %v1170 = vld [vmem:[#allocation17 + $0x6d0] sm:$0xff]
    %v1171 = vld [vmem:[#allocation17 + $0x6d8] sm:$0xff]
    %v1172 = vld [vmem:[#allocation17 + $0x6e0] sm:$0xff]
    %v1173 = vld [vmem:[#allocation17 + $0x6e8] sm:$0xff]
    %v1174 = vld [vmem:[#allocation17 + $0x6f0] sm:$0xff]
    %v1175 = vld [vmem:[#allocation17 + $0x6f8] sm:$0xff]
    %v1176 = vld [vmem:[#allocation17 + $0x700] sm:$0xff]
    %v1177 = vld [vmem:[#allocation17 + $0x708] sm:$0xff]
    %v1178 = vld [vmem:[#allocation17 + $0x710] sm:$0xff]
    %v1179 = vld [vmem:[#allocation17 + $0x718] sm:$0xff]
    %v1180 = vld [vmem:[#allocation17 + $0x720] sm:$0xff]
    %v1181 = vld [vmem:[#allocation17 + $0x728] sm:$0xff]
    %v1182 = vld [vmem:[#allocation17 + $0x730] sm:$0xff]
    %v1183 = vld [vmem:[#allocation17 + $0x738] sm:$0xff]
    %v1184 = vld [vmem:[#allocation17 + $0x740] sm:$0xff]
    %v1185 = vld [vmem:[#allocation17 + $0x748] sm:$0xff]
    %v1186 = vld [vmem:[#allocation17 + $0x750] sm:$0xff]
    %v1187 = vld [vmem:[#allocation17 + $0x758] sm:$0xff]
    %v1188 = vld [vmem:[#allocation17 + $0x760] sm:$0xff]
    %v1189 = vld [vmem:[#allocation17 + $0x768] sm:$0xff]
    %v1190 = vld [vmem:[#allocation17 + $0x770] sm:$0xff]
    %v1191 = vld [vmem:[#allocation17 + $0x778] sm:$0xff]
    %v1192 = vld [vmem:[#allocation17 + $0x780] sm:$0xff]
    %v1193 = vld [vmem:[#allocation17 + $0x788] sm:$0xff]
    %v1194 = vld [vmem:[#allocation17 + $0x790] sm:$0xff]
    %v1195 = vld [vmem:[#allocation17 + $0x798] sm:$0xff]
    %v1196 = vld [vmem:[#allocation17 + $0x7a0] sm:$0xff]
    %v1197 = vld [vmem:[#allocation17 + $0x7a8] sm:$0xff]
    %v1198 = vld [vmem:[#allocation17 + $0x7b0] sm:$0xff]
    %v1199 = vld [vmem:[#allocation17 + $0x7b8] sm:$0xff]
    %v1200 = vld [vmem:[#allocation17 + $0x7c0] sm:$0xff]
    %v1201 = vld [vmem:[#allocation17 + $0x7c8] sm:$0xff]
    %v1202 = vld [vmem:[#allocation17 + $0x7d0] sm:$0xff]
    %v1203 = vld [vmem:[#allocation17 + $0x7d8] sm:$0xff]
    %v1204 = vld [vmem:[#allocation17 + $0x7e0] sm:$0xff]
    %v1205 = vld [vmem:[#allocation17 + $0x7e8] sm:$0xff]
    %v1206 = vld [vmem:[#allocation17 + $0x7f0] sm:$0xff]
    %v1207 = vld [vmem:[#allocation17 + $0x7f8] sm:$0xff]
    %v1208 = vld [vmem:[#allocation17 + $0x800] sm:$0xff]
    %v1209 = vld [vmem:[#allocation17 + $0x808] sm:$0xff]
    %v1210 = vld [vmem:[#allocation17 + $0x810] sm:$0xff]
    %v1211 = vld [vmem:[#allocation17 + $0x818] sm:$0xff]
    %v1212 = vld [vmem:[#allocation17 + $0x820] sm:$0xff]
    %v1213 = vld [vmem:[#allocation17 + $0x828] sm:$0xff]
    %v1214 = vld [vmem:[#allocation17 + $0x830] sm:$0xff]
    %v1215 = vld [vmem:[#allocation17 + $0x838] sm:$0xff]
    %v1216 = vld [vmem:[#allocation17 + $0x840] sm:$0xff]
    %v1217 = vld [vmem:[#allocation17 + $0x848] sm:$0xff]
    %v1218 = vld [vmem:[#allocation17 + $0x850] sm:$0xff]
    %v1219 = vld [vmem:[#allocation17 + $0x858] sm:$0xff]
    %v1220 = vld [vmem:[#allocation17 + $0x860] sm:$0xff]
    %v1221 = vld [vmem:[#allocation17 + $0x868] sm:$0xff]
    %v1222 = vld [vmem:[#allocation17 + $0x870] sm:$0xff]
    %v1223 = vld [vmem:[#allocation17 + $0x878] sm:$0xff]
    %v1224 = vld [vmem:[#allocation17 + $0x880] sm:$0xff]
    %v1225 = vld [vmem:[#allocation17 + $0x888] sm:$0xff]
    %v1226 = vld [vmem:[#allocation17 + $0x890] sm:$0xff]
    %v1227 = vld [vmem:[#allocation17 + $0x898] sm:$0xff]
    %v1228 = vld [vmem:[#allocation17 + $0x8a0] sm:$0xff]
    %v1229 = vld [vmem:[#allocation17 + $0x8a8] sm:$0xff]
    %v1230 = vld [vmem:[#allocation17 + $0x8b0] sm:$0xff]
    %v1231 = vld [vmem:[#allocation17 + $0x8b8] sm:$0xff]
    %v1232 = vld [vmem:[#allocation17 + $0x8c0] sm:$0xff]
    %v1233 = vld [vmem:[#allocation17 + $0x8c8] sm:$0xff]
    %v1234 = vld [vmem:[#allocation17 + $0x8d0] sm:$0xff]
    %v1235 = vld [vmem:[#allocation17 + $0x8d8] sm:$0xff]
    %v1236 = vld [vmem:[#allocation17 + $0x8e0] sm:$0xff]
    %v1237 = vld [vmem:[#allocation17 + $0x8e8] sm:$0xff]
    %v1238 = vld [vmem:[#allocation17 + $0x8f0] sm:$0xff]
    %v1239 = vld [vmem:[#allocation17 + $0x8f8] sm:$0xff]
    %v1240 = vld [vmem:[#allocation17 + $0x900] sm:$0xff]
    %v1241 = vld [vmem:[#allocation17 + $0x908] sm:$0xff]
    %v1242 = vld [vmem:[#allocation17 + $0x910] sm:$0xff]
    %v1243 = vld [vmem:[#allocation17 + $0x918] sm:$0xff]
    %v1244 = vld [vmem:[#allocation17 + $0x920] sm:$0xff]
    %v1245 = vld [vmem:[#allocation17 + $0x928] sm:$0xff]
    %v1246 = vld [vmem:[#allocation17 + $0x930] sm:$0xff]
    %v1247 = vld [vmem:[#allocation17 + $0x938] sm:$0xff]
    %v1248 = vld [vmem:[#allocation17 + $0x940] sm:$0xff]
    %v1249 = vld [vmem:[#allocation17 + $0x948] sm:$0xff]
    %v1250 = vld [vmem:[#allocation17 + $0x950] sm:$0xff]
    %v1251 = vld [vmem:[#allocation17 + $0x958] sm:$0xff]
    %v1252 = vld [vmem:[#allocation17 + $0x960] sm:$0xff]
    %v1253 = vld [vmem:[#allocation17 + $0x968] sm:$0xff]
    %v1254 = vld [vmem:[#allocation17 + $0x970] sm:$0xff]
    %v1255 = vld [vmem:[#allocation17 + $0x978] sm:$0xff]
    %v1256 = vld [vmem:[#allocation17 + $0x980] sm:$0xff]
    %v1257 = vld [vmem:[#allocation17 + $0x988] sm:$0xff]
    %v1258 = vld [vmem:[#allocation17 + $0x990] sm:$0xff]
    %v1259 = vld [vmem:[#allocation17 + $0x998] sm:$0xff]
    %v1260 = vld [vmem:[#allocation17 + $0x9a0] sm:$0xff]
    %v1261 = vld [vmem:[#allocation17 + $0x9a8] sm:$0xff]
    %v1262 = vld [vmem:[#allocation17 + $0x9b0] sm:$0xff]
    %v1263 = vld [vmem:[#allocation17 + $0x9b8] sm:$0xff]
    %v1264 = vld [vmem:[#allocation17 + $0x9c0] sm:$0xff]
    %v1265 = vld [vmem:[#allocation17 + $0x9c8] sm:$0xff]
    %v1266 = vld [vmem:[#allocation17 + $0x9d0] sm:$0xff]
    %v1267 = vld [vmem:[#allocation17 + $0x9d8] sm:$0xff]
    %v1268 = vld [vmem:[#allocation17 + $0x9e0] sm:$0xff]
    %v1269 = vld [vmem:[#allocation17 + $0x9e8] sm:$0xff]
    %v1270 = vld [vmem:[#allocation17 + $0x9f0] sm:$0xff]
    %v1271 = vld [vmem:[#allocation17 + $0x9f8] sm:$0xff]
    %v1272 = vld [vmem:[#allocation17 + $0xa00] sm:$0xff]
    %v1273 = vld [vmem:[#allocation17 + $0xa08] sm:$0xff]
    %v1274 = vld [vmem:[#allocation17 + $0xa10] sm:$0xff]
    %v1275 = vld [vmem:[#allocation17 + $0xa18] sm:$0xff]
    %v1276 = vld [vmem:[#allocation17 + $0xa20] sm:$0xff]
    %v1277 = vld [vmem:[#allocation17 + $0xa28] sm:$0xff]
    %v1278 = vld [vmem:[#allocation17 + $0xa30] sm:$0xff]
    %v1279 = vld [vmem:[#allocation17 + $0xa38] sm:$0xff]
    %v1280 = vld [vmem:[#allocation17 + $0xa40] sm:$0xff]
    %v1281 = vld [vmem:[#allocation17 + $0xa48] sm:$0xff]
    %v1282 = vld [vmem:[#allocation17 + $0xa50] sm:$0xff]
    %v1283 = vld [vmem:[#allocation17 + $0xa58] sm:$0xff]
    %v1284 = vld [vmem:[#allocation17 + $0xa60] sm:$0xff]
    %v1285 = vld [vmem:[#allocation17 + $0xa68] sm:$0xff]
    %v1286 = vld [vmem:[#allocation17 + $0xa70] sm:$0xff]
    %v1287 = vld [vmem:[#allocation17 + $0xa78] sm:$0xff]
    %v1288 = vld [vmem:[#allocation17 + $0xa80] sm:$0xff]
    %v1289 = vld [vmem:[#allocation17 + $0xa88] sm:$0xff]
    %v1290 = vld [vmem:[#allocation17 + $0xa90] sm:$0xff]
    %v1291 = vld [vmem:[#allocation17 + $0xa98] sm:$0xff]
    %v1292 = vld [vmem:[#allocation17 + $0xaa0] sm:$0xff]
    %v1293 = vld [vmem:[#allocation17 + $0xaa8] sm:$0xff]
    %v1294 = vld [vmem:[#allocation17 + $0xab0] sm:$0xff]
    %v1295 = vld [vmem:[#allocation17 + $0xab8] sm:$0xff]
    %v1296 = vld [vmem:[#allocation17 + $0xac0] sm:$0xff]
    %v1297 = vld [vmem:[#allocation17 + $0xac8] sm:$0xff]
    %v1298 = vld [vmem:[#allocation17 + $0xad0] sm:$0xff]
    %v1299 = vld [vmem:[#allocation17 + $0xad8] sm:$0xff]
    %v1300 = vld [vmem:[#allocation17 + $0xae0] sm:$0xff]
    %v1301 = vld [vmem:[#allocation17 + $0xae8] sm:$0xff]
    %v1302 = vld [vmem:[#allocation17 + $0xaf0] sm:$0xff]
    %v1303 = vld [vmem:[#allocation17 + $0xaf8] sm:$0xff]
    %v1304 = vld [vmem:[#allocation17 + $0xb00] sm:$0xff]
    %v1305 = vld [vmem:[#allocation17 + $0xb08] sm:$0xff]
    %v1306 = vld [vmem:[#allocation17 + $0xb10] sm:$0xff]
    %v1307 = vld [vmem:[#allocation17 + $0xb18] sm:$0xff]
    %v1308 = vld [vmem:[#allocation17 + $0xb20] sm:$0xff]
    %v1309 = vld [vmem:[#allocation17 + $0xb28] sm:$0xff]
    %v1310 = vld [vmem:[#allocation17 + $0xb30] sm:$0xff]
    %v1311 = vld [vmem:[#allocation17 + $0xb38] sm:$0xff]
    %v1312 = vld [vmem:[#allocation17 + $0xb40] sm:$0xff]
    %v1313 = vld [vmem:[#allocation17 + $0xb48] sm:$0xff]
    %v1314 = vld [vmem:[#allocation17 + $0xb50] sm:$0xff]
    %v1315 = vld [vmem:[#allocation17 + $0xb58] sm:$0xff]
    %v1316 = vld [vmem:[#allocation17 + $0xb60] sm:$0xff]
    %v1317 = vld [vmem:[#allocation17 + $0xb68] sm:$0xff]
    %v1318 = vld [vmem:[#allocation17 + $0xb70] sm:$0xff]
    %v1319 = vld [vmem:[#allocation17 + $0xb78] sm:$0xff]
    %v1320 = vld [vmem:[#allocation17 + $0xb80] sm:$0xff]
    %v1321 = vld [vmem:[#allocation17 + $0xb88] sm:$0xff]
    %v1322 = vld [vmem:[#allocation17 + $0xb90] sm:$0xff]
    %v1323 = vld [vmem:[#allocation17 + $0xb98] sm:$0xff]
    %v1324 = vld [vmem:[#allocation17 + $0xba0] sm:$0xff]
    %v1325 = vld [vmem:[#allocation17 + $0xba8] sm:$0xff]
    %v1326 = vld [vmem:[#allocation17 + $0xbb0] sm:$0xff]
    %v1327 = vld [vmem:[#allocation17 + $0xbb8] sm:$0xff]
    %v1328 = vld [vmem:[#allocation17 + $0xbc0] sm:$0xff]
    %v1329 = vld [vmem:[#allocation17 + $0xbc8] sm:$0xff]
    %v1330 = vld [vmem:[#allocation17 + $0xbd0] sm:$0xff]
    %v1331 = vld [vmem:[#allocation17 + $0xbd8] sm:$0xff]
    %v1332 = vld [vmem:[#allocation17 + $0xbe0] sm:$0xff]
    %v1333 = vld [vmem:[#allocation17 + $0xbe8] sm:$0xff]
    %v1334 = vld [vmem:[#allocation17 + $0xbf0] sm:$0xff]
    %v1335 = vld [vmem:[#allocation17 + $0xbf8] sm:$0xff]
    %v1336 = vld [vmem:[#allocation17 + $0xc00] sm:$0xff]
    %v1337 = vld [vmem:[#allocation17 + $0xc08] sm:$0xff]
    %v1338 = vld [vmem:[#allocation17 + $0xc10] sm:$0xff]
    %v1339 = vld [vmem:[#allocation17 + $0xc18] sm:$0xff]
    %v1340 = vld [vmem:[#allocation17 + $0xc20] sm:$0xff]
    %v1341 = vld [vmem:[#allocation17 + $0xc28] sm:$0xff]
    %v1342 = vld [vmem:[#allocation17 + $0xc30] sm:$0xff]
    %v1343 = vld [vmem:[#allocation17 + $0xc38] sm:$0xff]
    %v1344 = vld [vmem:[#allocation17 + $0xc40] sm:$0xff]
    %v1345 = vld [vmem:[#allocation17 + $0xc48] sm:$0xff]
    %v1346 = vld [vmem:[#allocation17 + $0xc50] sm:$0xff]
    %v1347 = vld [vmem:[#allocation17 + $0xc58] sm:$0xff]
    %v1348 = vld [vmem:[#allocation17 + $0xc60] sm:$0xff]
    %v1349 = vld [vmem:[#allocation17 + $0xc68] sm:$0xff]
    %v1350 = vld [vmem:[#allocation17 + $0xc70] sm:$0xff]
    %v1351 = vld [vmem:[#allocation17 + $0xc78] sm:$0xff]
    %v1352 = vld [vmem:[#allocation17 + $0xc80] sm:$0xff]
    %v1353 = vld [vmem:[#allocation17 + $0xc88] sm:$0xff]
    %v1354 = vld [vmem:[#allocation17 + $0xc90] sm:$0xff]
    %v1355 = vld [vmem:[#allocation17 + $0xc98] sm:$0xff]
    %v1356 = vld [vmem:[#allocation17 + $0xca0] sm:$0xff]
    %v1357 = vld [vmem:[#allocation17 + $0xca8] sm:$0xff]
    %v1358 = vld [vmem:[#allocation17 + $0xcb0] sm:$0xff]
    %v1359 = vld [vmem:[#allocation17 + $0xcb8] sm:$0xff]
    %v1360 = vld [vmem:[#allocation17 + $0xcc0] sm:$0xff]
    %v1361 = vld [vmem:[#allocation17 + $0xcc8] sm:$0xff]
    %v1362 = vld [vmem:[#allocation17 + $0xcd0] sm:$0xff]
    %v1363 = vld [vmem:[#allocation17 + $0xcd8] sm:$0xff]
    %v1364 = vld [vmem:[#allocation17 + $0xce0] sm:$0xff]
    %v1365 = vld [vmem:[#allocation17 + $0xce8] sm:$0xff]
    %v1366 = vld [vmem:[#allocation17 + $0xcf0] sm:$0xff]
    %v1367 = vld [vmem:[#allocation17 + $0xcf8] sm:$0xff]
    %v1368 = vld [vmem:[#allocation17 + $0xd00] sm:$0xff]
    %v1369 = vld [vmem:[#allocation17 + $0xd08] sm:$0xff]
    %v1370 = vld [vmem:[#allocation17 + $0xd10] sm:$0xff]
    %v1371 = vld [vmem:[#allocation17 + $0xd18] sm:$0xff]
    %v1372 = vld [vmem:[#allocation17 + $0xd20] sm:$0xff]
    %v1373 = vld [vmem:[#allocation17 + $0xd28] sm:$0xff]
    %v1374 = vld [vmem:[#allocation17 + $0xd30] sm:$0xff]
    %v1375 = vld [vmem:[#allocation17 + $0xd38] sm:$0xff]
    %v1376 = vld [vmem:[#allocation17 + $0xd40] sm:$0xff]
    %v1377 = vld [vmem:[#allocation17 + $0xd48] sm:$0xff]
    %v1378 = vld [vmem:[#allocation17 + $0xd50] sm:$0xff]
    %v1379 = vld [vmem:[#allocation17 + $0xd58] sm:$0xff]
    %v1380 = vld [vmem:[#allocation17 + $0xd60] sm:$0xff]
    %v1381 = vld [vmem:[#allocation17 + $0xd68] sm:$0xff]
    %v1382 = vld [vmem:[#allocation17 + $0xd70] sm:$0xff]
    %v1383 = vld [vmem:[#allocation17 + $0xd78] sm:$0xff]
    %v1384 = vld [vmem:[#allocation17 + $0xd80] sm:$0xff]
    %v1385 = vld [vmem:[#allocation17 + $0xd88] sm:$0xff]
    %v1386 = vld [vmem:[#allocation17 + $0xd90] sm:$0xff]
    %v1387 = vld [vmem:[#allocation17 + $0xd98] sm:$0xff]
    %v1388 = vld [vmem:[#allocation17 + $0xda0] sm:$0xff]
    %v1389 = vld [vmem:[#allocation17 + $0xda8] sm:$0xff]
    %v1390 = vld [vmem:[#allocation17 + $0xdb0] sm:$0xff]
    %v1391 = vld [vmem:[#allocation17 + $0xdb8] sm:$0xff]
    %v1392 = vld [vmem:[#allocation17 + $0xdc0] sm:$0xff]
    %v1393 = vld [vmem:[#allocation17 + $0xdc8] sm:$0xff]
    %v1394 = vld [vmem:[#allocation17 + $0xdd0] sm:$0xff]
    %v1395 = vld [vmem:[#allocation17 + $0xdd8] sm:$0xff]
    %v1396 = vld [vmem:[#allocation17 + $0xde0] sm:$0xff]
    %v1397 = vld [vmem:[#allocation17 + $0xde8] sm:$0xff]
    %v1398 = vld [vmem:[#allocation17 + $0xdf0] sm:$0xff]
    %v1399 = vld [vmem:[#allocation17 + $0xdf8] sm:$0xff]
    %v1400 = vld [vmem:[#allocation17 + $0xe00] sm:$0xff]
    %v1401 = vld [vmem:[#allocation17 + $0xe08] sm:$0xff]
    %v1402 = vld [vmem:[#allocation17 + $0xe10] sm:$0xff]
    %v1403 = vld [vmem:[#allocation17 + $0xe18] sm:$0xff]
    %v1404 = vld [vmem:[#allocation17 + $0xe20] sm:$0xff]
    %v1405 = vld [vmem:[#allocation17 + $0xe28] sm:$0xff]
    %v1406 = vld [vmem:[#allocation17 + $0xe30] sm:$0xff]
    %v1407 = vld [vmem:[#allocation17 + $0xe38] sm:$0xff]
    %v1408 = vld [vmem:[#allocation17 + $0xe40] sm:$0xff]
    %v1409 = vld [vmem:[#allocation17 + $0xe48] sm:$0xff]
    %v1410 = vld [vmem:[#allocation17 + $0xe50] sm:$0xff]
    %v1411 = vld [vmem:[#allocation17 + $0xe58] sm:$0xff]
    %v1412 = vld [vmem:[#allocation17 + $0xe60] sm:$0xff]
    %v1413 = vld [vmem:[#allocation17 + $0xe68] sm:$0xff]
    %v1414 = vld [vmem:[#allocation17 + $0xe70] sm:$0xff]
    %v1415 = vld [vmem:[#allocation17 + $0xe78] sm:$0xff]
    %v1416 = vld [vmem:[#allocation17 + $0xe80] sm:$0xff]
    %v1417 = vld [vmem:[#allocation17 + $0xe88] sm:$0xff]
    %v1418 = vld [vmem:[#allocation17 + $0xe90] sm:$0xff]
    %v1419 = vld [vmem:[#allocation17 + $0xe98] sm:$0xff]
    %v1420 = vld [vmem:[#allocation17 + $0xea0] sm:$0xff]
    %v1421 = vld [vmem:[#allocation17 + $0xea8] sm:$0xff]
    %v1422 = vld [vmem:[#allocation17 + $0xeb0] sm:$0xff]
    %v1423 = vld [vmem:[#allocation17 + $0xeb8] sm:$0xff]
    %v1424 = vld [vmem:[#allocation17 + $0xec0] sm:$0xff]
    %v1425 = vld [vmem:[#allocation17 + $0xec8] sm:$0xff]
    %v1426 = vld [vmem:[#allocation17 + $0xed0] sm:$0xff]
    %v1427 = vld [vmem:[#allocation17 + $0xed8] sm:$0xff]
    %v1428 = vld [vmem:[#allocation17 + $0xee0] sm:$0xff]
    %v1429 = vld [vmem:[#allocation17 + $0xee8] sm:$0xff]
    %v1430 = vld [vmem:[#allocation17 + $0xef0] sm:$0xff]
    %v1431 = vld [vmem:[#allocation17 + $0xef8] sm:$0xff]
    %v1432 = vld [vmem:[#allocation17 + $0xf00] sm:$0xff]
    %v1433 = vld [vmem:[#allocation17 + $0xf08] sm:$0xff]
    %v1434 = vld [vmem:[#allocation17 + $0xf10] sm:$0xff]
    %v1435 = vld [vmem:[#allocation17 + $0xf18] sm:$0xff]
    %v1436 = vld [vmem:[#allocation17 + $0xf20] sm:$0xff]
    %v1437 = vld [vmem:[#allocation17 + $0xf28] sm:$0xff]
    %v1438 = vld [vmem:[#allocation17 + $0xf30] sm:$0xff]
    %v1439 = vld [vmem:[#allocation17 + $0xf38] sm:$0xff]
    %v1440 = vld [vmem:[#allocation17 + $0xf40] sm:$0xff]
    %v1441 = vld [vmem:[#allocation17 + $0xf48] sm:$0xff]
    %v1442 = vld [vmem:[#allocation17 + $0xf50] sm:$0xff]
    %v1443 = vld [vmem:[#allocation17 + $0xf58] sm:$0xff]
    %v1444 = vld [vmem:[#allocation17 + $0xf60] sm:$0xff]
    %v1445 = vld [vmem:[#allocation17 + $0xf68] sm:$0xff]
    %v1446 = vld [vmem:[#allocation17 + $0xf70] sm:$0xff]
    %v1447 = vld [vmem:[#allocation17 + $0xf78] sm:$0xff]
    %v1448 = vld [vmem:[#allocation17 + $0xf80] sm:$0xff]
    %v1449 = vld [vmem:[#allocation17 + $0xf88] sm:$0xff]
    %v1450 = vld [vmem:[#allocation17 + $0xf90] sm:$0xff]
    %v1451 = vld [vmem:[#allocation17 + $0xf98] sm:$0xff]
    %v1452 = vld [vmem:[#allocation17 + $0xfa0] sm:$0xff]
    %v1453 = vld [vmem:[#allocation17 + $0xfa8] sm:$0xff]
    %v1454 = vld [vmem:[#allocation17 + $0xfb0] sm:$0xff]
    %v1455 = vld [vmem:[#allocation17 + $0xfb8] sm:$0xff]
    %v1456 = vld [vmem:[#allocation17 + $0xfc0] sm:$0xff]
    %v1457 = vld [vmem:[#allocation17 + $0xfc8] sm:$0xff]
    %v1458 = vld [vmem:[#allocation17 + $0xfd0] sm:$0xff]
    %v1459 = vld [vmem:[#allocation17 + $0xfd8] sm:$0xff]
    %v1460 = vld [vmem:[#allocation17 + $0xfe0] sm:$0xff]
    %v1461 = vld [vmem:[#allocation17 + $0xfe8] sm:$0xff]
    %v1462 = vld [vmem:[#allocation17 + $0xff0] sm:$0xff]
    %v1463 = vld [vmem:[#allocation17 + $0xff8] sm:$0xff]
    %v1464 = vld [vmem:[#allocation19] sm:$0xff]
    %v1466 = vlaneseq
    %v1467 = vshrl.u32 %v1466, 7
    %v1468 = vsub.s32 0, %v1467
    %v1469 = vrot.slane %v1464, %v1468
    %v1470 = vlaneseq
    %v1471 = vshrl.u32 %v1470, 7
    %v1472 = vsub.s32 1, %v1471
    %v1473 = vrot.slane %v1464, %v1472
    %v1474 = vlaneseq
    %v1475 = vshrl.u32 %v1474, 7
    %v1476 = vsub.s32 2, %v1475
    %v1477 = vrot.slane %v1464, %v1476
    %v1478 = vlaneseq
    %v1479 = vshrl.u32 %v1478, 7
    %v1480 = vsub.s32 3, %v1479
    %v1481 = vrot.slane %v1464, %v1480
    %v1482 = vlaneseq
    %v1483 = vshrl.u32 %v1482, 7
    %v1484 = vsub.s32 4, %v1483
    %v1485 = vrot.slane %v1464, %v1484
    %v1486 = vlaneseq
    %v1487 = vshrl.u32 %v1486, 7
    %v1488 = vsub.s32 5, %v1487
    %v1489 = vrot.slane %v1464, %v1488
    %v1490 = vlaneseq
    %v1491 = vshrl.u32 %v1490, 7
    %v1492 = vsub.s32 6, %v1491
    %v1493 = vrot.slane %v1464, %v1492
    %v1494 = vlaneseq
    %v1495 = vshrl.u32 %v1494, 7
    %v1496 = vsub.s32 7, %v1495
    %v1497 = vrot.slane %v1464, %v1496
    %v2018 = vunpack.c.l.b16 %v952
    %v2019 = vunpack.c.h.b16 %v952
    %v2020 = vunpack.c.l.b16 %v953
    %v2021 = vunpack.c.h.b16 %v953
    %v2022 = vunpack.c.l.b16 %v954
    %v2023 = vunpack.c.h.b16 %v954
    %v2024 = vunpack.c.l.b16 %v955
    %v2025 = vunpack.c.h.b16 %v955
    %v2026 = vunpack.c.l.b16 %v956
    %v2027 = vunpack.c.h.b16 %v956
    %v2028 = vunpack.c.l.b16 %v957
    %v2029 = vunpack.c.h.b16 %v957
    %v2030 = vunpack.c.l.b16 %v958
    %v2031 = vunpack.c.h.b16 %v958
    %v2032 = vunpack.c.l.b16 %v959
    %v2033 = vunpack.c.h.b16 %v959
    %v2034 = vunpack.c.l.b16 %v960
    %v2035 = vunpack.c.h.b16 %v960
    %v2036 = vunpack.c.l.b16 %v961
    %v2037 = vunpack.c.h.b16 %v961
    %v2038 = vunpack.c.l.b16 %v962
    %v2039 = vunpack.c.h.b16 %v962
    %v2040 = vunpack.c.l.b16 %v963
    %v2041 = vunpack.c.h.b16 %v963
    %v2042 = vunpack.c.l.b16 %v964
    %v2043 = vunpack.c.h.b16 %v964
    %v2044 = vunpack.c.l.b16 %v965
    %v2045 = vunpack.c.h.b16 %v965
    %v2046 = vunpack.c.l.b16 %v966
    %v2047 = vunpack.c.h.b16 %v966
    %v2048 = vunpack.c.l.b16 %v967
    %v2049 = vunpack.c.h.b16 %v967
    %v2050 = vunpack.c.l.b16 %v968
    %v2051 = vunpack.c.h.b16 %v968
    %v2052 = vunpack.c.l.b16 %v969
    %v2053 = vunpack.c.h.b16 %v969
    %v2054 = vunpack.c.l.b16 %v970
    %v2055 = vunpack.c.h.b16 %v970
    %v2056 = vunpack.c.l.b16 %v971
    %v2057 = vunpack.c.h.b16 %v971
    %v2058 = vunpack.c.l.b16 %v972
    %v2059 = vunpack.c.h.b16 %v972
    %v2060 = vunpack.c.l.b16 %v973
    %v2061 = vunpack.c.h.b16 %v973
    %v2062 = vunpack.c.l.b16 %v974
    %v2063 = vunpack.c.h.b16 %v974
    %v2064 = vunpack.c.l.b16 %v975
    %v2065 = vunpack.c.h.b16 %v975
    %v2066 = vunpack.c.l.b16 %v976
    %v2067 = vunpack.c.h.b16 %v976
    %v2068 = vunpack.c.l.b16 %v977
    %v2069 = vunpack.c.h.b16 %v977
    %v2070 = vunpack.c.l.b16 %v978
    %v2071 = vunpack.c.h.b16 %v978
    %v2072 = vunpack.c.l.b16 %v979
    %v2073 = vunpack.c.h.b16 %v979
    %v2074 = vunpack.c.l.b16 %v980
    %v2075 = vunpack.c.h.b16 %v980
    %v2076 = vunpack.c.l.b16 %v981
    %v2077 = vunpack.c.h.b16 %v981
    %v2078 = vunpack.c.l.b16 %v982
    %v2079 = vunpack.c.h.b16 %v982
    %v2080 = vunpack.c.l.b16 %v983
    %v2081 = vunpack.c.h.b16 %v983
    %v2082 = vunpack.c.l.b16 %v984
    %v2083 = vunpack.c.h.b16 %v984
    %v2084 = vunpack.c.l.b16 %v985
    %v2085 = vunpack.c.h.b16 %v985
    %v2086 = vunpack.c.l.b16 %v986
    %v2087 = vunpack.c.h.b16 %v986
    %v2088 = vunpack.c.l.b16 %v987
    %v2089 = vunpack.c.h.b16 %v987
    %v2090 = vunpack.c.l.b16 %v988
    %v2091 = vunpack.c.h.b16 %v988
    %v2092 = vunpack.c.l.b16 %v989
    %v2093 = vunpack.c.h.b16 %v989
    %v2094 = vunpack.c.l.b16 %v990
    %v2095 = vunpack.c.h.b16 %v990
    %v2096 = vunpack.c.l.b16 %v991
    %v2097 = vunpack.c.h.b16 %v991
    %v2098 = vunpack.c.l.b16 %v992
    %v2099 = vunpack.c.h.b16 %v992
    %v2100 = vunpack.c.l.b16 %v993
    %v2101 = vunpack.c.h.b16 %v993
    %v2102 = vunpack.c.l.b16 %v994
    %v2103 = vunpack.c.h.b16 %v994
    %v2104 = vunpack.c.l.b16 %v995
    %v2105 = vunpack.c.h.b16 %v995
    %v2106 = vunpack.c.l.b16 %v996
    %v2107 = vunpack.c.h.b16 %v996
    %v2108 = vunpack.c.l.b16 %v997
    %v2109 = vunpack.c.h.b16 %v997
    %v2110 = vunpack.c.l.b16 %v998
    %v2111 = vunpack.c.h.b16 %v998
    %v2112 = vunpack.c.l.b16 %v999
    %v2113 = vunpack.c.h.b16 %v999
    %v2114 = vunpack.c.l.b16 %v1000
    %v2115 = vunpack.c.h.b16 %v1000
    %v2116 = vunpack.c.l.b16 %v1001
    %v2117 = vunpack.c.h.b16 %v1001
    %v2118 = vunpack.c.l.b16 %v1002
    %v2119 = vunpack.c.h.b16 %v1002
    %v2120 = vunpack.c.l.b16 %v1003
    %v2121 = vunpack.c.h.b16 %v1003
    %v2122 = vunpack.c.l.b16 %v1004
    %v2123 = vunpack.c.h.b16 %v1004
    %v2124 = vunpack.c.l.b16 %v1005
    %v2125 = vunpack.c.h.b16 %v1005
    %v2126 = vunpack.c.l.b16 %v1006
    %v2127 = vunpack.c.h.b16 %v1006
    %v2128 = vunpack.c.l.b16 %v1007
    %v2129 = vunpack.c.h.b16 %v1007
    %v2130 = vunpack.c.l.b16 %v1008
    %v2131 = vunpack.c.h.b16 %v1008
    %v2132 = vunpack.c.l.b16 %v1009
    %v2133 = vunpack.c.h.b16 %v1009
    %v2134 = vunpack.c.l.b16 %v1010
    %v2135 = vunpack.c.h.b16 %v1010
    %v2136 = vunpack.c.l.b16 %v1011
    %v2137 = vunpack.c.h.b16 %v1011
    %v2138 = vunpack.c.l.b16 %v1012
    %v2139 = vunpack.c.h.b16 %v1012
    %v2140 = vunpack.c.l.b16 %v1013
    %v2141 = vunpack.c.h.b16 %v1013
    %v2142 = vunpack.c.l.b16 %v1014
    %v2143 = vunpack.c.h.b16 %v1014
    %v2144 = vunpack.c.l.b16 %v1015
    %v2145 = vunpack.c.h.b16 %v1015
    %v2146 = vunpack.c.l.b16 %v1016
    %v2147 = vunpack.c.h.b16 %v1016
    %v2148 = vunpack.c.l.b16 %v1017
    %v2149 = vunpack.c.h.b16 %v1017
    %v2150 = vunpack.c.l.b16 %v1018
    %v2151 = vunpack.c.h.b16 %v1018
    %v2152 = vunpack.c.l.b16 %v1019
    %v2153 = vunpack.c.h.b16 %v1019
    %v2154 = vunpack.c.l.b16 %v1020
    %v2155 = vunpack.c.h.b16 %v1020
    %v2156 = vunpack.c.l.b16 %v1021
    %v2157 = vunpack.c.h.b16 %v1021
    %v2158 = vunpack.c.l.b16 %v1022
    %v2159 = vunpack.c.h.b16 %v1022
    %v2160 = vunpack.c.l.b16 %v1023
    %v2161 = vunpack.c.h.b16 %v1023
    %v2162 = vunpack.c.l.b16 %v1024
    %v2163 = vunpack.c.h.b16 %v1024
    %v2164 = vunpack.c.l.b16 %v1025
    %v2165 = vunpack.c.h.b16 %v1025
    %v2166 = vunpack.c.l.b16 %v1026
    %v2167 = vunpack.c.h.b16 %v1026
    %v2168 = vunpack.c.l.b16 %v1027
    %v2169 = vunpack.c.h.b16 %v1027
    %v2170 = vunpack.c.l.b16 %v1028
    %v2171 = vunpack.c.h.b16 %v1028
    %v2172 = vunpack.c.l.b16 %v1029
    %v2173 = vunpack.c.h.b16 %v1029
    %v2174 = vunpack.c.l.b16 %v1030
    %v2175 = vunpack.c.h.b16 %v1030
    %v2176 = vunpack.c.l.b16 %v1031
    %v2177 = vunpack.c.h.b16 %v1031
    %v2178 = vunpack.c.l.b16 %v1032
    %v2179 = vunpack.c.h.b16 %v1032
    %v2180 = vunpack.c.l.b16 %v1033
    %v2181 = vunpack.c.h.b16 %v1033
    %v2182 = vunpack.c.l.b16 %v1034
    %v2183 = vunpack.c.h.b16 %v1034
    %v2184 = vunpack.c.l.b16 %v1035
    %v2185 = vunpack.c.h.b16 %v1035
    %v2186 = vunpack.c.l.b16 %v1036
    %v2187 = vunpack.c.h.b16 %v1036
    %v2188 = vunpack.c.l.b16 %v1037
    %v2189 = vunpack.c.h.b16 %v1037
    %v2190 = vunpack.c.l.b16 %v1038
    %v2191 = vunpack.c.h.b16 %v1038
    %v2192 = vunpack.c.l.b16 %v1039
    %v2193 = vunpack.c.h.b16 %v1039
    %v2194 = vunpack.c.l.b16 %v1040
    %v2195 = vunpack.c.h.b16 %v1040
    %v2196 = vunpack.c.l.b16 %v1041
    %v2197 = vunpack.c.h.b16 %v1041
    %v2198 = vunpack.c.l.b16 %v1042
    %v2199 = vunpack.c.h.b16 %v1042
    %v2200 = vunpack.c.l.b16 %v1043
    %v2201 = vunpack.c.h.b16 %v1043
    %v2202 = vunpack.c.l.b16 %v1044
    %v2203 = vunpack.c.h.b16 %v1044
    %v2204 = vunpack.c.l.b16 %v1045
    %v2205 = vunpack.c.h.b16 %v1045
    %v2206 = vunpack.c.l.b16 %v1046
    %v2207 = vunpack.c.h.b16 %v1046
    %v2208 = vunpack.c.l.b16 %v1047
    %v2209 = vunpack.c.h.b16 %v1047
    %v2210 = vunpack.c.l.b16 %v1048
    %v2211 = vunpack.c.h.b16 %v1048
    %v2212 = vunpack.c.l.b16 %v1049
    %v2213 = vunpack.c.h.b16 %v1049
    %v2214 = vunpack.c.l.b16 %v1050
    %v2215 = vunpack.c.h.b16 %v1050
    %v2216 = vunpack.c.l.b16 %v1051
    %v2217 = vunpack.c.h.b16 %v1051
    %v2218 = vunpack.c.l.b16 %v1052
    %v2219 = vunpack.c.h.b16 %v1052
    %v2220 = vunpack.c.l.b16 %v1053
    %v2221 = vunpack.c.h.b16 %v1053
    %v2222 = vunpack.c.l.b16 %v1054
    %v2223 = vunpack.c.h.b16 %v1054
    %v2224 = vunpack.c.l.b16 %v1055
    %v2225 = vunpack.c.h.b16 %v1055
    %v2226 = vunpack.c.l.b16 %v1056
    %v2227 = vunpack.c.h.b16 %v1056
    %v2228 = vunpack.c.l.b16 %v1057
    %v2229 = vunpack.c.h.b16 %v1057
    %v2230 = vunpack.c.l.b16 %v1058
    %v2231 = vunpack.c.h.b16 %v1058
    %v2232 = vunpack.c.l.b16 %v1059
    %v2233 = vunpack.c.h.b16 %v1059
    %v2234 = vunpack.c.l.b16 %v1060
    %v2235 = vunpack.c.h.b16 %v1060
    %v2236 = vunpack.c.l.b16 %v1061
    %v2237 = vunpack.c.h.b16 %v1061
    %v2238 = vunpack.c.l.b16 %v1062
    %v2239 = vunpack.c.h.b16 %v1062
    %v2240 = vunpack.c.l.b16 %v1063
    %v2241 = vunpack.c.h.b16 %v1063
    %v2242 = vunpack.c.l.b16 %v1064
    %v2243 = vunpack.c.h.b16 %v1064
    %v2244 = vunpack.c.l.b16 %v1065
    %v2245 = vunpack.c.h.b16 %v1065
    %v2246 = vunpack.c.l.b16 %v1066
    %v2247 = vunpack.c.h.b16 %v1066
    %v2248 = vunpack.c.l.b16 %v1067
    %v2249 = vunpack.c.h.b16 %v1067
    %v2250 = vunpack.c.l.b16 %v1068
    %v2251 = vunpack.c.h.b16 %v1068
    %v2252 = vunpack.c.l.b16 %v1069
    %v2253 = vunpack.c.h.b16 %v1069
    %v2254 = vunpack.c.l.b16 %v1070
    %v2255 = vunpack.c.h.b16 %v1070
    %v2256 = vunpack.c.l.b16 %v1071
    %v2257 = vunpack.c.h.b16 %v1071
    %v2258 = vunpack.c.l.b16 %v1072
    %v2259 = vunpack.c.h.b16 %v1072
    %v2260 = vunpack.c.l.b16 %v1073
    %v2261 = vunpack.c.h.b16 %v1073
    %v2262 = vunpack.c.l.b16 %v1074
    %v2263 = vunpack.c.h.b16 %v1074
    %v2264 = vunpack.c.l.b16 %v1075
    %v2265 = vunpack.c.h.b16 %v1075
    %v2266 = vunpack.c.l.b16 %v1076
    %v2267 = vunpack.c.h.b16 %v1076
    %v2268 = vunpack.c.l.b16 %v1077
    %v2269 = vunpack.c.h.b16 %v1077
    %v2270 = vunpack.c.l.b16 %v1078
    %v2271 = vunpack.c.h.b16 %v1078
    %v2272 = vunpack.c.l.b16 %v1079
    %v2273 = vunpack.c.h.b16 %v1079
    %v2274 = vunpack.c.l.b16 %v1080
    %v2275 = vunpack.c.h.b16 %v1080
    %v2276 = vunpack.c.l.b16 %v1081
    %v2277 = vunpack.c.h.b16 %v1081
    %v2278 = vunpack.c.l.b16 %v1082
    %v2279 = vunpack.c.h.b16 %v1082
    %v2280 = vunpack.c.l.b16 %v1083
    %v2281 = vunpack.c.h.b16 %v1083
    %v2282 = vunpack.c.l.b16 %v1084
    %v2283 = vunpack.c.h.b16 %v1084
    %v2284 = vunpack.c.l.b16 %v1085
    %v2285 = vunpack.c.h.b16 %v1085
    %v2286 = vunpack.c.l.b16 %v1086
    %v2287 = vunpack.c.h.b16 %v1086
    %v2288 = vunpack.c.l.b16 %v1087
    %v2289 = vunpack.c.h.b16 %v1087
    %v2290 = vunpack.c.l.b16 %v1088
    %v2291 = vunpack.c.h.b16 %v1088
    %v2292 = vunpack.c.l.b16 %v1089
    %v2293 = vunpack.c.h.b16 %v1089
    %v2294 = vunpack.c.l.b16 %v1090
    %v2295 = vunpack.c.h.b16 %v1090
    %v2296 = vunpack.c.l.b16 %v1091
    %v2297 = vunpack.c.h.b16 %v1091
    %v2298 = vunpack.c.l.b16 %v1092
    %v2299 = vunpack.c.h.b16 %v1092
    %v2300 = vunpack.c.l.b16 %v1093
    %v2301 = vunpack.c.h.b16 %v1093
    %v2302 = vunpack.c.l.b16 %v1094
    %v2303 = vunpack.c.h.b16 %v1094
    %v2304 = vunpack.c.l.b16 %v1095
    %v2305 = vunpack.c.h.b16 %v1095
    %v2306 = vunpack.c.l.b16 %v1096
    %v2307 = vunpack.c.h.b16 %v1096
    %v2308 = vunpack.c.l.b16 %v1097
    %v2309 = vunpack.c.h.b16 %v1097
    %v2310 = vunpack.c.l.b16 %v1098
    %v2311 = vunpack.c.h.b16 %v1098
    %v2312 = vunpack.c.l.b16 %v1099
    %v2313 = vunpack.c.h.b16 %v1099
    %v2314 = vunpack.c.l.b16 %v1100
    %v2315 = vunpack.c.h.b16 %v1100
    %v2316 = vunpack.c.l.b16 %v1101
    %v2317 = vunpack.c.h.b16 %v1101
    %v2318 = vunpack.c.l.b16 %v1102
    %v2319 = vunpack.c.h.b16 %v1102
    %v2320 = vunpack.c.l.b16 %v1103
    %v2321 = vunpack.c.h.b16 %v1103
    %v2322 = vunpack.c.l.b16 %v1104
    %v2323 = vunpack.c.h.b16 %v1104
    %v2324 = vunpack.c.l.b16 %v1105
    %v2325 = vunpack.c.h.b16 %v1105
    %v2326 = vunpack.c.l.b16 %v1106
    %v2327 = vunpack.c.h.b16 %v1106
    %v2328 = vunpack.c.l.b16 %v1107
    %v2329 = vunpack.c.h.b16 %v1107
    %v2330 = vunpack.c.l.b16 %v1108
    %v2331 = vunpack.c.h.b16 %v1108
    %v2332 = vunpack.c.l.b16 %v1109
    %v2333 = vunpack.c.h.b16 %v1109
    %v2334 = vunpack.c.l.b16 %v1110
    %v2335 = vunpack.c.h.b16 %v1110
    %v2336 = vunpack.c.l.b16 %v1111
    %v2337 = vunpack.c.h.b16 %v1111
    %v2338 = vunpack.c.l.b16 %v1112
    %v2339 = vunpack.c.h.b16 %v1112
    %v2340 = vunpack.c.l.b16 %v1113
    %v2341 = vunpack.c.h.b16 %v1113
    %v2342 = vunpack.c.l.b16 %v1114
    %v2343 = vunpack.c.h.b16 %v1114
    %v2344 = vunpack.c.l.b16 %v1115
    %v2345 = vunpack.c.h.b16 %v1115
    %v2346 = vunpack.c.l.b16 %v1116
    %v2347 = vunpack.c.h.b16 %v1116
    %v2348 = vunpack.c.l.b16 %v1117
    %v2349 = vunpack.c.h.b16 %v1117
    %v2350 = vunpack.c.l.b16 %v1118
    %v2351 = vunpack.c.h.b16 %v1118
    %v2352 = vunpack.c.l.b16 %v1119
    %v2353 = vunpack.c.h.b16 %v1119
    %v2354 = vunpack.c.l.b16 %v1120
    %v2355 = vunpack.c.h.b16 %v1120
    %v2356 = vunpack.c.l.b16 %v1121
    %v2357 = vunpack.c.h.b16 %v1121
    %v2358 = vunpack.c.l.b16 %v1122
    %v2359 = vunpack.c.h.b16 %v1122
    %v2360 = vunpack.c.l.b16 %v1123
    %v2361 = vunpack.c.h.b16 %v1123
    %v2362 = vunpack.c.l.b16 %v1124
    %v2363 = vunpack.c.h.b16 %v1124
    %v2364 = vunpack.c.l.b16 %v1125
    %v2365 = vunpack.c.h.b16 %v1125
    %v2366 = vunpack.c.l.b16 %v1126
    %v2367 = vunpack.c.h.b16 %v1126
    %v2368 = vunpack.c.l.b16 %v1127
    %v2369 = vunpack.c.h.b16 %v1127
    %v2370 = vunpack.c.l.b16 %v1128
    %v2371 = vunpack.c.h.b16 %v1128
    %v2372 = vunpack.c.l.b16 %v1129
    %v2373 = vunpack.c.h.b16 %v1129
    %v2374 = vunpack.c.l.b16 %v1130
    %v2375 = vunpack.c.h.b16 %v1130
    %v2376 = vunpack.c.l.b16 %v1131
    %v2377 = vunpack.c.h.b16 %v1131
    %v2378 = vunpack.c.l.b16 %v1132
    %v2379 = vunpack.c.h.b16 %v1132
    %v2380 = vunpack.c.l.b16 %v1133
    %v2381 = vunpack.c.h.b16 %v1133
    %v2382 = vunpack.c.l.b16 %v1134
    %v2383 = vunpack.c.h.b16 %v1134
    %v2384 = vunpack.c.l.b16 %v1135
    %v2385 = vunpack.c.h.b16 %v1135
    %v2386 = vunpack.c.l.b16 %v1136
    %v2387 = vunpack.c.h.b16 %v1136
    %v2388 = vunpack.c.l.b16 %v1137
    %v2389 = vunpack.c.h.b16 %v1137
    %v2390 = vunpack.c.l.b16 %v1138
    %v2391 = vunpack.c.h.b16 %v1138
    %v2392 = vunpack.c.l.b16 %v1139
    %v2393 = vunpack.c.h.b16 %v1139
    %v2394 = vunpack.c.l.b16 %v1140
    %v2395 = vunpack.c.h.b16 %v1140
    %v2396 = vunpack.c.l.b16 %v1141
    %v2397 = vunpack.c.h.b16 %v1141
    %v2398 = vunpack.c.l.b16 %v1142
    %v2399 = vunpack.c.h.b16 %v1142
    %v2400 = vunpack.c.l.b16 %v1143
    %v2401 = vunpack.c.h.b16 %v1143
    %v2402 = vunpack.c.l.b16 %v1144
    %v2403 = vunpack.c.h.b16 %v1144
    %v2404 = vunpack.c.l.b16 %v1145
    %v2405 = vunpack.c.h.b16 %v1145
    %v2406 = vunpack.c.l.b16 %v1146
    %v2407 = vunpack.c.h.b16 %v1146
    %v2408 = vunpack.c.l.b16 %v1147
    %v2409 = vunpack.c.h.b16 %v1147
    %v2410 = vunpack.c.l.b16 %v1148
    %v2411 = vunpack.c.h.b16 %v1148
    %v2412 = vunpack.c.l.b16 %v1149
    %v2413 = vunpack.c.h.b16 %v1149
    %v2414 = vunpack.c.l.b16 %v1150
    %v2415 = vunpack.c.h.b16 %v1150
    %v2416 = vunpack.c.l.b16 %v1151
    %v2417 = vunpack.c.h.b16 %v1151
    %v2418 = vunpack.c.l.b16 %v1152
    %v2419 = vunpack.c.h.b16 %v1152
    %v2420 = vunpack.c.l.b16 %v1153
    %v2421 = vunpack.c.h.b16 %v1153
    %v2422 = vunpack.c.l.b16 %v1154
    %v2423 = vunpack.c.h.b16 %v1154
    %v2424 = vunpack.c.l.b16 %v1155
    %v2425 = vunpack.c.h.b16 %v1155
    %v2426 = vunpack.c.l.b16 %v1156
    %v2427 = vunpack.c.h.b16 %v1156
    %v2428 = vunpack.c.l.b16 %v1157
    %v2429 = vunpack.c.h.b16 %v1157
    %v2430 = vunpack.c.l.b16 %v1158
    %v2431 = vunpack.c.h.b16 %v1158
    %v2432 = vunpack.c.l.b16 %v1159
    %v2433 = vunpack.c.h.b16 %v1159
    %v2434 = vunpack.c.l.b16 %v1160
    %v2435 = vunpack.c.h.b16 %v1160
    %v2436 = vunpack.c.l.b16 %v1161
    %v2437 = vunpack.c.h.b16 %v1161
    %v2438 = vunpack.c.l.b16 %v1162
    %v2439 = vunpack.c.h.b16 %v1162
    %v2440 = vunpack.c.l.b16 %v1163
    %v2441 = vunpack.c.h.b16 %v1163
    %v2442 = vunpack.c.l.b16 %v1164
    %v2443 = vunpack.c.h.b16 %v1164
    %v2444 = vunpack.c.l.b16 %v1165
    %v2445 = vunpack.c.h.b16 %v1165
    %v2446 = vunpack.c.l.b16 %v1166
    %v2447 = vunpack.c.h.b16 %v1166
    %v2448 = vunpack.c.l.b16 %v1167
    %v2449 = vunpack.c.h.b16 %v1167
    %v2450 = vunpack.c.l.b16 %v1168
    %v2451 = vunpack.c.h.b16 %v1168
    %v2452 = vunpack.c.l.b16 %v1169
    %v2453 = vunpack.c.h.b16 %v1169
    %v2454 = vunpack.c.l.b16 %v1170
    %v2455 = vunpack.c.h.b16 %v1170
    %v2456 = vunpack.c.l.b16 %v1171
    %v2457 = vunpack.c.h.b16 %v1171
    %v2458 = vunpack.c.l.b16 %v1172
    %v2459 = vunpack.c.h.b16 %v1172
    %v2460 = vunpack.c.l.b16 %v1173
    %v2461 = vunpack.c.h.b16 %v1173
    %v2462 = vunpack.c.l.b16 %v1174
    %v2463 = vunpack.c.h.b16 %v1174
    %v2464 = vunpack.c.l.b16 %v1175
    %v2465 = vunpack.c.h.b16 %v1175
    %v2466 = vunpack.c.l.b16 %v1176
    %v2467 = vunpack.c.h.b16 %v1176
    %v2468 = vunpack.c.l.b16 %v1177
    %v2469 = vunpack.c.h.b16 %v1177
    %v2470 = vunpack.c.l.b16 %v1178
    %v2471 = vunpack.c.h.b16 %v1178
    %v2472 = vunpack.c.l.b16 %v1179
    %v2473 = vunpack.c.h.b16 %v1179
    %v2474 = vunpack.c.l.b16 %v1180
    %v2475 = vunpack.c.h.b16 %v1180
    %v2476 = vunpack.c.l.b16 %v1181
    %v2477 = vunpack.c.h.b16 %v1181
    %v2478 = vunpack.c.l.b16 %v1182
    %v2479 = vunpack.c.h.b16 %v1182
    %v2480 = vunpack.c.l.b16 %v1183
    %v2481 = vunpack.c.h.b16 %v1183
    %v2482 = vunpack.c.l.b16 %v1184
    %v2483 = vunpack.c.h.b16 %v1184
    %v2484 = vunpack.c.l.b16 %v1185
    %v2485 = vunpack.c.h.b16 %v1185
    %v2486 = vunpack.c.l.b16 %v1186
    %v2487 = vunpack.c.h.b16 %v1186
    %v2488 = vunpack.c.l.b16 %v1187
    %v2489 = vunpack.c.h.b16 %v1187
    %v2490 = vunpack.c.l.b16 %v1188
    %v2491 = vunpack.c.h.b16 %v1188
    %v2492 = vunpack.c.l.b16 %v1189
    %v2493 = vunpack.c.h.b16 %v1189
    %v2494 = vunpack.c.l.b16 %v1190
    %v2495 = vunpack.c.h.b16 %v1190
    %v2496 = vunpack.c.l.b16 %v1191
    %v2497 = vunpack.c.h.b16 %v1191
    %v2498 = vunpack.c.l.b16 %v1192
    %v2499 = vunpack.c.h.b16 %v1192
    %v2500 = vunpack.c.l.b16 %v1193
    %v2501 = vunpack.c.h.b16 %v1193
    %v2502 = vunpack.c.l.b16 %v1194
    %v2503 = vunpack.c.h.b16 %v1194
    %v2504 = vunpack.c.l.b16 %v1195
    %v2505 = vunpack.c.h.b16 %v1195
    %v2506 = vunpack.c.l.b16 %v1196
    %v2507 = vunpack.c.h.b16 %v1196
    %v2508 = vunpack.c.l.b16 %v1197
    %v2509 = vunpack.c.h.b16 %v1197
    %v2510 = vunpack.c.l.b16 %v1198
    %v2511 = vunpack.c.h.b16 %v1198
    %v2512 = vunpack.c.l.b16 %v1199
    %v2513 = vunpack.c.h.b16 %v1199
    %v2514 = vunpack.c.l.b16 %v1200
    %v2515 = vunpack.c.h.b16 %v1200
    %v2516 = vunpack.c.l.b16 %v1201
    %v2517 = vunpack.c.h.b16 %v1201
    %v2518 = vunpack.c.l.b16 %v1202
    %v2519 = vunpack.c.h.b16 %v1202
    %v2520 = vunpack.c.l.b16 %v1203
    %v2521 = vunpack.c.h.b16 %v1203
    %v2522 = vunpack.c.l.b16 %v1204
    %v2523 = vunpack.c.h.b16 %v1204
    %v2524 = vunpack.c.l.b16 %v1205
    %v2525 = vunpack.c.h.b16 %v1205
    %v2526 = vunpack.c.l.b16 %v1206
    %v2527 = vunpack.c.h.b16 %v1206
    %v2528 = vunpack.c.l.b16 %v1207
    %v2529 = vunpack.c.h.b16 %v1207
    %v2530 = vunpack.c.l.b16 %v1208
    %v2531 = vunpack.c.h.b16 %v1208
    %v2532 = vunpack.c.l.b16 %v1209
    %v2533 = vunpack.c.h.b16 %v1209
    %v2534 = vunpack.c.l.b16 %v1210
    %v2535 = vunpack.c.h.b16 %v1210
    %v2536 = vunpack.c.l.b16 %v1211
    %v2537 = vunpack.c.h.b16 %v1211
    %v2538 = vunpack.c.l.b16 %v1212
    %v2539 = vunpack.c.h.b16 %v1212
    %v2540 = vunpack.c.l.b16 %v1213
    %v2541 = vunpack.c.h.b16 %v1213
    %v2542 = vunpack.c.l.b16 %v1214
    %v2543 = vunpack.c.h.b16 %v1214
    %v2544 = vunpack.c.l.b16 %v1215
    %v2545 = vunpack.c.h.b16 %v1215
    %v2546 = vunpack.c.l.b16 %v1216
    %v2547 = vunpack.c.h.b16 %v1216
    %v2548 = vunpack.c.l.b16 %v1217
    %v2549 = vunpack.c.h.b16 %v1217
    %v2550 = vunpack.c.l.b16 %v1218
    %v2551 = vunpack.c.h.b16 %v1218
    %v2552 = vunpack.c.l.b16 %v1219
    %v2553 = vunpack.c.h.b16 %v1219
    %v2554 = vunpack.c.l.b16 %v1220
    %v2555 = vunpack.c.h.b16 %v1220
    %v2556 = vunpack.c.l.b16 %v1221
    %v2557 = vunpack.c.h.b16 %v1221
    %v2558 = vunpack.c.l.b16 %v1222
    %v2559 = vunpack.c.h.b16 %v1222
    %v2560 = vunpack.c.l.b16 %v1223
    %v2561 = vunpack.c.h.b16 %v1223
    %v2562 = vunpack.c.l.b16 %v1224
    %v2563 = vunpack.c.h.b16 %v1224
    %v2564 = vunpack.c.l.b16 %v1225
    %v2565 = vunpack.c.h.b16 %v1225
    %v2566 = vunpack.c.l.b16 %v1226
    %v2567 = vunpack.c.h.b16 %v1226
    %v2568 = vunpack.c.l.b16 %v1227
    %v2569 = vunpack.c.h.b16 %v1227
    %v2570 = vunpack.c.l.b16 %v1228
    %v2571 = vunpack.c.h.b16 %v1228
    %v2572 = vunpack.c.l.b16 %v1229
    %v2573 = vunpack.c.h.b16 %v1229
    %v2574 = vunpack.c.l.b16 %v1230
    %v2575 = vunpack.c.h.b16 %v1230
    %v2576 = vunpack.c.l.b16 %v1231
    %v2577 = vunpack.c.h.b16 %v1231
    %v2578 = vunpack.c.l.b16 %v1232
    %v2579 = vunpack.c.h.b16 %v1232
    %v2580 = vunpack.c.l.b16 %v1233
    %v2581 = vunpack.c.h.b16 %v1233
    %v2582 = vunpack.c.l.b16 %v1234
    %v2583 = vunpack.c.h.b16 %v1234
    %v2584 = vunpack.c.l.b16 %v1235
    %v2585 = vunpack.c.h.b16 %v1235
    %v2586 = vunpack.c.l.b16 %v1236
    %v2587 = vunpack.c.h.b16 %v1236
    %v2588 = vunpack.c.l.b16 %v1237
    %v2589 = vunpack.c.h.b16 %v1237
    %v2590 = vunpack.c.l.b16 %v1238
    %v2591 = vunpack.c.h.b16 %v1238
    %v2592 = vunpack.c.l.b16 %v1239
    %v2593 = vunpack.c.h.b16 %v1239
    %v2594 = vunpack.c.l.b16 %v1240
    %v2595 = vunpack.c.h.b16 %v1240
    %v2596 = vunpack.c.l.b16 %v1241
    %v2597 = vunpack.c.h.b16 %v1241
    %v2598 = vunpack.c.l.b16 %v1242
    %v2599 = vunpack.c.h.b16 %v1242
    %v2600 = vunpack.c.l.b16 %v1243
    %v2601 = vunpack.c.h.b16 %v1243
    %v2602 = vunpack.c.l.b16 %v1244
    %v2603 = vunpack.c.h.b16 %v1244
    %v2604 = vunpack.c.l.b16 %v1245
    %v2605 = vunpack.c.h.b16 %v1245
    %v2606 = vunpack.c.l.b16 %v1246
    %v2607 = vunpack.c.h.b16 %v1246
    %v2608 = vunpack.c.l.b16 %v1247
    %v2609 = vunpack.c.h.b16 %v1247
    %v2610 = vunpack.c.l.b16 %v1248
    %v2611 = vunpack.c.h.b16 %v1248
    %v2612 = vunpack.c.l.b16 %v1249
    %v2613 = vunpack.c.h.b16 %v1249
    %v2614 = vunpack.c.l.b16 %v1250
    %v2615 = vunpack.c.h.b16 %v1250
    %v2616 = vunpack.c.l.b16 %v1251
    %v2617 = vunpack.c.h.b16 %v1251
    %v2618 = vunpack.c.l.b16 %v1252
    %v2619 = vunpack.c.h.b16 %v1252
    %v2620 = vunpack.c.l.b16 %v1253
    %v2621 = vunpack.c.h.b16 %v1253
    %v2622 = vunpack.c.l.b16 %v1254
    %v2623 = vunpack.c.h.b16 %v1254
    %v2624 = vunpack.c.l.b16 %v1255
    %v2625 = vunpack.c.h.b16 %v1255
    %v2626 = vunpack.c.l.b16 %v1256
    %v2627 = vunpack.c.h.b16 %v1256
    %v2628 = vunpack.c.l.b16 %v1257
    %v2629 = vunpack.c.h.b16 %v1257
    %v2630 = vunpack.c.l.b16 %v1258
    %v2631 = vunpack.c.h.b16 %v1258
    %v2632 = vunpack.c.l.b16 %v1259
    %v2633 = vunpack.c.h.b16 %v1259
    %v2634 = vunpack.c.l.b16 %v1260
    %v2635 = vunpack.c.h.b16 %v1260
    %v2636 = vunpack.c.l.b16 %v1261
    %v2637 = vunpack.c.h.b16 %v1261
    %v2638 = vunpack.c.l.b16 %v1262
    %v2639 = vunpack.c.h.b16 %v1262
    %v2640 = vunpack.c.l.b16 %v1263
    %v2641 = vunpack.c.h.b16 %v1263
    %v2642 = vunpack.c.l.b16 %v1264
    %v2643 = vunpack.c.h.b16 %v1264
    %v2644 = vunpack.c.l.b16 %v1265
    %v2645 = vunpack.c.h.b16 %v1265
    %v2646 = vunpack.c.l.b16 %v1266
    %v2647 = vunpack.c.h.b16 %v1266
    %v2648 = vunpack.c.l.b16 %v1267
    %v2649 = vunpack.c.h.b16 %v1267
    %v2650 = vunpack.c.l.b16 %v1268
    %v2651 = vunpack.c.h.b16 %v1268
    %v2652 = vunpack.c.l.b16 %v1269
    %v2653 = vunpack.c.h.b16 %v1269
    %v2654 = vunpack.c.l.b16 %v1270
    %v2655 = vunpack.c.h.b16 %v1270
    %v2656 = vunpack.c.l.b16 %v1271
    %v2657 = vunpack.c.h.b16 %v1271
    %v2658 = vunpack.c.l.b16 %v1272
    %v2659 = vunpack.c.h.b16 %v1272
    %v2660 = vunpack.c.l.b16 %v1273
    %v2661 = vunpack.c.h.b16 %v1273
    %v2662 = vunpack.c.l.b16 %v1274
    %v2663 = vunpack.c.h.b16 %v1274
    %v2664 = vunpack.c.l.b16 %v1275
    %v2665 = vunpack.c.h.b16 %v1275
    %v2666 = vunpack.c.l.b16 %v1276
    %v2667 = vunpack.c.h.b16 %v1276
    %v2668 = vunpack.c.l.b16 %v1277
    %v2669 = vunpack.c.h.b16 %v1277
    %v2670 = vunpack.c.l.b16 %v1278
    %v2671 = vunpack.c.h.b16 %v1278
    %v2672 = vunpack.c.l.b16 %v1279
    %v2673 = vunpack.c.h.b16 %v1279
    %v2674 = vunpack.c.l.b16 %v1280
    %v2675 = vunpack.c.h.b16 %v1280
    %v2676 = vunpack.c.l.b16 %v1281
    %v2677 = vunpack.c.h.b16 %v1281
    %v2678 = vunpack.c.l.b16 %v1282
    %v2679 = vunpack.c.h.b16 %v1282
    %v2680 = vunpack.c.l.b16 %v1283
    %v2681 = vunpack.c.h.b16 %v1283
    %v2682 = vunpack.c.l.b16 %v1284
    %v2683 = vunpack.c.h.b16 %v1284
    %v2684 = vunpack.c.l.b16 %v1285
    %v2685 = vunpack.c.h.b16 %v1285
    %v2686 = vunpack.c.l.b16 %v1286
    %v2687 = vunpack.c.h.b16 %v1286
    %v2688 = vunpack.c.l.b16 %v1287
    %v2689 = vunpack.c.h.b16 %v1287
    %v2690 = vunpack.c.l.b16 %v1288
    %v2691 = vunpack.c.h.b16 %v1288
    %v2692 = vunpack.c.l.b16 %v1289
    %v2693 = vunpack.c.h.b16 %v1289
    %v2694 = vunpack.c.l.b16 %v1290
    %v2695 = vunpack.c.h.b16 %v1290
    %v2696 = vunpack.c.l.b16 %v1291
    %v2697 = vunpack.c.h.b16 %v1291
    %v2698 = vunpack.c.l.b16 %v1292
    %v2699 = vunpack.c.h.b16 %v1292
    %v2700 = vunpack.c.l.b16 %v1293
    %v2701 = vunpack.c.h.b16 %v1293
    %v2702 = vunpack.c.l.b16 %v1294
    %v2703 = vunpack.c.h.b16 %v1294
    %v2704 = vunpack.c.l.b16 %v1295
    %v2705 = vunpack.c.h.b16 %v1295
    %v2706 = vunpack.c.l.b16 %v1296
    %v2707 = vunpack.c.h.b16 %v1296
    %v2708 = vunpack.c.l.b16 %v1297
    %v2709 = vunpack.c.h.b16 %v1297
    %v2710 = vunpack.c.l.b16 %v1298
    %v2711 = vunpack.c.h.b16 %v1298
    %v2712 = vunpack.c.l.b16 %v1299
    %v2713 = vunpack.c.h.b16 %v1299
    %v2714 = vunpack.c.l.b16 %v1300
    %v2715 = vunpack.c.h.b16 %v1300
    %v2716 = vunpack.c.l.b16 %v1301
    %v2717 = vunpack.c.h.b16 %v1301
    %v2718 = vunpack.c.l.b16 %v1302
    %v2719 = vunpack.c.h.b16 %v1302
    %v2720 = vunpack.c.l.b16 %v1303
    %v2721 = vunpack.c.h.b16 %v1303
    %v2722 = vunpack.c.l.b16 %v1304
    %v2723 = vunpack.c.h.b16 %v1304
    %v2724 = vunpack.c.l.b16 %v1305
    %v2725 = vunpack.c.h.b16 %v1305
    %v2726 = vunpack.c.l.b16 %v1306
    %v2727 = vunpack.c.h.b16 %v1306
    %v2728 = vunpack.c.l.b16 %v1307
    %v2729 = vunpack.c.h.b16 %v1307
    %v2730 = vunpack.c.l.b16 %v1308
    %v2731 = vunpack.c.h.b16 %v1308
    %v2732 = vunpack.c.l.b16 %v1309
    %v2733 = vunpack.c.h.b16 %v1309
    %v2734 = vunpack.c.l.b16 %v1310
    %v2735 = vunpack.c.h.b16 %v1310
    %v2736 = vunpack.c.l.b16 %v1311
    %v2737 = vunpack.c.h.b16 %v1311
    %v2738 = vunpack.c.l.b16 %v1312
    %v2739 = vunpack.c.h.b16 %v1312
    %v2740 = vunpack.c.l.b16 %v1313
    %v2741 = vunpack.c.h.b16 %v1313
    %v2742 = vunpack.c.l.b16 %v1314
    %v2743 = vunpack.c.h.b16 %v1314
    %v2744 = vunpack.c.l.b16 %v1315
    %v2745 = vunpack.c.h.b16 %v1315
    %v2746 = vunpack.c.l.b16 %v1316
    %v2747 = vunpack.c.h.b16 %v1316
    %v2748 = vunpack.c.l.b16 %v1317
    %v2749 = vunpack.c.h.b16 %v1317
    %v2750 = vunpack.c.l.b16 %v1318
    %v2751 = vunpack.c.h.b16 %v1318
    %v2752 = vunpack.c.l.b16 %v1319
    %v2753 = vunpack.c.h.b16 %v1319
    %v2754 = vunpack.c.l.b16 %v1320
    %v2755 = vunpack.c.h.b16 %v1320
    %v2756 = vunpack.c.l.b16 %v1321
    %v2757 = vunpack.c.h.b16 %v1321
    %v2758 = vunpack.c.l.b16 %v1322
    %v2759 = vunpack.c.h.b16 %v1322
    %v2760 = vunpack.c.l.b16 %v1323
    %v2761 = vunpack.c.h.b16 %v1323
    %v2762 = vunpack.c.l.b16 %v1324
    %v2763 = vunpack.c.h.b16 %v1324
    %v2764 = vunpack.c.l.b16 %v1325
    %v2765 = vunpack.c.h.b16 %v1325
    %v2766 = vunpack.c.l.b16 %v1326
    %v2767 = vunpack.c.h.b16 %v1326
    %v2768 = vunpack.c.l.b16 %v1327
    %v2769 = vunpack.c.h.b16 %v1327
    %v2770 = vunpack.c.l.b16 %v1328
    %v2771 = vunpack.c.h.b16 %v1328
    %v2772 = vunpack.c.l.b16 %v1329
    %v2773 = vunpack.c.h.b16 %v1329
    %v2774 = vunpack.c.l.b16 %v1330
    %v2775 = vunpack.c.h.b16 %v1330
    %v2776 = vunpack.c.l.b16 %v1331
    %v2777 = vunpack.c.h.b16 %v1331
    %v2778 = vunpack.c.l.b16 %v1332
    %v2779 = vunpack.c.h.b16 %v1332
    %v2780 = vunpack.c.l.b16 %v1333
    %v2781 = vunpack.c.h.b16 %v1333
    %v2782 = vunpack.c.l.b16 %v1334
    %v2783 = vunpack.c.h.b16 %v1334
    %v2784 = vunpack.c.l.b16 %v1335
    %v2785 = vunpack.c.h.b16 %v1335
    %v2786 = vunpack.c.l.b16 %v1336
    %v2787 = vunpack.c.h.b16 %v1336
    %v2788 = vunpack.c.l.b16 %v1337
    %v2789 = vunpack.c.h.b16 %v1337
    %v2790 = vunpack.c.l.b16 %v1338
    %v2791 = vunpack.c.h.b16 %v1338
    %v2792 = vunpack.c.l.b16 %v1339
    %v2793 = vunpack.c.h.b16 %v1339
    %v2794 = vunpack.c.l.b16 %v1340
    %v2795 = vunpack.c.h.b16 %v1340
    %v2796 = vunpack.c.l.b16 %v1341
    %v2797 = vunpack.c.h.b16 %v1341
    %v2798 = vunpack.c.l.b16 %v1342
    %v2799 = vunpack.c.h.b16 %v1342
    %v2800 = vunpack.c.l.b16 %v1343
    %v2801 = vunpack.c.h.b16 %v1343
    %v2802 = vunpack.c.l.b16 %v1344
    %v2803 = vunpack.c.h.b16 %v1344
    %v2804 = vunpack.c.l.b16 %v1345
    %v2805 = vunpack.c.h.b16 %v1345
    %v2806 = vunpack.c.l.b16 %v1346
    %v2807 = vunpack.c.h.b16 %v1346
    %v2808 = vunpack.c.l.b16 %v1347
    %v2809 = vunpack.c.h.b16 %v1347
    %v2810 = vunpack.c.l.b16 %v1348
    %v2811 = vunpack.c.h.b16 %v1348
    %v2812 = vunpack.c.l.b16 %v1349
    %v2813 = vunpack.c.h.b16 %v1349
    %v2814 = vunpack.c.l.b16 %v1350
    %v2815 = vunpack.c.h.b16 %v1350
    %v2816 = vunpack.c.l.b16 %v1351
    %v2817 = vunpack.c.h.b16 %v1351
    %v2818 = vunpack.c.l.b16 %v1352
    %v2819 = vunpack.c.h.b16 %v1352
    %v2820 = vunpack.c.l.b16 %v1353
    %v2821 = vunpack.c.h.b16 %v1353
    %v2822 = vunpack.c.l.b16 %v1354
    %v2823 = vunpack.c.h.b16 %v1354
    %v2824 = vunpack.c.l.b16 %v1355
    %v2825 = vunpack.c.h.b16 %v1355
    %v2826 = vunpack.c.l.b16 %v1356
    %v2827 = vunpack.c.h.b16 %v1356
    %v2828 = vunpack.c.l.b16 %v1357
    %v2829 = vunpack.c.h.b16 %v1357
    %v2830 = vunpack.c.l.b16 %v1358
    %v2831 = vunpack.c.h.b16 %v1358
    %v2832 = vunpack.c.l.b16 %v1359
    %v2833 = vunpack.c.h.b16 %v1359
    %v2834 = vunpack.c.l.b16 %v1360
    %v2835 = vunpack.c.h.b16 %v1360
    %v2836 = vunpack.c.l.b16 %v1361
    %v2837 = vunpack.c.h.b16 %v1361
    %v2838 = vunpack.c.l.b16 %v1362
    %v2839 = vunpack.c.h.b16 %v1362
    %v2840 = vunpack.c.l.b16 %v1363
    %v2841 = vunpack.c.h.b16 %v1363
    %v2842 = vunpack.c.l.b16 %v1364
    %v2843 = vunpack.c.h.b16 %v1364
    %v2844 = vunpack.c.l.b16 %v1365
    %v2845 = vunpack.c.h.b16 %v1365
    %v2846 = vunpack.c.l.b16 %v1366
    %v2847 = vunpack.c.h.b16 %v1366
    %v2848 = vunpack.c.l.b16 %v1367
    %v2849 = vunpack.c.h.b16 %v1367
    %v2850 = vunpack.c.l.b16 %v1368
    %v2851 = vunpack.c.h.b16 %v1368
    %v2852 = vunpack.c.l.b16 %v1369
    %v2853 = vunpack.c.h.b16 %v1369
    %v2854 = vunpack.c.l.b16 %v1370
    %v2855 = vunpack.c.h.b16 %v1370
    %v2856 = vunpack.c.l.b16 %v1371
    %v2857 = vunpack.c.h.b16 %v1371
    %v2858 = vunpack.c.l.b16 %v1372
    %v2859 = vunpack.c.h.b16 %v1372
    %v2860 = vunpack.c.l.b16 %v1373
    %v2861 = vunpack.c.h.b16 %v1373
    %v2862 = vunpack.c.l.b16 %v1374
    %v2863 = vunpack.c.h.b16 %v1374
    %v2864 = vunpack.c.l.b16 %v1375
    %v2865 = vunpack.c.h.b16 %v1375
    %v2866 = vunpack.c.l.b16 %v1376
    %v2867 = vunpack.c.h.b16 %v1376
    %v2868 = vunpack.c.l.b16 %v1377
    %v2869 = vunpack.c.h.b16 %v1377
    %v2870 = vunpack.c.l.b16 %v1378
    %v2871 = vunpack.c.h.b16 %v1378
    %v2872 = vunpack.c.l.b16 %v1379
    %v2873 = vunpack.c.h.b16 %v1379
    %v2874 = vunpack.c.l.b16 %v1380
    %v2875 = vunpack.c.h.b16 %v1380
    %v2876 = vunpack.c.l.b16 %v1381
    %v2877 = vunpack.c.h.b16 %v1381
    %v2878 = vunpack.c.l.b16 %v1382
    %v2879 = vunpack.c.h.b16 %v1382
    %v2880 = vunpack.c.l.b16 %v1383
    %v2881 = vunpack.c.h.b16 %v1383
    %v2882 = vunpack.c.l.b16 %v1384
    %v2883 = vunpack.c.h.b16 %v1384
    %v2884 = vunpack.c.l.b16 %v1385
    %v2885 = vunpack.c.h.b16 %v1385
    %v2886 = vunpack.c.l.b16 %v1386
    %v2887 = vunpack.c.h.b16 %v1386
    %v2888 = vunpack.c.l.b16 %v1387
    %v2889 = vunpack.c.h.b16 %v1387
    %v2890 = vunpack.c.l.b16 %v1388
    %v2891 = vunpack.c.h.b16 %v1388
    %v2892 = vunpack.c.l.b16 %v1389
    %v2893 = vunpack.c.h.b16 %v1389
    %v2894 = vunpack.c.l.b16 %v1390
    %v2895 = vunpack.c.h.b16 %v1390
    %v2896 = vunpack.c.l.b16 %v1391
    %v2897 = vunpack.c.h.b16 %v1391
    %v2898 = vunpack.c.l.b16 %v1392
    %v2899 = vunpack.c.h.b16 %v1392
    %v2900 = vunpack.c.l.b16 %v1393
    %v2901 = vunpack.c.h.b16 %v1393
    %v2902 = vunpack.c.l.b16 %v1394
    %v2903 = vunpack.c.h.b16 %v1394
    %v2904 = vunpack.c.l.b16 %v1395
    %v2905 = vunpack.c.h.b16 %v1395
    %v2906 = vunpack.c.l.b16 %v1396
    %v2907 = vunpack.c.h.b16 %v1396
    %v2908 = vunpack.c.l.b16 %v1397
    %v2909 = vunpack.c.h.b16 %v1397
    %v2910 = vunpack.c.l.b16 %v1398
    %v2911 = vunpack.c.h.b16 %v1398
    %v2912 = vunpack.c.l.b16 %v1399
    %v2913 = vunpack.c.h.b16 %v1399
    %v2914 = vunpack.c.l.b16 %v1400
    %v2915 = vunpack.c.h.b16 %v1400
    %v2916 = vunpack.c.l.b16 %v1401
    %v2917 = vunpack.c.h.b16 %v1401
    %v2918 = vunpack.c.l.b16 %v1402
    %v2919 = vunpack.c.h.b16 %v1402
    %v2920 = vunpack.c.l.b16 %v1403
    %v2921 = vunpack.c.h.b16 %v1403
    %v2922 = vunpack.c.l.b16 %v1404
    %v2923 = vunpack.c.h.b16 %v1404
    %v2924 = vunpack.c.l.b16 %v1405
    %v2925 = vunpack.c.h.b16 %v1405
    %v2926 = vunpack.c.l.b16 %v1406
    %v2927 = vunpack.c.h.b16 %v1406
    %v2928 = vunpack.c.l.b16 %v1407
    %v2929 = vunpack.c.h.b16 %v1407
    %v2930 = vunpack.c.l.b16 %v1408
    %v2931 = vunpack.c.h.b16 %v1408
    %v2932 = vunpack.c.l.b16 %v1409
    %v2933 = vunpack.c.h.b16 %v1409
    %v2934 = vunpack.c.l.b16 %v1410
    %v2935 = vunpack.c.h.b16 %v1410
    %v2936 = vunpack.c.l.b16 %v1411
    %v2937 = vunpack.c.h.b16 %v1411
    %v2938 = vunpack.c.l.b16 %v1412
    %v2939 = vunpack.c.h.b16 %v1412
    %v2940 = vunpack.c.l.b16 %v1413
    %v2941 = vunpack.c.h.b16 %v1413
    %v2942 = vunpack.c.l.b16 %v1414
    %v2943 = vunpack.c.h.b16 %v1414
    %v2944 = vunpack.c.l.b16 %v1415
    %v2945 = vunpack.c.h.b16 %v1415
    %v2946 = vunpack.c.l.b16 %v1416
    %v2947 = vunpack.c.h.b16 %v1416
    %v2948 = vunpack.c.l.b16 %v1417
    %v2949 = vunpack.c.h.b16 %v1417
    %v2950 = vunpack.c.l.b16 %v1418
    %v2951 = vunpack.c.h.b16 %v1418
    %v2952 = vunpack.c.l.b16 %v1419
    %v2953 = vunpack.c.h.b16 %v1419
    %v2954 = vunpack.c.l.b16 %v1420
    %v2955 = vunpack.c.h.b16 %v1420
    %v2956 = vunpack.c.l.b16 %v1421
    %v2957 = vunpack.c.h.b16 %v1421
    %v2958 = vunpack.c.l.b16 %v1422
    %v2959 = vunpack.c.h.b16 %v1422
    %v2960 = vunpack.c.l.b16 %v1423
    %v2961 = vunpack.c.h.b16 %v1423
    %v2962 = vunpack.c.l.b16 %v1424
    %v2963 = vunpack.c.h.b16 %v1424
    %v2964 = vunpack.c.l.b16 %v1425
    %v2965 = vunpack.c.h.b16 %v1425
    %v2966 = vunpack.c.l.b16 %v1426
    %v2967 = vunpack.c.h.b16 %v1426
    %v2968 = vunpack.c.l.b16 %v1427
    %v2969 = vunpack.c.h.b16 %v1427
    %v2970 = vunpack.c.l.b16 %v1428
    %v2971 = vunpack.c.h.b16 %v1428
    %v2972 = vunpack.c.l.b16 %v1429
    %v2973 = vunpack.c.h.b16 %v1429
    %v2974 = vunpack.c.l.b16 %v1430
    %v2975 = vunpack.c.h.b16 %v1430
    %v2976 = vunpack.c.l.b16 %v1431
    %v2977 = vunpack.c.h.b16 %v1431
    %v2978 = vunpack.c.l.b16 %v1432
    %v2979 = vunpack.c.h.b16 %v1432
    %v2980 = vunpack.c.l.b16 %v1433
    %v2981 = vunpack.c.h.b16 %v1433
    %v2982 = vunpack.c.l.b16 %v1434
    %v2983 = vunpack.c.h.b16 %v1434
    %v2984 = vunpack.c.l.b16 %v1435
    %v2985 = vunpack.c.h.b16 %v1435
    %v2986 = vunpack.c.l.b16 %v1436
    %v2987 = vunpack.c.h.b16 %v1436
    %v2988 = vunpack.c.l.b16 %v1437
    %v2989 = vunpack.c.h.b16 %v1437
    %v2990 = vunpack.c.l.b16 %v1438
    %v2991 = vunpack.c.h.b16 %v1438
    %v2992 = vunpack.c.l.b16 %v1439
    %v2993 = vunpack.c.h.b16 %v1439
    %v2994 = vunpack.c.l.b16 %v1440
    %v2995 = vunpack.c.h.b16 %v1440
    %v2996 = vunpack.c.l.b16 %v1441
    %v2997 = vunpack.c.h.b16 %v1441
    %v2998 = vunpack.c.l.b16 %v1442
    %v2999 = vunpack.c.h.b16 %v1442
    %v3000 = vunpack.c.l.b16 %v1443
    %v3001 = vunpack.c.h.b16 %v1443
    %v3002 = vunpack.c.l.b16 %v1444
    %v3003 = vunpack.c.h.b16 %v1444
    %v3004 = vunpack.c.l.b16 %v1445
    %v3005 = vunpack.c.h.b16 %v1445
    %v3006 = vunpack.c.l.b16 %v1446
    %v3007 = vunpack.c.h.b16 %v1446
    %v3008 = vunpack.c.l.b16 %v1447
    %v3009 = vunpack.c.h.b16 %v1447
    %v3010 = vunpack.c.l.b16 %v1448
    %v3011 = vunpack.c.h.b16 %v1448
    %v3012 = vunpack.c.l.b16 %v1449
    %v3013 = vunpack.c.h.b16 %v1449
    %v3014 = vunpack.c.l.b16 %v1450
    %v3015 = vunpack.c.h.b16 %v1450
    %v3016 = vunpack.c.l.b16 %v1451
    %v3017 = vunpack.c.h.b16 %v1451
    %v3018 = vunpack.c.l.b16 %v1452
    %v3019 = vunpack.c.h.b16 %v1452
    %v3020 = vunpack.c.l.b16 %v1453
    %v3021 = vunpack.c.h.b16 %v1453
    %v3022 = vunpack.c.l.b16 %v1454
    %v3023 = vunpack.c.h.b16 %v1454
    %v3024 = vunpack.c.l.b16 %v1455
    %v3025 = vunpack.c.h.b16 %v1455
    %v3026 = vunpack.c.l.b16 %v1456
    %v3027 = vunpack.c.h.b16 %v1456
    %v3028 = vunpack.c.l.b16 %v1457
    %v3029 = vunpack.c.h.b16 %v1457
    %v3030 = vunpack.c.l.b16 %v1458
    %v3031 = vunpack.c.h.b16 %v1458
    %v3032 = vunpack.c.l.b16 %v1459
    %v3033 = vunpack.c.h.b16 %v1459
    %v3034 = vunpack.c.l.b16 %v1460
    %v3035 = vunpack.c.h.b16 %v1460
    %v3036 = vunpack.c.l.b16 %v1461
    %v3037 = vunpack.c.h.b16 %v1461
    %v3038 = vunpack.c.l.b16 %v1462
    %v3039 = vunpack.c.h.b16 %v1462
    %v3040 = vunpack.c.l.b16 %v1463
    %v3041 = vunpack.c.h.b16 %v1463
    %v3042 = vpack.c.b16 %v2026, %v2018
    %v3043 = vpack.c.b16 %v2027, %v2019
    %v3044 = vpack.c.b16 %v2028, %v2020
    %v3045 = vpack.c.b16 %v2029, %v2021
    %v3046 = vpack.c.b16 %v2030, %v2022
    %v3047 = vpack.c.b16 %v2031, %v2023
    %v3048 = vpack.c.b16 %v2032, %v2024
    %v3049 = vpack.c.b16 %v2033, %v2025
    %v3050 = vpack.c.b16 %v2042, %v2034
    %v3051 = vpack.c.b16 %v2043, %v2035
    %v3052 = vpack.c.b16 %v2044, %v2036
    %v3053 = vpack.c.b16 %v2045, %v2037
    %v3054 = vpack.c.b16 %v2046, %v2038
    %v3055 = vpack.c.b16 %v2047, %v2039
    %v3056 = vpack.c.b16 %v2048, %v2040
    %v3057 = vpack.c.b16 %v2049, %v2041
    %v3058 = vpack.c.b16 %v2058, %v2050
    %v3059 = vpack.c.b16 %v2059, %v2051
    %v3060 = vpack.c.b16 %v2060, %v2052
    %v3061 = vpack.c.b16 %v2061, %v2053
    %v3062 = vpack.c.b16 %v2062, %v2054
    %v3063 = vpack.c.b16 %v2063, %v2055
    %v3064 = vpack.c.b16 %v2064, %v2056
    %v3065 = vpack.c.b16 %v2065, %v2057
    %v3066 = vpack.c.b16 %v2074, %v2066
    %v3067 = vpack.c.b16 %v2075, %v2067
    %v3068 = vpack.c.b16 %v2076, %v2068
    %v3069 = vpack.c.b16 %v2077, %v2069
    %v3070 = vpack.c.b16 %v2078, %v2070
    %v3071 = vpack.c.b16 %v2079, %v2071
    %v3072 = vpack.c.b16 %v2080, %v2072
    %v3073 = vpack.c.b16 %v2081, %v2073
    %v3074 = vpack.c.b16 %v2090, %v2082
    %v3075 = vpack.c.b16 %v2091, %v2083
    %v3076 = vpack.c.b16 %v2092, %v2084
    %v3077 = vpack.c.b16 %v2093, %v2085
    %v3078 = vpack.c.b16 %v2094, %v2086
    %v3079 = vpack.c.b16 %v2095, %v2087
    %v3080 = vpack.c.b16 %v2096, %v2088
    %v3081 = vpack.c.b16 %v2097, %v2089
    %v3082 = vpack.c.b16 %v2106, %v2098
    %v3083 = vpack.c.b16 %v2107, %v2099
    %v3084 = vpack.c.b16 %v2108, %v2100
    %v3085 = vpack.c.b16 %v2109, %v2101
    %v3086 = vpack.c.b16 %v2110, %v2102
    %v3087 = vpack.c.b16 %v2111, %v2103
    %v3088 = vpack.c.b16 %v2112, %v2104
    %v3089 = vpack.c.b16 %v2113, %v2105
    %v3090 = vpack.c.b16 %v2122, %v2114
    %v3091 = vpack.c.b16 %v2123, %v2115
    %v3092 = vpack.c.b16 %v2124, %v2116
    %v3093 = vpack.c.b16 %v2125, %v2117
    %v3094 = vpack.c.b16 %v2126, %v2118
    %v3095 = vpack.c.b16 %v2127, %v2119
    %v3096 = vpack.c.b16 %v2128, %v2120
    %v3097 = vpack.c.b16 %v2129, %v2121
    %v3098 = vpack.c.b16 %v2138, %v2130
    %v3099 = vpack.c.b16 %v2139, %v2131
    %v3100 = vpack.c.b16 %v2140, %v2132
    %v3101 = vpack.c.b16 %v2141, %v2133
    %v3102 = vpack.c.b16 %v2142, %v2134
    %v3103 = vpack.c.b16 %v2143, %v2135
    %v3104 = vpack.c.b16 %v2144, %v2136
    %v3105 = vpack.c.b16 %v2145, %v2137
    %v3106 = vpack.c.b16 %v2154, %v2146
    %v3107 = vpack.c.b16 %v2155, %v2147
    %v3108 = vpack.c.b16 %v2156, %v2148
    %v3109 = vpack.c.b16 %v2157, %v2149
    %v3110 = vpack.c.b16 %v2158, %v2150
    %v3111 = vpack.c.b16 %v2159, %v2151
    %v3112 = vpack.c.b16 %v2160, %v2152
    %v3113 = vpack.c.b16 %v2161, %v2153
    %v3114 = vpack.c.b16 %v2170, %v2162
    %v3115 = vpack.c.b16 %v2171, %v2163
    %v3116 = vpack.c.b16 %v2172, %v2164
    %v3117 = vpack.c.b16 %v2173, %v2165
    %v3118 = vpack.c.b16 %v2174, %v2166
    %v3119 = vpack.c.b16 %v2175, %v2167
    %v3120 = vpack.c.b16 %v2176, %v2168
    %v3121 = vpack.c.b16 %v2177, %v2169
    %v3122 = vpack.c.b16 %v2186, %v2178
    %v3123 = vpack.c.b16 %v2187, %v2179
    %v3124 = vpack.c.b16 %v2188, %v2180
    %v3125 = vpack.c.b16 %v2189, %v2181
    %v3126 = vpack.c.b16 %v2190, %v2182
    %v3127 = vpack.c.b16 %v2191, %v2183
    %v3128 = vpack.c.b16 %v2192, %v2184
    %v3129 = vpack.c.b16 %v2193, %v2185
    %v3130 = vpack.c.b16 %v2202, %v2194
    %v3131 = vpack.c.b16 %v2203, %v2195
    %v3132 = vpack.c.b16 %v2204, %v2196
    %v3133 = vpack.c.b16 %v2205, %v2197
    %v3134 = vpack.c.b16 %v2206, %v2198
    %v3135 = vpack.c.b16 %v2207, %v2199
    %v3136 = vpack.c.b16 %v2208, %v2200
    %v3137 = vpack.c.b16 %v2209, %v2201
    %v3138 = vpack.c.b16 %v2218, %v2210
    %v3139 = vpack.c.b16 %v2219, %v2211
    %v3140 = vpack.c.b16 %v2220, %v2212
    %v3141 = vpack.c.b16 %v2221, %v2213
    %v3142 = vpack.c.b16 %v2222, %v2214
    %v3143 = vpack.c.b16 %v2223, %v2215
    %v3144 = vpack.c.b16 %v2224, %v2216
    %v3145 = vpack.c.b16 %v2225, %v2217
    %v3146 = vpack.c.b16 %v2234, %v2226
    %v3147 = vpack.c.b16 %v2235, %v2227
    %v3148 = vpack.c.b16 %v2236, %v2228
    %v3149 = vpack.c.b16 %v2237, %v2229
    %v3150 = vpack.c.b16 %v2238, %v2230
    %v3151 = vpack.c.b16 %v2239, %v2231
    %v3152 = vpack.c.b16 %v2240, %v2232
    %v3153 = vpack.c.b16 %v2241, %v2233
    %v3154 = vpack.c.b16 %v2250, %v2242
    %v3155 = vpack.c.b16 %v2251, %v2243
    %v3156 = vpack.c.b16 %v2252, %v2244
    %v3157 = vpack.c.b16 %v2253, %v2245
    %v3158 = vpack.c.b16 %v2254, %v2246
    %v3159 = vpack.c.b16 %v2255, %v2247
    %v3160 = vpack.c.b16 %v2256, %v2248
    %v3161 = vpack.c.b16 %v2257, %v2249
    %v3162 = vpack.c.b16 %v2266, %v2258
    %v3163 = vpack.c.b16 %v2267, %v2259
    %v3164 = vpack.c.b16 %v2268, %v2260
    %v3165 = vpack.c.b16 %v2269, %v2261
    %v3166 = vpack.c.b16 %v2270, %v2262
    %v3167 = vpack.c.b16 %v2271, %v2263
    %v3168 = vpack.c.b16 %v2272, %v2264
    %v3169 = vpack.c.b16 %v2273, %v2265
    %v3170 = vpack.c.b16 %v2282, %v2274
    %v3171 = vpack.c.b16 %v2283, %v2275
    %v3172 = vpack.c.b16 %v2284, %v2276
    %v3173 = vpack.c.b16 %v2285, %v2277
    %v3174 = vpack.c.b16 %v2286, %v2278
    %v3175 = vpack.c.b16 %v2287, %v2279
    %v3176 = vpack.c.b16 %v2288, %v2280
    %v3177 = vpack.c.b16 %v2289, %v2281
    %v3178 = vpack.c.b16 %v2298, %v2290
    %v3179 = vpack.c.b16 %v2299, %v2291
    %v3180 = vpack.c.b16 %v2300, %v2292
    %v3181 = vpack.c.b16 %v2301, %v2293
    %v3182 = vpack.c.b16 %v2302, %v2294
    %v3183 = vpack.c.b16 %v2303, %v2295
    %v3184 = vpack.c.b16 %v2304, %v2296
    %v3185 = vpack.c.b16 %v2305, %v2297
    %v3186 = vpack.c.b16 %v2314, %v2306
    %v3187 = vpack.c.b16 %v2315, %v2307
    %v3188 = vpack.c.b16 %v2316, %v2308
    %v3189 = vpack.c.b16 %v2317, %v2309
    %v3190 = vpack.c.b16 %v2318, %v2310
    %v3191 = vpack.c.b16 %v2319, %v2311
    %v3192 = vpack.c.b16 %v2320, %v2312
    %v3193 = vpack.c.b16 %v2321, %v2313
    %v3194 = vpack.c.b16 %v2330, %v2322
    %v3195 = vpack.c.b16 %v2331, %v2323
    %v3196 = vpack.c.b16 %v2332, %v2324
    %v3197 = vpack.c.b16 %v2333, %v2325
    %v3198 = vpack.c.b16 %v2334, %v2326
    %v3199 = vpack.c.b16 %v2335, %v2327
    %v3200 = vpack.c.b16 %v2336, %v2328
    %v3201 = vpack.c.b16 %v2337, %v2329
    %v3202 = vpack.c.b16 %v2346, %v2338
    %v3203 = vpack.c.b16 %v2347, %v2339
    %v3204 = vpack.c.b16 %v2348, %v2340
    %v3205 = vpack.c.b16 %v2349, %v2341
    %v3206 = vpack.c.b16 %v2350, %v2342
    %v3207 = vpack.c.b16 %v2351, %v2343
    %v3208 = vpack.c.b16 %v2352, %v2344
    %v3209 = vpack.c.b16 %v2353, %v2345
    %v3210 = vpack.c.b16 %v2362, %v2354
    %v3211 = vpack.c.b16 %v2363, %v2355
    %v3212 = vpack.c.b16 %v2364, %v2356
    %v3213 = vpack.c.b16 %v2365, %v2357
    %v3214 = vpack.c.b16 %v2366, %v2358
    %v3215 = vpack.c.b16 %v2367, %v2359
    %v3216 = vpack.c.b16 %v2368, %v2360
    %v3217 = vpack.c.b16 %v2369, %v2361
    %v3218 = vpack.c.b16 %v2378, %v2370
    %v3219 = vpack.c.b16 %v2379, %v2371
    %v3220 = vpack.c.b16 %v2380, %v2372
    %v3221 = vpack.c.b16 %v2381, %v2373
    %v3222 = vpack.c.b16 %v2382, %v2374
    %v3223 = vpack.c.b16 %v2383, %v2375
    %v3224 = vpack.c.b16 %v2384, %v2376
    %v3225 = vpack.c.b16 %v2385, %v2377
    %v3226 = vpack.c.b16 %v2394, %v2386
    %v3227 = vpack.c.b16 %v2395, %v2387
    %v3228 = vpack.c.b16 %v2396, %v2388
    %v3229 = vpack.c.b16 %v2397, %v2389
    %v3230 = vpack.c.b16 %v2398, %v2390
    %v3231 = vpack.c.b16 %v2399, %v2391
    %v3232 = vpack.c.b16 %v2400, %v2392
    %v3233 = vpack.c.b16 %v2401, %v2393
    %v3234 = vpack.c.b16 %v2410, %v2402
    %v3235 = vpack.c.b16 %v2411, %v2403
    %v3236 = vpack.c.b16 %v2412, %v2404
    %v3237 = vpack.c.b16 %v2413, %v2405
    %v3238 = vpack.c.b16 %v2414, %v2406
    %v3239 = vpack.c.b16 %v2415, %v2407
    %v3240 = vpack.c.b16 %v2416, %v2408
    %v3241 = vpack.c.b16 %v2417, %v2409
    %v3242 = vpack.c.b16 %v2426, %v2418
    %v3243 = vpack.c.b16 %v2427, %v2419
    %v3244 = vpack.c.b16 %v2428, %v2420
    %v3245 = vpack.c.b16 %v2429, %v2421
    %v3246 = vpack.c.b16 %v2430, %v2422
    %v3247 = vpack.c.b16 %v2431, %v2423
    %v3248 = vpack.c.b16 %v2432, %v2424
    %v3249 = vpack.c.b16 %v2433, %v2425
    %v3250 = vpack.c.b16 %v2442, %v2434
    %v3251 = vpack.c.b16 %v2443, %v2435
    %v3252 = vpack.c.b16 %v2444, %v2436
    %v3253 = vpack.c.b16 %v2445, %v2437
    %v3254 = vpack.c.b16 %v2446, %v2438
    %v3255 = vpack.c.b16 %v2447, %v2439
    %v3256 = vpack.c.b16 %v2448, %v2440
    %v3257 = vpack.c.b16 %v2449, %v2441
    %v3258 = vpack.c.b16 %v2458, %v2450
    %v3259 = vpack.c.b16 %v2459, %v2451
    %v3260 = vpack.c.b16 %v2460, %v2452
    %v3261 = vpack.c.b16 %v2461, %v2453
    %v3262 = vpack.c.b16 %v2462, %v2454
    %v3263 = vpack.c.b16 %v2463, %v2455
    %v3264 = vpack.c.b16 %v2464, %v2456
    %v3265 = vpack.c.b16 %v2465, %v2457
    %v3266 = vpack.c.b16 %v2474, %v2466
    %v3267 = vpack.c.b16 %v2475, %v2467
    %v3268 = vpack.c.b16 %v2476, %v2468
    %v3269 = vpack.c.b16 %v2477, %v2469
    %v3270 = vpack.c.b16 %v2478, %v2470
    %v3271 = vpack.c.b16 %v2479, %v2471
    %v3272 = vpack.c.b16 %v2480, %v2472
    %v3273 = vpack.c.b16 %v2481, %v2473
    %v3274 = vpack.c.b16 %v2490, %v2482
    %v3275 = vpack.c.b16 %v2491, %v2483
    %v3276 = vpack.c.b16 %v2492, %v2484
    %v3277 = vpack.c.b16 %v2493, %v2485
    %v3278 = vpack.c.b16 %v2494, %v2486
    %v3279 = vpack.c.b16 %v2495, %v2487
    %v3280 = vpack.c.b16 %v2496, %v2488
    %v3281 = vpack.c.b16 %v2497, %v2489
    %v3282 = vpack.c.b16 %v2506, %v2498
    %v3283 = vpack.c.b16 %v2507, %v2499
    %v3284 = vpack.c.b16 %v2508, %v2500
    %v3285 = vpack.c.b16 %v2509, %v2501
    %v3286 = vpack.c.b16 %v2510, %v2502
    %v3287 = vpack.c.b16 %v2511, %v2503
    %v3288 = vpack.c.b16 %v2512, %v2504
    %v3289 = vpack.c.b16 %v2513, %v2505
    %v3290 = vpack.c.b16 %v2522, %v2514
    %v3291 = vpack.c.b16 %v2523, %v2515
    %v3292 = vpack.c.b16 %v2524, %v2516
    %v3293 = vpack.c.b16 %v2525, %v2517
    %v3294 = vpack.c.b16 %v2526, %v2518
    %v3295 = vpack.c.b16 %v2527, %v2519
    %v3296 = vpack.c.b16 %v2528, %v2520
    %v3297 = vpack.c.b16 %v2529, %v2521
    %v3298 = vpack.c.b16 %v2538, %v2530
    %v3299 = vpack.c.b16 %v2539, %v2531
    %v3300 = vpack.c.b16 %v2540, %v2532
    %v3301 = vpack.c.b16 %v2541, %v2533
    %v3302 = vpack.c.b16 %v2542, %v2534
    %v3303 = vpack.c.b16 %v2543, %v2535
    %v3304 = vpack.c.b16 %v2544, %v2536
    %v3305 = vpack.c.b16 %v2545, %v2537
    %v3306 = vpack.c.b16 %v2554, %v2546
    %v3307 = vpack.c.b16 %v2555, %v2547
    %v3308 = vpack.c.b16 %v2556, %v2548
    %v3309 = vpack.c.b16 %v2557, %v2549
    %v3310 = vpack.c.b16 %v2558, %v2550
    %v3311 = vpack.c.b16 %v2559, %v2551
    %v3312 = vpack.c.b16 %v2560, %v2552
    %v3313 = vpack.c.b16 %v2561, %v2553
    %v3314 = vpack.c.b16 %v2570, %v2562
    %v3315 = vpack.c.b16 %v2571, %v2563
    %v3316 = vpack.c.b16 %v2572, %v2564
    %v3317 = vpack.c.b16 %v2573, %v2565
    %v3318 = vpack.c.b16 %v2574, %v2566
    %v3319 = vpack.c.b16 %v2575, %v2567
    %v3320 = vpack.c.b16 %v2576, %v2568
    %v3321 = vpack.c.b16 %v2577, %v2569
    %v3322 = vpack.c.b16 %v2586, %v2578
    %v3323 = vpack.c.b16 %v2587, %v2579
    %v3324 = vpack.c.b16 %v2588, %v2580
    %v3325 = vpack.c.b16 %v2589, %v2581
    %v3326 = vpack.c.b16 %v2590, %v2582
    %v3327 = vpack.c.b16 %v2591, %v2583
    %v3328 = vpack.c.b16 %v2592, %v2584
    %v3329 = vpack.c.b16 %v2593, %v2585
    %v3330 = vpack.c.b16 %v2602, %v2594
    %v3331 = vpack.c.b16 %v2603, %v2595
    %v3332 = vpack.c.b16 %v2604, %v2596
    %v3333 = vpack.c.b16 %v2605, %v2597
    %v3334 = vpack.c.b16 %v2606, %v2598
    %v3335 = vpack.c.b16 %v2607, %v2599
    %v3336 = vpack.c.b16 %v2608, %v2600
    %v3337 = vpack.c.b16 %v2609, %v2601
    %v3338 = vpack.c.b16 %v2618, %v2610
    %v3339 = vpack.c.b16 %v2619, %v2611
    %v3340 = vpack.c.b16 %v2620, %v2612
    %v3341 = vpack.c.b16 %v2621, %v2613
    %v3342 = vpack.c.b16 %v2622, %v2614
    %v3343 = vpack.c.b16 %v2623, %v2615
    %v3344 = vpack.c.b16 %v2624, %v2616
    %v3345 = vpack.c.b16 %v2625, %v2617
    %v3346 = vpack.c.b16 %v2634, %v2626
    %v3347 = vpack.c.b16 %v2635, %v2627
    %v3348 = vpack.c.b16 %v2636, %v2628
    %v3349 = vpack.c.b16 %v2637, %v2629
    %v3350 = vpack.c.b16 %v2638, %v2630
    %v3351 = vpack.c.b16 %v2639, %v2631
    %v3352 = vpack.c.b16 %v2640, %v2632
    %v3353 = vpack.c.b16 %v2641, %v2633
    %v3354 = vpack.c.b16 %v2650, %v2642
    %v3355 = vpack.c.b16 %v2651, %v2643
    %v3356 = vpack.c.b16 %v2652, %v2644
    %v3357 = vpack.c.b16 %v2653, %v2645
    %v3358 = vpack.c.b16 %v2654, %v2646
    %v3359 = vpack.c.b16 %v2655, %v2647
    %v3360 = vpack.c.b16 %v2656, %v2648
    %v3361 = vpack.c.b16 %v2657, %v2649
    %v3362 = vpack.c.b16 %v2666, %v2658
    %v3363 = vpack.c.b16 %v2667, %v2659
    %v3364 = vpack.c.b16 %v2668, %v2660
    %v3365 = vpack.c.b16 %v2669, %v2661
    %v3366 = vpack.c.b16 %v2670, %v2662
    %v3367 = vpack.c.b16 %v2671, %v2663
    %v3368 = vpack.c.b16 %v2672, %v2664
    %v3369 = vpack.c.b16 %v2673, %v2665
    %v3370 = vpack.c.b16 %v2682, %v2674
    %v3371 = vpack.c.b16 %v2683, %v2675
    %v3372 = vpack.c.b16 %v2684, %v2676
    %v3373 = vpack.c.b16 %v2685, %v2677
    %v3374 = vpack.c.b16 %v2686, %v2678
    %v3375 = vpack.c.b16 %v2687, %v2679
    %v3376 = vpack.c.b16 %v2688, %v2680
    %v3377 = vpack.c.b16 %v2689, %v2681
    %v3378 = vpack.c.b16 %v2698, %v2690
    %v3379 = vpack.c.b16 %v2699, %v2691
    %v3380 = vpack.c.b16 %v2700, %v2692
    %v3381 = vpack.c.b16 %v2701, %v2693
    %v3382 = vpack.c.b16 %v2702, %v2694
    %v3383 = vpack.c.b16 %v2703, %v2695
    %v3384 = vpack.c.b16 %v2704, %v2696
    %v3385 = vpack.c.b16 %v2705, %v2697
    %v3386 = vpack.c.b16 %v2714, %v2706
    %v3387 = vpack.c.b16 %v2715, %v2707
    %v3388 = vpack.c.b16 %v2716, %v2708
    %v3389 = vpack.c.b16 %v2717, %v2709
    %v3390 = vpack.c.b16 %v2718, %v2710
    %v3391 = vpack.c.b16 %v2719, %v2711
    %v3392 = vpack.c.b16 %v2720, %v2712
    %v3393 = vpack.c.b16 %v2721, %v2713
    %v3394 = vpack.c.b16 %v2730, %v2722
    %v3395 = vpack.c.b16 %v2731, %v2723
    %v3396 = vpack.c.b16 %v2732, %v2724
    %v3397 = vpack.c.b16 %v2733, %v2725
    %v3398 = vpack.c.b16 %v2734, %v2726
    %v3399 = vpack.c.b16 %v2735, %v2727
    %v3400 = vpack.c.b16 %v2736, %v2728
    %v3401 = vpack.c.b16 %v2737, %v2729
    %v3402 = vpack.c.b16 %v2746, %v2738
    %v3403 = vpack.c.b16 %v2747, %v2739
    %v3404 = vpack.c.b16 %v2748, %v2740
    %v3405 = vpack.c.b16 %v2749, %v2741
    %v3406 = vpack.c.b16 %v2750, %v2742
    %v3407 = vpack.c.b16 %v2751, %v2743
    %v3408 = vpack.c.b16 %v2752, %v2744
    %v3409 = vpack.c.b16 %v2753, %v2745
    %v3410 = vpack.c.b16 %v2762, %v2754
    %v3411 = vpack.c.b16 %v2763, %v2755
    %v3412 = vpack.c.b16 %v2764, %v2756
    %v3413 = vpack.c.b16 %v2765, %v2757
    %v3414 = vpack.c.b16 %v2766, %v2758
    %v3415 = vpack.c.b16 %v2767, %v2759
    %v3416 = vpack.c.b16 %v2768, %v2760
    %v3417 = vpack.c.b16 %v2769, %v2761
    %v3418 = vpack.c.b16 %v2778, %v2770
    %v3419 = vpack.c.b16 %v2779, %v2771
    %v3420 = vpack.c.b16 %v2780, %v2772
    %v3421 = vpack.c.b16 %v2781, %v2773
    %v3422 = vpack.c.b16 %v2782, %v2774
    %v3423 = vpack.c.b16 %v2783, %v2775
    %v3424 = vpack.c.b16 %v2784, %v2776
    %v3425 = vpack.c.b16 %v2785, %v2777
    %v3426 = vpack.c.b16 %v2794, %v2786
    %v3427 = vpack.c.b16 %v2795, %v2787
    %v3428 = vpack.c.b16 %v2796, %v2788
    %v3429 = vpack.c.b16 %v2797, %v2789
    %v3430 = vpack.c.b16 %v2798, %v2790
    %v3431 = vpack.c.b16 %v2799, %v2791
    %v3432 = vpack.c.b16 %v2800, %v2792
    %v3433 = vpack.c.b16 %v2801, %v2793
    %v3434 = vpack.c.b16 %v2810, %v2802
    %v3435 = vpack.c.b16 %v2811, %v2803
    %v3436 = vpack.c.b16 %v2812, %v2804
    %v3437 = vpack.c.b16 %v2813, %v2805
    %v3438 = vpack.c.b16 %v2814, %v2806
    %v3439 = vpack.c.b16 %v2815, %v2807
    %v3440 = vpack.c.b16 %v2816, %v2808
    %v3441 = vpack.c.b16 %v2817, %v2809
    %v3442 = vpack.c.b16 %v2826, %v2818
    %v3443 = vpack.c.b16 %v2827, %v2819
    %v3444 = vpack.c.b16 %v2828, %v2820
    %v3445 = vpack.c.b16 %v2829, %v2821
    %v3446 = vpack.c.b16 %v2830, %v2822
    %v3447 = vpack.c.b16 %v2831, %v2823
    %v3448 = vpack.c.b16 %v2832, %v2824
    %v3449 = vpack.c.b16 %v2833, %v2825
    %v3450 = vpack.c.b16 %v2842, %v2834
    %v3451 = vpack.c.b16 %v2843, %v2835
    %v3452 = vpack.c.b16 %v2844, %v2836
    %v3453 = vpack.c.b16 %v2845, %v2837
    %v3454 = vpack.c.b16 %v2846, %v2838
    %v3455 = vpack.c.b16 %v2847, %v2839
    %v3456 = vpack.c.b16 %v2848, %v2840
    %v3457 = vpack.c.b16 %v2849, %v2841
    %v3458 = vpack.c.b16 %v2858, %v2850
    %v3459 = vpack.c.b16 %v2859, %v2851
    %v3460 = vpack.c.b16 %v2860, %v2852
    %v3461 = vpack.c.b16 %v2861, %v2853
    %v3462 = vpack.c.b16 %v2862, %v2854
    %v3463 = vpack.c.b16 %v2863, %v2855
    %v3464 = vpack.c.b16 %v2864, %v2856
    %v3465 = vpack.c.b16 %v2865, %v2857
    %v3466 = vpack.c.b16 %v2874, %v2866
    %v3467 = vpack.c.b16 %v2875, %v2867
    %v3468 = vpack.c.b16 %v2876, %v2868
    %v3469 = vpack.c.b16 %v2877, %v2869
    %v3470 = vpack.c.b16 %v2878, %v2870
    %v3471 = vpack.c.b16 %v2879, %v2871
    %v3472 = vpack.c.b16 %v2880, %v2872
    %v3473 = vpack.c.b16 %v2881, %v2873
    %v3474 = vpack.c.b16 %v2890, %v2882
    %v3475 = vpack.c.b16 %v2891, %v2883
    %v3476 = vpack.c.b16 %v2892, %v2884
    %v3477 = vpack.c.b16 %v2893, %v2885
    %v3478 = vpack.c.b16 %v2894, %v2886
    %v3479 = vpack.c.b16 %v2895, %v2887
    %v3480 = vpack.c.b16 %v2896, %v2888
    %v3481 = vpack.c.b16 %v2897, %v2889
    %v3482 = vpack.c.b16 %v2906, %v2898
    %v3483 = vpack.c.b16 %v2907, %v2899
    %v3484 = vpack.c.b16 %v2908, %v2900
    %v3485 = vpack.c.b16 %v2909, %v2901
    %v3486 = vpack.c.b16 %v2910, %v2902
    %v3487 = vpack.c.b16 %v2911, %v2903
    %v3488 = vpack.c.b16 %v2912, %v2904
    %v3489 = vpack.c.b16 %v2913, %v2905
    %v3490 = vpack.c.b16 %v2922, %v2914
    %v3491 = vpack.c.b16 %v2923, %v2915
    %v3492 = vpack.c.b16 %v2924, %v2916
    %v3493 = vpack.c.b16 %v2925, %v2917
    %v3494 = vpack.c.b16 %v2926, %v2918
    %v3495 = vpack.c.b16 %v2927, %v2919
    %v3496 = vpack.c.b16 %v2928, %v2920
    %v3497 = vpack.c.b16 %v2929, %v2921
    %v3498 = vpack.c.b16 %v2938, %v2930
    %v3499 = vpack.c.b16 %v2939, %v2931
    %v3500 = vpack.c.b16 %v2940, %v2932
    %v3501 = vpack.c.b16 %v2941, %v2933
    %v3502 = vpack.c.b16 %v2942, %v2934
    %v3503 = vpack.c.b16 %v2943, %v2935
    %v3504 = vpack.c.b16 %v2944, %v2936
    %v3505 = vpack.c.b16 %v2945, %v2937
    %v3506 = vpack.c.b16 %v2954, %v2946
    %v3507 = vpack.c.b16 %v2955, %v2947
    %v3508 = vpack.c.b16 %v2956, %v2948
    %v3509 = vpack.c.b16 %v2957, %v2949
    %v3510 = vpack.c.b16 %v2958, %v2950
    %v3511 = vpack.c.b16 %v2959, %v2951
    %v3512 = vpack.c.b16 %v2960, %v2952
    %v3513 = vpack.c.b16 %v2961, %v2953
    %v3514 = vpack.c.b16 %v2970, %v2962
    %v3515 = vpack.c.b16 %v2971, %v2963
    %v3516 = vpack.c.b16 %v2972, %v2964
    %v3517 = vpack.c.b16 %v2973, %v2965
    %v3518 = vpack.c.b16 %v2974, %v2966
    %v3519 = vpack.c.b16 %v2975, %v2967
    %v3520 = vpack.c.b16 %v2976, %v2968
    %v3521 = vpack.c.b16 %v2977, %v2969
    %v3522 = vpack.c.b16 %v2986, %v2978
    %v3523 = vpack.c.b16 %v2987, %v2979
    %v3524 = vpack.c.b16 %v2988, %v2980
    %v3525 = vpack.c.b16 %v2989, %v2981
    %v3526 = vpack.c.b16 %v2990, %v2982
    %v3527 = vpack.c.b16 %v2991, %v2983
    %v3528 = vpack.c.b16 %v2992, %v2984
    %v3529 = vpack.c.b16 %v2993, %v2985
    %v3530 = vpack.c.b16 %v3002, %v2994
    %v3531 = vpack.c.b16 %v3003, %v2995
    %v3532 = vpack.c.b16 %v3004, %v2996
    %v3533 = vpack.c.b16 %v3005, %v2997
    %v3534 = vpack.c.b16 %v3006, %v2998
    %v3535 = vpack.c.b16 %v3007, %v2999
    %v3536 = vpack.c.b16 %v3008, %v3000
    %v3537 = vpack.c.b16 %v3009, %v3001
    %v3538 = vpack.c.b16 %v3018, %v3010
    %v3539 = vpack.c.b16 %v3019, %v3011
    %v3540 = vpack.c.b16 %v3020, %v3012
    %v3541 = vpack.c.b16 %v3021, %v3013
    %v3542 = vpack.c.b16 %v3022, %v3014
    %v3543 = vpack.c.b16 %v3023, %v3015
    %v3544 = vpack.c.b16 %v3024, %v3016
    %v3545 = vpack.c.b16 %v3025, %v3017
    %v3546 = vpack.c.b16 %v3034, %v3026
    %v3547 = vpack.c.b16 %v3035, %v3027
    %v3548 = vpack.c.b16 %v3036, %v3028
    %v3549 = vpack.c.b16 %v3037, %v3029
    %v3550 = vpack.c.b16 %v3038, %v3030
    %v3551 = vpack.c.b16 %v3039, %v3031
    %v3552 = vpack.c.b16 %v3040, %v3032
    %v3553 = vpack.c.b16 %v3041, %v3033
    %4066 = vmatprep.subr.bf16.mxu0 %v3043
    %4067 = vmatpush1.bf16.msra.mxu0 %v3042
    %4068 = vmatprep.subr.bf16.mxu0 %v3051
    %4069 = vmatpush1.bf16.msra.mxu0 %v3050
    %4070 = vmatprep.subr.bf16.mxu0 %v3059
    %4071 = vmatpush1.bf16.msra.mxu0 %v3058
    %4072 = vmatprep.subr.bf16.mxu0 %v3067
    %4073 = vmatpush1.bf16.msra.mxu0 %v3066
    %4074 = vmatprep.subr.bf16.mxu0 %v3075
    %4075 = vmatpush1.bf16.msra.mxu0 %v3074
    %4076 = vmatprep.subr.bf16.mxu0 %v3083
    %4077 = vmatpush1.bf16.msra.mxu0 %v3082
    %4078 = vmatprep.subr.bf16.mxu0 %v3091
    %4079 = vmatpush1.bf16.msra.mxu0 %v3090
    %4080 = vmatprep.subr.bf16.mxu0 %v3099
    %4081 = vmatpush1.bf16.msra.mxu0 %v3098
    %4082 = vmatprep.subr.bf16.mxu0 %v3107
    %4083 = vmatpush1.bf16.msra.mxu0 %v3106
    %4084 = vmatprep.subr.bf16.mxu0 %v3115
    %4085 = vmatpush1.bf16.msra.mxu0 %v3114
    %4086 = vmatprep.subr.bf16.mxu0 %v3123
    %4087 = vmatpush1.bf16.msra.mxu0 %v3122
    %4088 = vmatprep.subr.bf16.mxu0 %v3131
    %4089 = vmatpush1.bf16.msra.mxu0 %v3130
    %4090 = vmatprep.subr.bf16.mxu0 %v3139
    %4091 = vmatpush1.bf16.msra.mxu0 %v3138
    %4092 = vmatprep.subr.bf16.mxu0 %v3147
    %4093 = vmatpush1.bf16.msra.mxu0 %v3146
    %4094 = vmatprep.subr.bf16.mxu0 %v3155
    %4095 = vmatpush1.bf16.msra.mxu0 %v3154
    %4096 = vmatprep.subr.bf16.mxu0 %v3163
    %4097 = vmatpush1.bf16.msra.mxu0 %v3162
    %4098 = vmatprep.mubr.bf16.mxu0 %v945
    %4099 = vmatmul.mubr.bf16.gmra.mrb[0].mxu0 %v944
    %v4100 = vpop.f32.mrb[0].mxu0
    %v4101 = vadd.f32 %v1469, %v4100
    %v4102 = vpop.f32.mrb[0].mxu0
    %v4103 = vadd.f32 %v1473, %v4102
    %v4104 = vpop.f32.mrb[0].mxu0
    %v4105 = vpop.f32.mrb[0].mxu0
    %4106 = vdwg.mxu0
    %4107 = vmatprep.subr.bf16.mxu0 %v3171
    %4108 = vmatpush1.bf16.msra.mxu0 %v3170
    %4109 = vmatprep.subr.bf16.mxu0 %v3179
    %4110 = vmatpush1.bf16.msra.mxu0 %v3178
    %4111 = vmatprep.subr.bf16.mxu0 %v3187
    %4112 = vmatpush1.bf16.msra.mxu0 %v3186
    %4113 = vmatprep.subr.bf16.mxu0 %v3195
    %4114 = vmatpush1.bf16.msra.mxu0 %v3194
    %4115 = vmatprep.subr.bf16.mxu0 %v3203
    %4116 = vmatpush1.bf16.msra.mxu0 %v3202
    %4117 = vmatprep.subr.bf16.mxu0 %v3211
    %4118 = vmatpush1.bf16.msra.mxu0 %v3210
    %4119 = vmatprep.subr.bf16.mxu0 %v3219
    %4120 = vmatpush1.bf16.msra.mxu0 %v3218
    %4121 = vmatprep.subr.bf16.mxu0 %v3227
    %4122 = vmatpush1.bf16.msra.mxu0 %v3226
    %4123 = vmatprep.subr.bf16.mxu0 %v3235
    %4124 = vmatpush1.bf16.msra.mxu0 %v3234
    %4125 = vmatprep.subr.bf16.mxu0 %v3243
    %4126 = vmatpush1.bf16.msra.mxu0 %v3242
    %4127 = vmatprep.subr.bf16.mxu0 %v3251
    %4128 = vmatpush1.bf16.msra.mxu0 %v3250
    %4129 = vmatprep.subr.bf16.mxu0 %v3259
    %4130 = vmatpush1.bf16.msra.mxu0 %v3258
    %4131 = vmatprep.subr.bf16.mxu0 %v3267
    %4132 = vmatpush1.bf16.msra.mxu0 %v3266
    %4133 = vmatprep.subr.bf16.mxu0 %v3275
    %4134 = vmatpush1.bf16.msra.mxu0 %v3274
    %4135 = vmatprep.subr.bf16.mxu0 %v3283
    %4136 = vmatpush1.bf16.msra.mxu0 %v3282
    %4137 = vmatprep.subr.bf16.mxu0 %v3291
    %4138 = vmatpush1.bf16.msra.mxu0 %v3290
    %4139 = vmatprep.mubr.bf16.mxu0 %v947
    %4140 = vmatmul.mubr.bf16.gmra.mrb[0].mxu0 %v946
    %v4141 = vpop.f32.mrb[0].mxu0
    %v4142 = vadd.f32 %v4101, %v4141
    %v4143 = vpop.f32.mrb[0].mxu0
    %v4144 = vadd.f32 %v4103, %v4143
    %v4145 = vpop.f32.mrb[0].mxu0
    %v4146 = vpop.f32.mrb[0].mxu0
    %4147 = vdwg.mxu0
    %4148 = vmatprep.subr.bf16.mxu0 %v3299
    %4149 = vmatpush1.bf16.msra.mxu0 %v3298
    %4150 = vmatprep.subr.bf16.mxu0 %v3307
    %4151 = vmatpush1.bf16.msra.mxu0 %v3306
    %4152 = vmatprep.subr.bf16.mxu0 %v3315
    %4153 = vmatpush1.bf16.msra.mxu0 %v3314
    %4154 = vmatprep.subr.bf16.mxu0 %v3323
    %4155 = vmatpush1.bf16.msra.mxu0 %v3322
    %4156 = vmatprep.subr.bf16.mxu0 %v3331
    %4157 = vmatpush1.bf16.msra.mxu0 %v3330
    %4158 = vmatprep.subr.bf16.mxu0 %v3339
    %4159 = vmatpush1.bf16.msra.mxu0 %v3338
    %4160 = vmatprep.subr.bf16.mxu0 %v3347
    %4161 = vmatpush1.bf16.msra.mxu0 %v3346
    %4162 = vmatprep.subr.bf16.mxu0 %v3355
    %4163 = vmatpush1.bf16.msra.mxu0 %v3354
    %4164 = vmatprep.subr.bf16.mxu0 %v3363
    %4165 = vmatpush1.bf16.msra.mxu0 %v3362
    %4166 = vmatprep.subr.bf16.mxu0 %v3371
    %4167 = vmatpush1.bf16.msra.mxu0 %v3370
    %4168 = vmatprep.subr.bf16.mxu0 %v3379
    %4169 = vmatpush1.bf16.msra.mxu0 %v3378
    %4170 = vmatprep.subr.bf16.mxu0 %v3387
    %4171 = vmatpush1.bf16.msra.mxu0 %v3386
    %4172 = vmatprep.subr.bf16.mxu0 %v3395
    %4173 = vmatpush1.bf16.msra.mxu0 %v3394
    %4174 = vmatprep.subr.bf16.mxu0 %v3403
    %4175 = vmatpush1.bf16.msra.mxu0 %v3402
    %4176 = vmatprep.subr.bf16.mxu0 %v3411
    %4177 = vmatpush1.bf16.msra.mxu0 %v3410
    %4178 = vmatprep.subr.bf16.mxu0 %v3419
    %4179 = vmatpush1.bf16.msra.mxu0 %v3418
    %4180 = vmatprep.mubr.bf16.mxu0 %v949
    %4181 = vmatmul.mubr.bf16.gmra.mrb[0].mxu0 %v948
    %v4182 = vpop.f32.mrb[0].mxu0
    %v4183 = vadd.f32 %v4142, %v4182
    %v4184 = vpop.f32.mrb[0].mxu0
    %v4185 = vadd.f32 %v4144, %v4184
    %v4186 = vpop.f32.mrb[0].mxu0
    %v4187 = vpop.f32.mrb[0].mxu0
    %4188 = vdwg.mxu0
    %4189 = vmatprep.subr.bf16.mxu0 %v3427
    %4190 = vmatpush1.bf16.msra.mxu0 %v3426
    %4191 = vmatprep.subr.bf16.mxu0 %v3435
    %4192 = vmatpush1.bf16.msra.mxu0 %v3434
    %4193 = vmatprep.subr.bf16.mxu0 %v3443
    %4194 = vmatpush1.bf16.msra.mxu0 %v3442
    %4195 = vmatprep.subr.bf16.mxu0 %v3451
    %4196 = vmatpush1.bf16.msra.mxu0 %v3450
    %4197 = vmatprep.subr.bf16.mxu0 %v3459
    %4198 = vmatpush1.bf16.msra.mxu0 %v3458
    %4199 = vmatprep.subr.bf16.mxu0 %v3467
    %4200 = vmatpush1.bf16.msra.mxu0 %v3466
    %4201 = vmatprep.subr.bf16.mxu0 %v3475
    %4202 = vmatpush1.bf16.msra.mxu0 %v3474
    %4203 = vmatprep.subr.bf16.mxu0 %v3483
    %4204 = vmatpush1.bf16.msra.mxu0 %v3482
    %4205 = vmatprep.subr.bf16.mxu0 %v3491
    %4206 = vmatpush1.bf16.msra.mxu0 %v3490
    %4207 = vmatprep.subr.bf16.mxu0 %v3499
    %4208 = vmatpush1.bf16.msra.mxu0 %v3498
    %4209 = vmatprep.subr.bf16.mxu0 %v3507
    %4210 = vmatpush1.bf16.msra.mxu0 %v3506
    %4211 = vmatprep.subr.bf16.mxu0 %v3515
    %4212 = vmatpush1.bf16.msra.mxu0 %v3514
    %4213 = vmatprep.subr.bf16.mxu0 %v3523
    %4214 = vmatpush1.bf16.msra.mxu0 %v3522
    %4215 = vmatprep.subr.bf16.mxu0 %v3531
    %4216 = vmatpush1.bf16.msra.mxu0 %v3530
    %4217 = vmatprep.subr.bf16.mxu0 %v3539
    %4218 = vmatpush1.bf16.msra.mxu0 %v3538
    %4219 = vmatprep.subr.bf16.mxu0 %v3547
    %4220 = vmatpush1.bf16.msra.mxu0 %v3546
    %4221 = vmatprep.mubr.bf16.mxu0 %v951
    %4222 = vmatmul.mubr.bf16.gmra.mrb[0].mxu0 %v950
    %v4223 = vpop.f32.mrb[0].mxu0
    %v4224 = vadd.f32 %v4183, %v4223
    %v4225 = vpop.f32.mrb[0].mxu0
    %v4226 = vadd.f32 %v4185, %v4225
    %v4227 = vpop.f32.mrb[0].mxu0
    %v4228 = vpop.f32.mrb[0].mxu0
    %4229 = vdwg.mxu0
    %4230 = vmatprep.subr.bf16.mxu0 %v3045
    %4231 = vmatpush1.bf16.msra.mxu0 %v3044
    %4232 = vmatprep.subr.bf16.mxu0 %v3053
    %4233 = vmatpush1.bf16.msra.mxu0 %v3052
    %4234 = vmatprep.subr.bf16.mxu0 %v3061
    %4235 = vmatpush1.bf16.msra.mxu0 %v3060
    %4236 = vmatprep.subr.bf16.mxu0 %v3069
    %4237 = vmatpush1.bf16.msra.mxu0 %v3068
    %4238 = vmatprep.subr.bf16.mxu0 %v3077
    %4239 = vmatpush1.bf16.msra.mxu0 %v3076
    %4240 = vmatprep.subr.bf16.mxu0 %v3085
    %4241 = vmatpush1.bf16.msra.mxu0 %v3084
    %4242 = vmatprep.subr.bf16.mxu0 %v3093
    %4243 = vmatpush1.bf16.msra.mxu0 %v3092
    %4244 = vmatprep.subr.bf16.mxu0 %v3101
    %4245 = vmatpush1.bf16.msra.mxu0 %v3100
    %4246 = vmatprep.subr.bf16.mxu0 %v3109
    %4247 = vmatpush1.bf16.msra.mxu0 %v3108
    %4248 = vmatprep.subr.bf16.mxu0 %v3117
    %4249 = vmatpush1.bf16.msra.mxu0 %v3116
    %4250 = vmatprep.subr.bf16.mxu0 %v3125
    %4251 = vmatpush1.bf16.msra.mxu0 %v3124
    %4252 = vmatprep.subr.bf16.mxu0 %v3133
    %4253 = vmatpush1.bf16.msra.mxu0 %v3132
    %4254 = vmatprep.subr.bf16.mxu0 %v3141
    %4255 = vmatpush1.bf16.msra.mxu0 %v3140
    %4256 = vmatprep.subr.bf16.mxu0 %v3149
    %4257 = vmatpush1.bf16.msra.mxu0 %v3148
    %4258 = vmatprep.subr.bf16.mxu0 %v3157
    %4259 = vmatpush1.bf16.msra.mxu0 %v3156
    %4260 = vmatprep.subr.bf16.mxu0 %v3165
    %4261 = vmatpush1.bf16.msra.mxu0 %v3164
    %4262 = vmatprep.mubr.bf16.mxu0 %v945
    %4263 = vmatmul.mubr.bf16.gmra.mrb[0].mxu0 %v944
    %v4264 = vpop.f32.mrb[0].mxu0
    %v4265 = vadd.f32 %v1477, %v4264
    %v4266 = vpop.f32.mrb[0].mxu0
    %v4267 = vadd.f32 %v1481, %v4266
    %v4268 = vpop.f32.mrb[0].mxu0
    %v4269 = vpop.f32.mrb[0].mxu0
    %4270 = vdwg.mxu0
    %4271 = vmatprep.subr.bf16.mxu0 %v3173
    %4272 = vmatpush1.bf16.msra.mxu0 %v3172
    %4273 = vmatprep.subr.bf16.mxu0 %v3181
    %4274 = vmatpush1.bf16.msra.mxu0 %v3180
    %4275 = vmatprep.subr.bf16.mxu0 %v3189
    %4276 = vmatpush1.bf16.msra.mxu0 %v3188
    %4277 = vmatprep.subr.bf16.mxu0 %v3197
    %4278 = vmatpush1.bf16.msra.mxu0 %v3196
    %4279 = vmatprep.subr.bf16.mxu0 %v3205
    %4280 = vmatpush1.bf16.msra.mxu0 %v3204
    %4281 = vmatprep.subr.bf16.mxu0 %v3213
    %4282 = vmatpush1.bf16.msra.mxu0 %v3212
    %4283 = vmatprep.subr.bf16.mxu0 %v3221
    %4284 = vmatpush1.bf16.msra.mxu0 %v3220
    %4285 = vmatprep.subr.bf16.mxu0 %v3229
    %4286 = vmatpush1.bf16.msra.mxu0 %v3228
    %4287 = vmatprep.subr.bf16.mxu0 %v3237
    %4288 = vmatpush1.bf16.msra.mxu0 %v3236
    %4289 = vmatprep.subr.bf16.mxu0 %v3245
    %4290 = vmatpush1.bf16.msra.mxu0 %v3244
    %4291 = vmatprep.subr.bf16.mxu0 %v3253
    %4292 = vmatpush1.bf16.msra.mxu0 %v3252
    %4293 = vmatprep.subr.bf16.mxu0 %v3261
    %4294 = vmatpush1.bf16.msra.mxu0 %v3260
    %4295 = vmatprep.subr.bf16.mxu0 %v3269
    %4296 = vmatpush1.bf16.msra.mxu0 %v3268
    %4297 = vmatprep.subr.bf16.mxu0 %v3277
    %4298 = vmatpush1.bf16.msra.mxu0 %v3276
    %4299 = vmatprep.subr.bf16.mxu0 %v3285
    %4300 = vmatpush1.bf16.msra.mxu0 %v3284
    %4301 = vmatprep.subr.bf16.mxu0 %v3293
    %4302 = vmatpush1.bf16.msra.mxu0 %v3292
    %4303 = vmatprep.mubr.bf16.mxu0 %v947
    %4304 = vmatmul.mubr.bf16.gmra.mrb[0].mxu0 %v946
    %v4305 = vpop.f32.mrb[0].mxu0
    %v4306 = vadd.f32 %v4265, %v4305
    %v4307 = vpop.f32.mrb[0].mxu0
    %v4308 = vadd.f32 %v4267, %v4307
    %v4309 = vpop.f32.mrb[0].mxu0
    %v4310 = vpop.f32.mrb[0].mxu0
    %4311 = vdwg.mxu0
    %4312 = vmatprep.subr.bf16.mxu0 %v3301
    %4313 = vmatpush1.bf16.msra.mxu0 %v3300
    %4314 = vmatprep.subr.bf16.mxu0 %v3309
    %4315 = vmatpush1.bf16.msra.mxu0 %v3308
    %4316 = vmatprep.subr.bf16.mxu0 %v3317
    %4317 = vmatpush1.bf16.msra.mxu0 %v3316
    %4318 = vmatprep.subr.bf16.mxu0 %v3325
    %4319 = vmatpush1.bf16.msra.mxu0 %v3324
    %4320 = vmatprep.subr.bf16.mxu0 %v3333
    %4321 = vmatpush1.bf16.msra.mxu0 %v3332
    %4322 = vmatprep.subr.bf16.mxu0 %v3341
    %4323 = vmatpush1.bf16.msra.mxu0 %v3340
    %4324 = vmatprep.subr.bf16.mxu0 %v3349
    %4325 = vmatpush1.bf16.msra.mxu0 %v3348
    %4326 = vmatprep.subr.bf16.mxu0 %v3357
    %4327 = vmatpush1.bf16.msra.mxu0 %v3356
    %4328 = vmatprep.subr.bf16.mxu0 %v3365
    %4329 = vmatpush1.bf16.msra.mxu0 %v3364
    %4330 = vmatprep.subr.bf16.mxu0 %v3373
    %4331 = vmatpush1.bf16.msra.mxu0 %v3372
    %4332 = vmatprep.subr.bf16.mxu0 %v3381
    %4333 = vmatpush1.bf16.msra.mxu0 %v3380
    %4334 = vmatprep.subr.bf16.mxu0 %v3389
    %4335 = vmatpush1.bf16.msra.mxu0 %v3388
    %4336 = vmatprep.subr.bf16.mxu0 %v3397
    %4337 = vmatpush1.bf16.msra.mxu0 %v3396
    %4338 = vmatprep.subr.bf16.mxu0 %v3405
    %4339 = vmatpush1.bf16.msra.mxu0 %v3404
    %4340 = vmatprep.subr.bf16.mxu0 %v3413
    %4341 = vmatpush1.bf16.msra.mxu0 %v3412
    %4342 = vmatprep.subr.bf16.mxu0 %v3421
    %4343 = vmatpush1.bf16.msra.mxu0 %v3420
    %4344 = vmatprep.mubr.bf16.mxu0 %v949
    %4345 = vmatmul.mubr.bf16.gmra.mrb[0].mxu0 %v948
    %v4346 = vpop.f32.mrb[0].mxu0
    %v4347 = vadd.f32 %v4306, %v4346
    %v4348 = vpop.f32.mrb[0].mxu0
    %v4349 = vadd.f32 %v4308, %v4348
    %v4350 = vpop.f32.mrb[0].mxu0
    %v4351 = vpop.f32.mrb[0].mxu0
    %4352 = vdwg.mxu0
    %4353 = vmatprep.subr.bf16.mxu0 %v3429
    %4354 = vmatpush1.bf16.msra.mxu0 %v3428
    %4355 = vmatprep.subr.bf16.mxu0 %v3437
    %4356 = vmatpush1.bf16.msra.mxu0 %v3436
    %4357 = vmatprep.subr.bf16.mxu0 %v3445
    %4358 = vmatpush1.bf16.msra.mxu0 %v3444
    %4359 = vmatprep.subr.bf16.mxu0 %v3453
    %4360 = vmatpush1.bf16.msra.mxu0 %v3452
    %4361 = vmatprep.subr.bf16.mxu0 %v3461
    %4362 = vmatpush1.bf16.msra.mxu0 %v3460
    %4363 = vmatprep.subr.bf16.mxu0 %v3469
    %4364 = vmatpush1.bf16.msra.mxu0 %v3468
    %4365 = vmatprep.subr.bf16.mxu0 %v3477
    %4366 = vmatpush1.bf16.msra.mxu0 %v3476
    %4367 = vmatprep.subr.bf16.mxu0 %v3485
    %4368 = vmatpush1.bf16.msra.mxu0 %v3484
    %4369 = vmatprep.subr.bf16.mxu0 %v3493
    %4370 = vmatpush1.bf16.msra.mxu0 %v3492
    %4371 = vmatprep.subr.bf16.mxu0 %v3501
    %4372 = vmatpush1.bf16.msra.mxu0 %v3500
    %4373 = vmatprep.subr.bf16.mxu0 %v3509
    %4374 = vmatpush1.bf16.msra.mxu0 %v3508
    %4375 = vmatprep.subr.bf16.mxu0 %v3517
    %4376 = vmatpush1.bf16.msra.mxu0 %v3516
    %4377 = vmatprep.subr.bf16.mxu0 %v3525
    %4378 = vmatpush1.bf16.msra.mxu0 %v3524
    %4379 = vmatprep.subr.bf16.mxu0 %v3533
    %4380 = vmatpush1.bf16.msra.mxu0 %v3532
    %4381 = vmatprep.subr.bf16.mxu0 %v3541
    %4382 = vmatpush1.bf16.msra.mxu0 %v3540
    %4383 = vmatprep.subr.bf16.mxu0 %v3549
    %4384 = vmatpush1.bf16.msra.mxu0 %v3548
    %4385 = vmatprep.mubr.bf16.mxu0 %v951
    %4386 = vmatmul.mubr.bf16.gmra.mrb[0].mxu0 %v950
    %v4387 = vpop.f32.mrb[0].mxu0
    %v4388 = vadd.f32 %v4347, %v4387
    %v4389 = vpop.f32.mrb[0].mxu0
    %v4390 = vadd.f32 %v4349, %v4389
    %v4391 = vpop.f32.mrb[0].mxu0
    %v4392 = vpop.f32.mrb[0].mxu0
    %4393 = vdwg.mxu0
    %4394 = vmatprep.subr.bf16.mxu0 %v3047
    %4395 = vmatpush1.bf16.msra.mxu0 %v3046
    %4396 = vmatprep.subr.bf16.mxu0 %v3055
    %4397 = vmatpush1.bf16.msra.mxu0 %v3054
    %4398 = vmatprep.subr.bf16.mxu0 %v3063
    %4399 = vmatpush1.bf16.msra.mxu0 %v3062
    %4400 = vmatprep.subr.bf16.mxu0 %v3071
    %4401 = vmatpush1.bf16.msra.mxu0 %v3070
    %4402 = vmatprep.subr.bf16.mxu0 %v3079
    %4403 = vmatpush1.bf16.msra.mxu0 %v3078
    %4404 = vmatprep.subr.bf16.mxu0 %v3087
    %4405 = vmatpush1.bf16.msra.mxu0 %v3086
    %4406 = vmatprep.subr.bf16.mxu0 %v3095
    %4407 = vmatpush1.bf16.msra.mxu0 %v3094
    %4408 = vmatprep.subr.bf16.mxu0 %v3103
    %4409 = vmatpush1.bf16.msra.mxu0 %v3102
    %4410 = vmatprep.subr.bf16.mxu0 %v3111
    %4411 = vmatpush1.bf16.msra.mxu0 %v3110
    %4412 = vmatprep.subr.bf16.mxu0 %v3119
    %4413 = vmatpush1.bf16.msra.mxu0 %v3118
    %4414 = vmatprep.subr.bf16.mxu0 %v3127
    %4415 = vmatpush1.bf16.msra.mxu0 %v3126
    %4416 = vmatprep.subr.bf16.mxu0 %v3135
    %4417 = vmatpush1.bf16.msra.mxu0 %v3134
    %4418 = vmatprep.subr.bf16.mxu0 %v3143
    %4419 = vmatpush1.bf16.msra.mxu0 %v3142
    %4420 = vmatprep.subr.bf16.mxu0 %v3151
    %4421 = vmatpush1.bf16.msra.mxu0 %v3150
    %4422 = vmatprep.subr.bf16.mxu0 %v3159
    %4423 = vmatpush1.bf16.msra.mxu0 %v3158
    %4424 = vmatprep.subr.bf16.mxu0 %v3167
    %4425 = vmatpush1.bf16.msra.mxu0 %v3166
    %4426 = vmatprep.mubr.bf16.mxu0 %v945
    %4427 = vmatmul.mubr.bf16.gmra.mrb[0].mxu0 %v944
    %v4428 = vpop.f32.mrb[0].mxu0
    %v4429 = vadd.f32 %v1485, %v4428
    %v4430 = vpop.f32.mrb[0].mxu0
    %v4431 = vadd.f32 %v1489, %v4430
    %v4432 = vpop.f32.mrb[0].mxu0
    %v4433 = vpop.f32.mrb[0].mxu0
    %4434 = vdwg.mxu0
    %4435 = vmatprep.subr.bf16.mxu0 %v3175
    %4436 = vmatpush1.bf16.msra.mxu0 %v3174
    %4437 = vmatprep.subr.bf16.mxu0 %v3183
    %4438 = vmatpush1.bf16.msra.mxu0 %v3182
    %4439 = vmatprep.subr.bf16.mxu0 %v3191
    %4440 = vmatpush1.bf16.msra.mxu0 %v3190
    %4441 = vmatprep.subr.bf16.mxu0 %v3199
    %4442 = vmatpush1.bf16.msra.mxu0 %v3198
    %4443 = vmatprep.subr.bf16.mxu0 %v3207
    %4444 = vmatpush1.bf16.msra.mxu0 %v3206
    %4445 = vmatprep.subr.bf16.mxu0 %v3215
    %4446 = vmatpush1.bf16.msra.mxu0 %v3214
    %4447 = vmatprep.subr.bf16.mxu0 %v3223
    %4448 = vmatpush1.bf16.msra.mxu0 %v3222
    %4449 = vmatprep.subr.bf16.mxu0 %v3231
    %4450 = vmatpush1.bf16.msra.mxu0 %v3230
    %4451 = vmatprep.subr.bf16.mxu0 %v3239
    %4452 = vmatpush1.bf16.msra.mxu0 %v3238
    %4453 = vmatprep.subr.bf16.mxu0 %v3247
    %4454 = vmatpush1.bf16.msra.mxu0 %v3246
    %4455 = vmatprep.subr.bf16.mxu0 %v3255
    %4456 = vmatpush1.bf16.msra.mxu0 %v3254
    %4457 = vmatprep.subr.bf16.mxu0 %v3263
    %4458 = vmatpush1.bf16.msra.mxu0 %v3262
    %4459 = vmatprep.subr.bf16.mxu0 %v3271
    %4460 = vmatpush1.bf16.msra.mxu0 %v3270
    %4461 = vmatprep.subr.bf16.mxu0 %v3279
    %4462 = vmatpush1.bf16.msra.mxu0 %v3278
    %4463 = vmatprep.subr.bf16.mxu0 %v3287
    %4464 = vmatpush1.bf16.msra.mxu0 %v3286
    %4465 = vmatprep.subr.bf16.mxu0 %v3295
    %4466 = vmatpush1.bf16.msra.mxu0 %v3294
    %4467 = vmatprep.mubr.bf16.mxu0 %v947
    %4468 = vmatmul.mubr.bf16.gmra.mrb[0].mxu0 %v946
    %v4469 = vpop.f32.mrb[0].mxu0
    %v4470 = vadd.f32 %v4429, %v4469
    %v4471 = vpop.f32.mrb[0].mxu0
    %v4472 = vadd.f32 %v4431, %v4471
    %v4473 = vpop.f32.mrb[0].mxu0
    %v4474 = vpop.f32.mrb[0].mxu0
    %4475 = vdwg.mxu0
    %4476 = vmatprep.subr.bf16.mxu0 %v3303
    %4477 = vmatpush1.bf16.msra.mxu0 %v3302
    %4478 = vmatprep.subr.bf16.mxu0 %v3311
    %4479 = vmatpush1.bf16.msra.mxu0 %v3310
    %4480 = vmatprep.subr.bf16.mxu0 %v3319
    %4481 = vmatpush1.bf16.msra.mxu0 %v3318
    %4482 = vmatprep.subr.bf16.mxu0 %v3327
    %4483 = vmatpush1.bf16.msra.mxu0 %v3326
    %4484 = vmatprep.subr.bf16.mxu0 %v3335
    %4485 = vmatpush1.bf16.msra.mxu0 %v3334
    %4486 = vmatprep.subr.bf16.mxu0 %v3343
    %4487 = vmatpush1.bf16.msra.mxu0 %v3342
    %4488 = vmatprep.subr.bf16.mxu0 %v3351
    %4489 = vmatpush1.bf16.msra.mxu0 %v3350
    %4490 = vmatprep.subr.bf16.mxu0 %v3359
    %4491 = vmatpush1.bf16.msra.mxu0 %v3358
    %4492 = vmatprep.subr.bf16.mxu0 %v3367
    %4493 = vmatpush1.bf16.msra.mxu0 %v3366
    %4494 = vmatprep.subr.bf16.mxu0 %v3375
    %4495 = vmatpush1.bf16.msra.mxu0 %v3374
    %4496 = vmatprep.subr.bf16.mxu0 %v3383
    %4497 = vmatpush1.bf16.msra.mxu0 %v3382
    %4498 = vmatprep.subr.bf16.mxu0 %v3391
    %4499 = vmatpush1.bf16.msra.mxu0 %v3390
    %4500 = vmatprep.subr.bf16.mxu0 %v3399
    %4501 = vmatpush1.bf16.msra.mxu0 %v3398
    %4502 = vmatprep.subr.bf16.mxu0 %v3407
    %4503 = vmatpush1.bf16.msra.mxu0 %v3406
    %4504 = vmatprep.subr.bf16.mxu0 %v3415
    %4505 = vmatpush1.bf16.msra.mxu0 %v3414
    %4506 = vmatprep.subr.bf16.mxu0 %v3423
    %4507 = vmatpush1.bf16.msra.mxu0 %v3422
    %4508 = vmatprep.mubr.bf16.mxu0 %v949
    %4509 = vmatmul.mubr.bf16.gmra.mrb[0].mxu0 %v948
    %v4510 = vpop.f32.mrb[0].mxu0
    %v4511 = vadd.f32 %v4470, %v4510
    %v4512 = vpop.f32.mrb[0].mxu0
    %v4513 = vadd.f32 %v4472, %v4512
    %v4514 = vpop.f32.mrb[0].mxu0
    %v4515 = vpop.f32.mrb[0].mxu0
    %4516 = vdwg.mxu0
    %4517 = vmatprep.subr.bf16.mxu0 %v3431
    %4518 = vmatpush1.bf16.msra.mxu0 %v3430
    %4519 = vmatprep.subr.bf16.mxu0 %v3439
    %4520 = vmatpush1.bf16.msra.mxu0 %v3438
    %4521 = vmatprep.subr.bf16.mxu0 %v3447
    %4522 = vmatpush1.bf16.msra.mxu0 %v3446
    %4523 = vmatprep.subr.bf16.mxu0 %v3455
    %4524 = vmatpush1.bf16.msra.mxu0 %v3454
    %4525 = vmatprep.subr.bf16.mxu0 %v3463
    %4526 = vmatpush1.bf16.msra.mxu0 %v3462
    %4527 = vmatprep.subr.bf16.mxu0 %v3471
    %4528 = vmatpush1.bf16.msra.mxu0 %v3470
    %4529 = vmatprep.subr.bf16.mxu0 %v3479
    %4530 = vmatpush1.bf16.msra.mxu0 %v3478
    %4531 = vmatprep.subr.bf16.mxu0 %v3487
    %4532 = vmatpush1.bf16.msra.mxu0 %v3486
    %4533 = vmatprep.subr.bf16.mxu0 %v3495
    %4534 = vmatpush1.bf16.msra.mxu0 %v3494
    %4535 = vmatprep.subr.bf16.mxu0 %v3503
    %4536 = vmatpush1.bf16.msra.mxu0 %v3502
    %4537 = vmatprep.subr.bf16.mxu0 %v3511
    %4538 = vmatpush1.bf16.msra.mxu0 %v3510
    %4539 = vmatprep.subr.bf16.mxu0 %v3519
    %4540 = vmatpush1.bf16.msra.mxu0 %v3518
    %4541 = vmatprep.subr.bf16.mxu0 %v3527
    %4542 = vmatpush1.bf16.msra.mxu0 %v3526
    %4543 = vmatprep.subr.bf16.mxu0 %v3535
    %4544 = vmatpush1.bf16.msra.mxu0 %v3534
    %4545 = vmatprep.subr.bf16.mxu0 %v3543
    %4546 = vmatpush1.bf16.msra.mxu0 %v3542
    %4547 = vmatprep.subr.bf16.mxu0 %v3551
    %4548 = vmatpush1.bf16.msra.mxu0 %v3550
    %4549 = vmatprep.mubr.bf16.mxu0 %v951
    %4550 = vmatmul.mubr.bf16.gmra.mrb[0].mxu0 %v950
    %v4551 = vpop.f32.mrb[0].mxu0
    %v4552 = vadd.f32 %v4511, %v4551
    %v4553 = vpop.f32.mrb[0].mxu0
    %v4554 = vadd.f32 %v4513, %v4553
    %v4555 = vpop.f32.mrb[0].mxu0
    %v4556 = vpop.f32.mrb[0].mxu0
    %4557 = vdwg.mxu0
    %4558 = vmatprep.subr.bf16.mxu0 %v3049
    %4559 = vmatpush1.bf16.msra.mxu0 %v3048
    %4560 = vmatprep.subr.bf16.mxu0 %v3057
    %4561 = vmatpush1.bf16.msra.mxu0 %v3056
    %4562 = vmatprep.subr.bf16.mxu0 %v3065
    %4563 = vmatpush1.bf16.msra.mxu0 %v3064
    %4564 = vmatprep.subr.bf16.mxu0 %v3073
    %4565 = vmatpush1.bf16.msra.mxu0 %v3072
    %4566 = vmatprep.subr.bf16.mxu0 %v3081
    %4567 = vmatpush1.bf16.msra.mxu0 %v3080
    %4568 = vmatprep.subr.bf16.mxu0 %v3089
    %4569 = vmatpush1.bf16.msra.mxu0 %v3088
    %4570 = vmatprep.subr.bf16.mxu0 %v3097
    %4571 = vmatpush1.bf16.msra.mxu0 %v3096
    %4572 = vmatprep.subr.bf16.mxu0 %v3105
    %4573 = vmatpush1.bf16.msra.mxu0 %v3104
    %4574 = vmatprep.subr.bf16.mxu0 %v3113
    %4575 = vmatpush1.bf16.msra.mxu0 %v3112
    %4576 = vmatprep.subr.bf16.mxu0 %v3121
    %4577 = vmatpush1.bf16.msra.mxu0 %v3120
    %4578 = vmatprep.subr.bf16.mxu0 %v3129
    %4579 = vmatpush1.bf16.msra.mxu0 %v3128
    %4580 = vmatprep.subr.bf16.mxu0 %v3137
    %4581 = vmatpush1.bf16.msra.mxu0 %v3136
    %4582 = vmatprep.subr.bf16.mxu0 %v3145
    %4583 = vmatpush1.bf16.msra.mxu0 %v3144
    %4584 = vmatprep.subr.bf16.mxu0 %v3153
    %4585 = vmatpush1.bf16.msra.mxu0 %v3152
    %4586 = vmatprep.subr.bf16.mxu0 %v3161
    %4587 = vmatpush1.bf16.msra.mxu0 %v3160
    %4588 = vmatprep.subr.bf16.mxu0 %v3169
    %4589 = vmatpush1.bf16.msra.mxu0 %v3168
    %4590 = vmatprep.mubr.bf16.mxu0 %v945
    %4591 = vmatmul.mubr.bf16.gmra.mrb[0].mxu0 %v944
    %v4592 = vpop.f32.mrb[0].mxu0
    %v4593 = vadd.f32 %v1493, %v4592
    %v4594 = vpop.f32.mrb[0].mxu0
    %v4595 = vadd.f32 %v1497, %v4594
    %v4596 = vpop.f32.mrb[0].mxu0
    %v4597 = vpop.f32.mrb[0].mxu0
    %4598 = vdwg.mxu0
    %4599 = vmatprep.subr.bf16.mxu0 %v3177
    %4600 = vmatpush1.bf16.msra.mxu0 %v3176
    %4601 = vmatprep.subr.bf16.mxu0 %v3185
    %4602 = vmatpush1.bf16.msra.mxu0 %v3184
    %4603 = vmatprep.subr.bf16.mxu0 %v3193
    %4604 = vmatpush1.bf16.msra.mxu0 %v3192
    %4605 = vmatprep.subr.bf16.mxu0 %v3201
    %4606 = vmatpush1.bf16.msra.mxu0 %v3200
    %4607 = vmatprep.subr.bf16.mxu0 %v3209
    %4608 = vmatpush1.bf16.msra.mxu0 %v3208
    %4609 = vmatprep.subr.bf16.mxu0 %v3217
    %4610 = vmatpush1.bf16.msra.mxu0 %v3216
    %4611 = vmatprep.subr.bf16.mxu0 %v3225
    %4612 = vmatpush1.bf16.msra.mxu0 %v3224
    %4613 = vmatprep.subr.bf16.mxu0 %v3233
    %4614 = vmatpush1.bf16.msra.mxu0 %v3232
    %4615 = vmatprep.subr.bf16.mxu0 %v3241
    %4616 = vmatpush1.bf16.msra.mxu0 %v3240
    %4617 = vmatprep.subr.bf16.mxu0 %v3249
    %4618 = vmatpush1.bf16.msra.mxu0 %v3248
    %4619 = vmatprep.subr.bf16.mxu0 %v3257
    %4620 = vmatpush1.bf16.msra.mxu0 %v3256
    %4621 = vmatprep.subr.bf16.mxu0 %v3265
    %4622 = vmatpush1.bf16.msra.mxu0 %v3264
    %4623 = vmatprep.subr.bf16.mxu0 %v3273
    %4624 = vmatpush1.bf16.msra.mxu0 %v3272
    %4625 = vmatprep.subr.bf16.mxu0 %v3281
    %4626 = vmatpush1.bf16.msra.mxu0 %v3280
    %4627 = vmatprep.subr.bf16.mxu0 %v3289
    %4628 = vmatpush1.bf16.msra.mxu0 %v3288
    %4629 = vmatprep.subr.bf16.mxu0 %v3297
    %4630 = vmatpush1.bf16.msra.mxu0 %v3296
    %4631 = vmatprep.mubr.bf16.mxu0 %v947
    %4632 = vmatmul.mubr.bf16.gmra.mrb[0].mxu0 %v946
    %v4633 = vpop.f32.mrb[0].mxu0
    %v4634 = vadd.f32 %v4593, %v4633
    %v4635 = vpop.f32.mrb[0].mxu0
    %v4636 = vadd.f32 %v4595, %v4635
    %v4637 = vpop.f32.mrb[0].mxu0
    %v4638 = vpop.f32.mrb[0].mxu0
    %4639 = vdwg.mxu0
    %4640 = vmatprep.subr.bf16.mxu0 %v3305
    %4641 = vmatpush1.bf16.msra.mxu0 %v3304
    %4642 = vmatprep.subr.bf16.mxu0 %v3313
    %4643 = vmatpush1.bf16.msra.mxu0 %v3312
    %4644 = vmatprep.subr.bf16.mxu0 %v3321
    %4645 = vmatpush1.bf16.msra.mxu0 %v3320
    %4646 = vmatprep.subr.bf16.mxu0 %v3329
    %4647 = vmatpush1.bf16.msra.mxu0 %v3328
    %4648 = vmatprep.subr.bf16.mxu0 %v3337
    %4649 = vmatpush1.bf16.msra.mxu0 %v3336
    %4650 = vmatprep.subr.bf16.mxu0 %v3345
    %4651 = vmatpush1.bf16.msra.mxu0 %v3344
    %4652 = vmatprep.subr.bf16.mxu0 %v3353
    %4653 = vmatpush1.bf16.msra.mxu0 %v3352
    %4654 = vmatprep.subr.bf16.mxu0 %v3361
    %4655 = vmatpush1.bf16.msra.mxu0 %v3360
    %4656 = vmatprep.subr.bf16.mxu0 %v3369
    %4657 = vmatpush1.bf16.msra.mxu0 %v3368
    %4658 = vmatprep.subr.bf16.mxu0 %v3377
    %4659 = vmatpush1.bf16.msra.mxu0 %v3376
    %4660 = vmatprep.subr.bf16.mxu0 %v3385
    %4661 = vmatpush1.bf16.msra.mxu0 %v3384
    %4662 = vmatprep.subr.bf16.mxu0 %v3393
    %4663 = vmatpush1.bf16.msra.mxu0 %v3392
    %4664 = vmatprep.subr.bf16.mxu0 %v3401
    %4665 = vmatpush1.bf16.msra.mxu0 %v3400
    %4666 = vmatprep.subr.bf16.mxu0 %v3409
    %4667 = vmatpush1.bf16.msra.mxu0 %v3408
    %4668 = vmatprep.subr.bf16.mxu0 %v3417
    %4669 = vmatpush1.bf16.msra.mxu0 %v3416
    %4670 = vmatprep.subr.bf16.mxu0 %v3425
    %4671 = vmatpush1.bf16.msra.mxu0 %v3424
    %4672 = vmatprep.mubr.bf16.mxu0 %v949
    %4673 = vmatmul.mubr.bf16.gmra.mrb[0].mxu0 %v948
    %v4674 = vpop.f32.mrb[0].mxu0
    %v4675 = vadd.f32 %v4634, %v4674
    %v4676 = vpop.f32.mrb[0].mxu0
    %v4677 = vadd.f32 %v4636, %v4676
    %v4678 = vpop.f32.mrb[0].mxu0
    %v4679 = vpop.f32.mrb[0].mxu0
    %4680 = vdwg.mxu0
    %4681 = vmatprep.subr.bf16.mxu0 %v3433
    %4682 = vmatpush1.bf16.msra.mxu0 %v3432
    %4683 = vmatprep.subr.bf16.mxu0 %v3441
    %4684 = vmatpush1.bf16.msra.mxu0 %v3440
    %4685 = vmatprep.subr.bf16.mxu0 %v3449
    %4686 = vmatpush1.bf16.msra.mxu0 %v3448
    %4687 = vmatprep.subr.bf16.mxu0 %v3457
    %4688 = vmatpush1.bf16.msra.mxu0 %v3456
    %4689 = vmatprep.subr.bf16.mxu0 %v3465
    %4690 = vmatpush1.bf16.msra.mxu0 %v3464
    %4691 = vmatprep.subr.bf16.mxu0 %v3473
    %4692 = vmatpush1.bf16.msra.mxu0 %v3472
    %4693 = vmatprep.subr.bf16.mxu0 %v3481
    %4694 = vmatpush1.bf16.msra.mxu0 %v3480
    %4695 = vmatprep.subr.bf16.mxu0 %v3489
    %4696 = vmatpush1.bf16.msra.mxu0 %v3488
    %4697 = vmatprep.subr.bf16.mxu0 %v3497
    %4698 = vmatpush1.bf16.msra.mxu0 %v3496
    %4699 = vmatprep.subr.bf16.mxu0 %v3505
    %4700 = vmatpush1.bf16.msra.mxu0 %v3504
    %4701 = vmatprep.subr.bf16.mxu0 %v3513
    %4702 = vmatpush1.bf16.msra.mxu0 %v3512
    %4703 = vmatprep.subr.bf16.mxu0 %v3521
    %4704 = vmatpush1.bf16.msra.mxu0 %v3520
    %4705 = vmatprep.subr.bf16.mxu0 %v3529
    %4706 = vmatpush1.bf16.msra.mxu0 %v3528
    %4707 = vmatprep.subr.bf16.mxu0 %v3537
    %4708 = vmatpush1.bf16.msra.mxu0 %v3536
    %4709 = vmatprep.subr.bf16.mxu0 %v3545
    %4710 = vmatpush1.bf16.msra.mxu0 %v3544
    %4711 = vmatprep.subr.bf16.mxu0 %v3553
    %4712 = vmatpush1.bf16.msra.mxu0 %v3552
    %4713 = vmatprep.mubr.bf16.mxu0 %v951
    %4714 = vmatmul.mubr.bf16.gmra.mrb[0].mxu0 %v950
    %v4715 = vpop.f32.mrb[0].mxu0
    %v4716 = vadd.f32 %v4675, %v4715
    %v4717 = vpop.f32.mrb[0].mxu0
    %v4718 = vadd.f32 %v4677, %v4717
    %v4719 = vpop.f32.mrb[0].mxu0
    %v4720 = vpop.f32.mrb[0].mxu0
    %4721 = vdwg.mxu0
    %v4722 = vmax.f32 %v4224, 0.0
    %v4723 = vmax.f32 %v4226, 0.0
    %v4724 = vmax.f32 %v4388, 0.0
    %v4725 = vmax.f32 %v4390, 0.0
    %v4726 = vmax.f32 %v4552, 0.0
    %v4727 = vmax.f32 %v4554, 0.0
    %v4728 = vmax.f32 %v4716, 0.0
    %v4729 = vmax.f32 %v4718, 0.0
    %v4730 = vpack.c.bf16 %v4722, %v4722
    %v4731 = vpack.c.bf16 %v4723, %v4723
    %v4732 = vpack.c.bf16 %v4724, %v4724
    %v4733 = vpack.c.bf16 %v4725, %v4725
    %v4734 = vpack.c.bf16 %v4726, %v4726
    %v4735 = vpack.c.bf16 %v4727, %v4727
    %v4736 = vpack.c.bf16 %v4728, %v4728
    %v4737 = vpack.c.bf16 %v4729, %v4729
    %v4738 = vld [vmem:[#allocation20] sm:$0xff]
    %v4739 = vld [vmem:[#allocation20 + $0x8] sm:$0xff]
    %v4740 = vld [vmem:[#allocation20 + $0x10] sm:$0xff]
    %v4741 = vld [vmem:[#allocation20 + $0x18] sm:$0xff]
    %v4742 = vld [vmem:[#allocation20 + $0x20] sm:$0xff]
    %v4743 = vld [vmem:[#allocation20 + $0x28] sm:$0xff]
    %v4744 = vld [vmem:[#allocation20 + $0x30] sm:$0xff]
    %v4745 = vld [vmem:[#allocation20 + $0x38] sm:$0xff]
    %v4746 = vld [vmem:[#allocation20 + $0x40] sm:$0xff]
    %v4747 = vld [vmem:[#allocation20 + $0x48] sm:$0xff]
    %v4748 = vld [vmem:[#allocation20 + $0x50] sm:$0xff]
    %v4749 = vld [vmem:[#allocation20 + $0x58] sm:$0xff]
    %v4750 = vld [vmem:[#allocation20 + $0x60] sm:$0xff]
    %v4751 = vld [vmem:[#allocation20 + $0x68] sm:$0xff]
    %v4752 = vld [vmem:[#allocation20 + $0x70] sm:$0xff]
    %v4753 = vld [vmem:[#allocation20 + $0x78] sm:$0xff]
    %v4754 = vld [vmem:[#allocation20 + $0x80] sm:$0xff]
    %v4755 = vld [vmem:[#allocation20 + $0x88] sm:$0xff]
    %v4756 = vld [vmem:[#allocation20 + $0x90] sm:$0xff]
    %v4757 = vld [vmem:[#allocation20 + $0x98] sm:$0xff]
    %v4758 = vld [vmem:[#allocation20 + $0xa0] sm:$0xff]
    %v4759 = vld [vmem:[#allocation20 + $0xa8] sm:$0xff]
    %v4760 = vld [vmem:[#allocation20 + $0xb0] sm:$0xff]
    %v4761 = vld [vmem:[#allocation20 + $0xb8] sm:$0xff]
    %v4762 = vld [vmem:[#allocation20 + $0xc0] sm:$0xff]
    %v4763 = vld [vmem:[#allocation20 + $0xc8] sm:$0xff]
    %v4764 = vld [vmem:[#allocation20 + $0xd0] sm:$0xff]
    %v4765 = vld [vmem:[#allocation20 + $0xd8] sm:$0xff]
    %v4766 = vld [vmem:[#allocation20 + $0xe0] sm:$0xff]
    %v4767 = vld [vmem:[#allocation20 + $0xe8] sm:$0xff]
    %v4768 = vld [vmem:[#allocation20 + $0xf0] sm:$0xff]
    %v4769 = vld [vmem:[#allocation20 + $0xf8] sm:$0xff]
    %v4770 = vld [vmem:[#allocation20 + $0x100] sm:$0xff]
    %v4771 = vld [vmem:[#allocation20 + $0x108] sm:$0xff]
    %v4772 = vld [vmem:[#allocation20 + $0x110] sm:$0xff]
    %v4773 = vld [vmem:[#allocation20 + $0x118] sm:$0xff]
    %v4774 = vld [vmem:[#allocation20 + $0x120] sm:$0xff]
    %v4775 = vld [vmem:[#allocation20 + $0x128] sm:$0xff]
    %v4776 = vld [vmem:[#allocation20 + $0x130] sm:$0xff]
    %v4777 = vld [vmem:[#allocation20 + $0x138] sm:$0xff]
    %v4778 = vld [vmem:[#allocation20 + $0x140] sm:$0xff]
    %v4779 = vld [vmem:[#allocation20 + $0x148] sm:$0xff]
    %v4780 = vld [vmem:[#allocation20 + $0x150] sm:$0xff]
    %v4781 = vld [vmem:[#allocation20 + $0x158] sm:$0xff]
    %v4782 = vld [vmem:[#allocation20 + $0x160] sm:$0xff]
    %v4783 = vld [vmem:[#allocation20 + $0x168] sm:$0xff]
    %v4784 = vld [vmem:[#allocation20 + $0x170] sm:$0xff]
    %v4785 = vld [vmem:[#allocation20 + $0x178] sm:$0xff]
    %v4786 = vld [vmem:[#allocation20 + $0x180] sm:$0xff]
    %v4787 = vld [vmem:[#allocation20 + $0x188] sm:$0xff]
    %v4788 = vld [vmem:[#allocation20 + $0x190] sm:$0xff]
    %v4789 = vld [vmem:[#allocation20 + $0x198] sm:$0xff]
    %v4790 = vld [vmem:[#allocation20 + $0x1a0] sm:$0xff]
    %v4791 = vld [vmem:[#allocation20 + $0x1a8] sm:$0xff]
    %v4792 = vld [vmem:[#allocation20 + $0x1b0] sm:$0xff]
    %v4793 = vld [vmem:[#allocation20 + $0x1b8] sm:$0xff]
    %v4794 = vld [vmem:[#allocation20 + $0x1c0] sm:$0xff]
    %v4795 = vld [vmem:[#allocation20 + $0x1c8] sm:$0xff]
    %v4796 = vld [vmem:[#allocation20 + $0x1d0] sm:$0xff]
    %v4797 = vld [vmem:[#allocation20 + $0x1d8] sm:$0xff]
    %v4798 = vld [vmem:[#allocation20 + $0x1e0] sm:$0xff]
    %v4799 = vld [vmem:[#allocation20 + $0x1e8] sm:$0xff]
    %v4800 = vld [vmem:[#allocation20 + $0x1f0] sm:$0xff]
    %v4801 = vld [vmem:[#allocation20 + $0x1f8] sm:$0xff]
    %v4802 = vld [vmem:[#allocation20 + $0x200] sm:$0xff]
    %v4803 = vld [vmem:[#allocation20 + $0x208] sm:$0xff]
    %v4804 = vld [vmem:[#allocation20 + $0x210] sm:$0xff]
    %v4805 = vld [vmem:[#allocation20 + $0x218] sm:$0xff]
    %v4806 = vld [vmem:[#allocation20 + $0x220] sm:$0xff]
    %v4807 = vld [vmem:[#allocation20 + $0x228] sm:$0xff]
    %v4808 = vld [vmem:[#allocation20 + $0x230] sm:$0xff]
    %v4809 = vld [vmem:[#allocation20 + $0x238] sm:$0xff]
    %v4810 = vld [vmem:[#allocation20 + $0x240] sm:$0xff]
    %v4811 = vld [vmem:[#allocation20 + $0x248] sm:$0xff]
    %v4812 = vld [vmem:[#allocation20 + $0x250] sm:$0xff]
    %v4813 = vld [vmem:[#allocation20 + $0x258] sm:$0xff]
    %v4814 = vld [vmem:[#allocation20 + $0x260] sm:$0xff]
    %v4815 = vld [vmem:[#allocation20 + $0x268] sm:$0xff]
    %v4816 = vld [vmem:[#allocation20 + $0x270] sm:$0xff]
    %v4817 = vld [vmem:[#allocation20 + $0x278] sm:$0xff]
    %v4818 = vld [vmem:[#allocation20 + $0x280] sm:$0xff]
    %v4819 = vld [vmem:[#allocation20 + $0x288] sm:$0xff]
    %v4820 = vld [vmem:[#allocation20 + $0x290] sm:$0xff]
    %v4821 = vld [vmem:[#allocation20 + $0x298] sm:$0xff]
    %v4822 = vld [vmem:[#allocation20 + $0x2a0] sm:$0xff]
    %v4823 = vld [vmem:[#allocation20 + $0x2a8] sm:$0xff]
    %v4824 = vld [vmem:[#allocation20 + $0x2b0] sm:$0xff]
    %v4825 = vld [vmem:[#allocation20 + $0x2b8] sm:$0xff]
    %v4826 = vld [vmem:[#allocation20 + $0x2c0] sm:$0xff]
    %v4827 = vld [vmem:[#allocation20 + $0x2c8] sm:$0xff]
    %v4828 = vld [vmem:[#allocation20 + $0x2d0] sm:$0xff]
    %v4829 = vld [vmem:[#allocation20 + $0x2d8] sm:$0xff]
    %v4830 = vld [vmem:[#allocation20 + $0x2e0] sm:$0xff]
    %v4831 = vld [vmem:[#allocation20 + $0x2e8] sm:$0xff]
    %v4832 = vld [vmem:[#allocation20 + $0x2f0] sm:$0xff]
    %v4833 = vld [vmem:[#allocation20 + $0x2f8] sm:$0xff]
    %v4834 = vld [vmem:[#allocation20 + $0x300] sm:$0xff]
    %v4835 = vld [vmem:[#allocation20 + $0x308] sm:$0xff]
    %v4836 = vld [vmem:[#allocation20 + $0x310] sm:$0xff]
    %v4837 = vld [vmem:[#allocation20 + $0x318] sm:$0xff]
    %v4838 = vld [vmem:[#allocation20 + $0x320] sm:$0xff]
    %v4839 = vld [vmem:[#allocation20 + $0x328] sm:$0xff]
    %v4840 = vld [vmem:[#allocation20 + $0x330] sm:$0xff]
    %v4841 = vld [vmem:[#allocation20 + $0x338] sm:$0xff]
    %v4842 = vld [vmem:[#allocation20 + $0x340] sm:$0xff]
    %v4843 = vld [vmem:[#allocation20 + $0x348] sm:$0xff]
    %v4844 = vld [vmem:[#allocation20 + $0x350] sm:$0xff]
    %v4845 = vld [vmem:[#allocation20 + $0x358] sm:$0xff]
    %v4846 = vld [vmem:[#allocation20 + $0x360] sm:$0xff]
    %v4847 = vld [vmem:[#allocation20 + $0x368] sm:$0xff]
    %v4848 = vld [vmem:[#allocation20 + $0x370] sm:$0xff]
    %v4849 = vld [vmem:[#allocation20 + $0x378] sm:$0xff]
    %v4850 = vld [vmem:[#allocation20 + $0x380] sm:$0xff]
    %v4851 = vld [vmem:[#allocation20 + $0x388] sm:$0xff]
    %v4852 = vld [vmem:[#allocation20 + $0x390] sm:$0xff]
    %v4853 = vld [vmem:[#allocation20 + $0x398] sm:$0xff]
    %v4854 = vld [vmem:[#allocation20 + $0x3a0] sm:$0xff]
    %v4855 = vld [vmem:[#allocation20 + $0x3a8] sm:$0xff]
    %v4856 = vld [vmem:[#allocation20 + $0x3b0] sm:$0xff]
    %v4857 = vld [vmem:[#allocation20 + $0x3b8] sm:$0xff]
    %v4858 = vld [vmem:[#allocation20 + $0x3c0] sm:$0xff]
    %v4859 = vld [vmem:[#allocation20 + $0x3c8] sm:$0xff]
    %v4860 = vld [vmem:[#allocation20 + $0x3d0] sm:$0xff]
    %v4861 = vld [vmem:[#allocation20 + $0x3d8] sm:$0xff]
    %v4862 = vld [vmem:[#allocation20 + $0x3e0] sm:$0xff]
    %v4863 = vld [vmem:[#allocation20 + $0x3e8] sm:$0xff]
    %v4864 = vld [vmem:[#allocation20 + $0x3f0] sm:$0xff]
    %v4865 = vld [vmem:[#allocation20 + $0x3f8] sm:$0xff]
    %v4866 = vld [vmem:[#allocation22] sm:$0x3]
    %v4868 = vlaneseq
    %v4869 = vshrl.u32 %v4868, 7
    %v4870 = vsub.s32 0, %v4869
    %v4871 = vrot.slane %v4866, %v4870
    %v4872 = vlaneseq
    %v4873 = vshrl.u32 %v4872, 7
    %v4874 = vsub.s32 1, %v4873
    %v4875 = vrot.slane %v4866, %v4874
    %v5006 = vunpack.c.l.b16 %v4738
    %v5007 = vunpack.c.h.b16 %v4738
    %v5008 = vunpack.c.l.b16 %v4739
    %v5009 = vunpack.c.h.b16 %v4739
    %v5010 = vunpack.c.l.b16 %v4740
    %v5011 = vunpack.c.h.b16 %v4740
    %v5012 = vunpack.c.l.b16 %v4741
    %v5013 = vunpack.c.h.b16 %v4741
    %v5014 = vunpack.c.l.b16 %v4742
    %v5015 = vunpack.c.h.b16 %v4742
    %v5016 = vunpack.c.l.b16 %v4743
    %v5017 = vunpack.c.h.b16 %v4743
    %v5018 = vunpack.c.l.b16 %v4744
    %v5019 = vunpack.c.h.b16 %v4744
    %v5020 = vunpack.c.l.b16 %v4745
    %v5021 = vunpack.c.h.b16 %v4745
    %v5022 = vunpack.c.l.b16 %v4746
    %v5023 = vunpack.c.h.b16 %v4746
    %v5024 = vunpack.c.l.b16 %v4747
    %v5025 = vunpack.c.h.b16 %v4747
    %v5026 = vunpack.c.l.b16 %v4748
    %v5027 = vunpack.c.h.b16 %v4748
    %v5028 = vunpack.c.l.b16 %v4749
    %v5029 = vunpack.c.h.b16 %v4749
    %v5030 = vunpack.c.l.b16 %v4750
    %v5031 = vunpack.c.h.b16 %v4750
    %v5032 = vunpack.c.l.b16 %v4751
    %v5033 = vunpack.c.h.b16 %v4751
    %v5034 = vunpack.c.l.b16 %v4752
    %v5035 = vunpack.c.h.b16 %v4752
    %v5036 = vunpack.c.l.b16 %v4753
    %v5037 = vunpack.c.h.b16 %v4753
    %v5038 = vunpack.c.l.b16 %v4754
    %v5039 = vunpack.c.h.b16 %v4754
    %v5040 = vunpack.c.l.b16 %v4755
    %v5041 = vunpack.c.h.b16 %v4755
    %v5042 = vunpack.c.l.b16 %v4756
    %v5043 = vunpack.c.h.b16 %v4756
    %v5044 = vunpack.c.l.b16 %v4757
    %v5045 = vunpack.c.h.b16 %v4757
    %v5046 = vunpack.c.l.b16 %v4758
    %v5047 = vunpack.c.h.b16 %v4758
    %v5048 = vunpack.c.l.b16 %v4759
    %v5049 = vunpack.c.h.b16 %v4759
    %v5050 = vunpack.c.l.b16 %v4760
    %v5051 = vunpack.c.h.b16 %v4760
    %v5052 = vunpack.c.l.b16 %v4761
    %v5053 = vunpack.c.h.b16 %v4761
    %v5054 = vunpack.c.l.b16 %v4762
    %v5055 = vunpack.c.h.b16 %v4762
    %v5056 = vunpack.c.l.b16 %v4763
    %v5057 = vunpack.c.h.b16 %v4763
    %v5058 = vunpack.c.l.b16 %v4764
    %v5059 = vunpack.c.h.b16 %v4764
    %v5060 = vunpack.c.l.b16 %v4765
    %v5061 = vunpack.c.h.b16 %v4765
    %v5062 = vunpack.c.l.b16 %v4766
    %v5063 = vunpack.c.h.b16 %v4766
    %v5064 = vunpack.c.l.b16 %v4767
    %v5065 = vunpack.c.h.b16 %v4767
    %v5066 = vunpack.c.l.b16 %v4768
    %v5067 = vunpack.c.h.b16 %v4768
    %v5068 = vunpack.c.l.b16 %v4769
    %v5069 = vunpack.c.h.b16 %v4769
    %v5070 = vunpack.c.l.b16 %v4770
    %v5071 = vunpack.c.h.b16 %v4770
    %v5072 = vunpack.c.l.b16 %v4771
    %v5073 = vunpack.c.h.b16 %v4771
    %v5074 = vunpack.c.l.b16 %v4772
    %v5075 = vunpack.c.h.b16 %v4772
    %v5076 = vunpack.c.l.b16 %v4773
    %v5077 = vunpack.c.h.b16 %v4773
    %v5078 = vunpack.c.l.b16 %v4774
    %v5079 = vunpack.c.h.b16 %v4774
    %v5080 = vunpack.c.l.b16 %v4775
    %v5081 = vunpack.c.h.b16 %v4775
    %v5082 = vunpack.c.l.b16 %v4776
    %v5083 = vunpack.c.h.b16 %v4776
    %v5084 = vunpack.c.l.b16 %v4777
    %v5085 = vunpack.c.h.b16 %v4777
    %v5086 = vunpack.c.l.b16 %v4778
    %v5087 = vunpack.c.h.b16 %v4778
    %v5088 = vunpack.c.l.b16 %v4779
    %v5089 = vunpack.c.h.b16 %v4779
    %v5090 = vunpack.c.l.b16 %v4780
    %v5091 = vunpack.c.h.b16 %v4780
    %v5092 = vunpack.c.l.b16 %v4781
    %v5093 = vunpack.c.h.b16 %v4781
    %v5094 = vunpack.c.l.b16 %v4782
    %v5095 = vunpack.c.h.b16 %v4782
    %v5096 = vunpack.c.l.b16 %v4783
    %v5097 = vunpack.c.h.b16 %v4783
    %v5098 = vunpack.c.l.b16 %v4784
    %v5099 = vunpack.c.h.b16 %v4784
    %v5100 = vunpack.c.l.b16 %v4785
    %v5101 = vunpack.c.h.b16 %v4785
    %v5102 = vunpack.c.l.b16 %v4786
    %v5103 = vunpack.c.h.b16 %v4786
    %v5104 = vunpack.c.l.b16 %v4787
    %v5105 = vunpack.c.h.b16 %v4787
    %v5106 = vunpack.c.l.b16 %v4788
    %v5107 = vunpack.c.h.b16 %v4788
    %v5108 = vunpack.c.l.b16 %v4789
    %v5109 = vunpack.c.h.b16 %v4789
    %v5110 = vunpack.c.l.b16 %v4790
    %v5111 = vunpack.c.h.b16 %v4790
    %v5112 = vunpack.c.l.b16 %v4791
    %v5113 = vunpack.c.h.b16 %v4791
    %v5114 = vunpack.c.l.b16 %v4792
    %v5115 = vunpack.c.h.b16 %v4792
    %v5116 = vunpack.c.l.b16 %v4793
    %v5117 = vunpack.c.h.b16 %v4793
    %v5118 = vunpack.c.l.b16 %v4794
    %v5119 = vunpack.c.h.b16 %v4794
    %v5120 = vunpack.c.l.b16 %v4795
    %v5121 = vunpack.c.h.b16 %v4795
    %v5122 = vunpack.c.l.b16 %v4796
    %v5123 = vunpack.c.h.b16 %v4796
    %v5124 = vunpack.c.l.b16 %v4797
    %v5125 = vunpack.c.h.b16 %v4797
    %v5126 = vunpack.c.l.b16 %v4798
    %v5127 = vunpack.c.h.b16 %v4798
    %v5128 = vunpack.c.l.b16 %v4799
    %v5129 = vunpack.c.h.b16 %v4799
    %v5130 = vunpack.c.l.b16 %v4800
    %v5131 = vunpack.c.h.b16 %v4800
    %v5132 = vunpack.c.l.b16 %v4801
    %v5133 = vunpack.c.h.b16 %v4801
    %v5134 = vunpack.c.l.b16 %v4802
    %v5135 = vunpack.c.h.b16 %v4802
    %v5136 = vunpack.c.l.b16 %v4803
    %v5137 = vunpack.c.h.b16 %v4803
    %v5138 = vunpack.c.l.b16 %v4804
    %v5139 = vunpack.c.h.b16 %v4804
    %v5140 = vunpack.c.l.b16 %v4805
    %v5141 = vunpack.c.h.b16 %v4805
    %v5142 = vunpack.c.l.b16 %v4806
    %v5143 = vunpack.c.h.b16 %v4806
    %v5144 = vunpack.c.l.b16 %v4807
    %v5145 = vunpack.c.h.b16 %v4807
    %v5146 = vunpack.c.l.b16 %v4808
    %v5147 = vunpack.c.h.b16 %v4808
    %v5148 = vunpack.c.l.b16 %v4809
    %v5149 = vunpack.c.h.b16 %v4809
    %v5150 = vunpack.c.l.b16 %v4810
    %v5151 = vunpack.c.h.b16 %v4810
    %v5152 = vunpack.c.l.b16 %v4811
    %v5153 = vunpack.c.h.b16 %v4811
    %v5154 = vunpack.c.l.b16 %v4812
    %v5155 = vunpack.c.h.b16 %v4812
    %v5156 = vunpack.c.l.b16 %v4813
    %v5157 = vunpack.c.h.b16 %v4813
    %v5158 = vunpack.c.l.b16 %v4814
    %v5159 = vunpack.c.h.b16 %v4814
    %v5160 = vunpack.c.l.b16 %v4815
    %v5161 = vunpack.c.h.b16 %v4815
    %v5162 = vunpack.c.l.b16 %v4816
    %v5163 = vunpack.c.h.b16 %v4816
    %v5164 = vunpack.c.l.b16 %v4817
    %v5165 = vunpack.c.h.b16 %v4817
    %v5166 = vunpack.c.l.b16 %v4818
    %v5167 = vunpack.c.h.b16 %v4818
    %v5168 = vunpack.c.l.b16 %v4819
    %v5169 = vunpack.c.h.b16 %v4819
    %v5170 = vunpack.c.l.b16 %v4820
    %v5171 = vunpack.c.h.b16 %v4820
    %v5172 = vunpack.c.l.b16 %v4821
    %v5173 = vunpack.c.h.b16 %v4821
    %v5174 = vunpack.c.l.b16 %v4822
    %v5175 = vunpack.c.h.b16 %v4822
    %v5176 = vunpack.c.l.b16 %v4823
    %v5177 = vunpack.c.h.b16 %v4823
    %v5178 = vunpack.c.l.b16 %v4824
    %v5179 = vunpack.c.h.b16 %v4824
    %v5180 = vunpack.c.l.b16 %v4825
    %v5181 = vunpack.c.h.b16 %v4825
    %v5182 = vunpack.c.l.b16 %v4826
    %v5183 = vunpack.c.h.b16 %v4826
    %v5184 = vunpack.c.l.b16 %v4827
    %v5185 = vunpack.c.h.b16 %v4827
    %v5186 = vunpack.c.l.b16 %v4828
    %v5187 = vunpack.c.h.b16 %v4828
    %v5188 = vunpack.c.l.b16 %v4829
    %v5189 = vunpack.c.h.b16 %v4829
    %v5190 = vunpack.c.l.b16 %v4830
    %v5191 = vunpack.c.h.b16 %v4830
    %v5192 = vunpack.c.l.b16 %v4831
    %v5193 = vunpack.c.h.b16 %v4831
    %v5194 = vunpack.c.l.b16 %v4832
    %v5195 = vunpack.c.h.b16 %v4832
    %v5196 = vunpack.c.l.b16 %v4833
    %v5197 = vunpack.c.h.b16 %v4833
    %v5198 = vunpack.c.l.b16 %v4834
    %v5199 = vunpack.c.h.b16 %v4834
    %v5200 = vunpack.c.l.b16 %v4835
    %v5201 = vunpack.c.h.b16 %v4835
    %v5202 = vunpack.c.l.b16 %v4836
    %v5203 = vunpack.c.h.b16 %v4836
    %v5204 = vunpack.c.l.b16 %v4837
    %v5205 = vunpack.c.h.b16 %v4837
    %v5206 = vunpack.c.l.b16 %v4838
    %v5207 = vunpack.c.h.b16 %v4838
    %v5208 = vunpack.c.l.b16 %v4839
    %v5209 = vunpack.c.h.b16 %v4839
    %v5210 = vunpack.c.l.b16 %v4840
    %v5211 = vunpack.c.h.b16 %v4840
    %v5212 = vunpack.c.l.b16 %v4841
    %v5213 = vunpack.c.h.b16 %v4841
    %v5214 = vunpack.c.l.b16 %v4842
    %v5215 = vunpack.c.h.b16 %v4842
    %v5216 = vunpack.c.l.b16 %v4843
    %v5217 = vunpack.c.h.b16 %v4843
    %v5218 = vunpack.c.l.b16 %v4844
    %v5219 = vunpack.c.h.b16 %v4844
    %v5220 = vunpack.c.l.b16 %v4845
    %v5221 = vunpack.c.h.b16 %v4845
    %v5222 = vunpack.c.l.b16 %v4846
    %v5223 = vunpack.c.h.b16 %v4846
    %v5224 = vunpack.c.l.b16 %v4847
    %v5225 = vunpack.c.h.b16 %v4847
    %v5226 = vunpack.c.l.b16 %v4848
    %v5227 = vunpack.c.h.b16 %v4848
    %v5228 = vunpack.c.l.b16 %v4849
    %v5229 = vunpack.c.h.b16 %v4849
    %v5230 = vunpack.c.l.b16 %v4850
    %v5231 = vunpack.c.h.b16 %v4850
    %v5232 = vunpack.c.l.b16 %v4851
    %v5233 = vunpack.c.h.b16 %v4851
    %v5234 = vunpack.c.l.b16 %v4852
    %v5235 = vunpack.c.h.b16 %v4852
    %v5236 = vunpack.c.l.b16 %v4853
    %v5237 = vunpack.c.h.b16 %v4853
    %v5238 = vunpack.c.l.b16 %v4854
    %v5239 = vunpack.c.h.b16 %v4854
    %v5240 = vunpack.c.l.b16 %v4855
    %v5241 = vunpack.c.h.b16 %v4855
    %v5242 = vunpack.c.l.b16 %v4856
    %v5243 = vunpack.c.h.b16 %v4856
    %v5244 = vunpack.c.l.b16 %v4857
    %v5245 = vunpack.c.h.b16 %v4857
    %v5246 = vunpack.c.l.b16 %v4858
    %v5247 = vunpack.c.h.b16 %v4858
    %v5248 = vunpack.c.l.b16 %v4859
    %v5249 = vunpack.c.h.b16 %v4859
    %v5250 = vunpack.c.l.b16 %v4860
    %v5251 = vunpack.c.h.b16 %v4860
    %v5252 = vunpack.c.l.b16 %v4861
    %v5253 = vunpack.c.h.b16 %v4861
    %v5254 = vunpack.c.l.b16 %v4862
    %v5255 = vunpack.c.h.b16 %v4862
    %v5256 = vunpack.c.l.b16 %v4863
    %v5257 = vunpack.c.h.b16 %v4863
    %v5258 = vunpack.c.l.b16 %v4864
    %v5259 = vunpack.c.h.b16 %v4864
    %v5260 = vunpack.c.l.b16 %v4865
    %v5261 = vunpack.c.h.b16 %v4865
    %v5262 = vpack.c.b16 %v5008, %v5006
    %v5263 = vpack.c.b16 %v5009, %v5007
    %v5264 = vpack.c.b16 %v5012, %v5010
    %v5265 = vpack.c.b16 %v5013, %v5011
    %v5266 = vpack.c.b16 %v5016, %v5014
    %v5267 = vpack.c.b16 %v5017, %v5015
    %v5268 = vpack.c.b16 %v5020, %v5018
    %v5269 = vpack.c.b16 %v5021, %v5019
    %v5270 = vpack.c.b16 %v5024, %v5022
    %v5271 = vpack.c.b16 %v5025, %v5023
    %v5272 = vpack.c.b16 %v5028, %v5026
    %v5273 = vpack.c.b16 %v5029, %v5027
    %v5274 = vpack.c.b16 %v5032, %v5030
    %v5275 = vpack.c.b16 %v5033, %v5031
    %v5276 = vpack.c.b16 %v5036, %v5034
    %v5277 = vpack.c.b16 %v5037, %v5035
    %v5278 = vpack.c.b16 %v5040, %v5038
    %v5279 = vpack.c.b16 %v5041, %v5039
    %v5280 = vpack.c.b16 %v5044, %v5042
    %v5281 = vpack.c.b16 %v5045, %v5043
    %v5282 = vpack.c.b16 %v5048, %v5046
    %v5283 = vpack.c.b16 %v5049, %v5047
    %v5284 = vpack.c.b16 %v5052, %v5050
    %v5285 = vpack.c.b16 %v5053, %v5051
    %v5286 = vpack.c.b16 %v5056, %v5054
    %v5287 = vpack.c.b16 %v5057, %v5055
    %v5288 = vpack.c.b16 %v5060, %v5058
    %v5289 = vpack.c.b16 %v5061, %v5059
    %v5290 = vpack.c.b16 %v5064, %v5062
    %v5291 = vpack.c.b16 %v5065, %v5063
    %v5292 = vpack.c.b16 %v5068, %v5066
    %v5293 = vpack.c.b16 %v5069, %v5067
    %v5294 = vpack.c.b16 %v5072, %v5070
    %v5295 = vpack.c.b16 %v5073, %v5071
    %v5296 = vpack.c.b16 %v5076, %v5074
    %v5297 = vpack.c.b16 %v5077, %v5075
    %v5298 = vpack.c.b16 %v5080, %v5078
    %v5299 = vpack.c.b16 %v5081, %v5079
    %v5300 = vpack.c.b16 %v5084, %v5082
    %v5301 = vpack.c.b16 %v5085, %v5083
    %v5302 = vpack.c.b16 %v5088, %v5086
    %v5303 = vpack.c.b16 %v5089, %v5087
    %v5304 = vpack.c.b16 %v5092, %v5090
    %v5305 = vpack.c.b16 %v5093, %v5091
    %v5306 = vpack.c.b16 %v5096, %v5094
    %v5307 = vpack.c.b16 %v5097, %v5095
    %v5308 = vpack.c.b16 %v5100, %v5098
    %v5309 = vpack.c.b16 %v5101, %v5099
    %v5310 = vpack.c.b16 %v5104, %v5102
    %v5311 = vpack.c.b16 %v5105, %v5103
    %v5312 = vpack.c.b16 %v5108, %v5106
    %v5313 = vpack.c.b16 %v5109, %v5107
    %v5314 = vpack.c.b16 %v5112, %v5110
    %v5315 = vpack.c.b16 %v5113, %v5111
    %v5316 = vpack.c.b16 %v5116, %v5114
    %v5317 = vpack.c.b16 %v5117, %v5115
    %v5318 = vpack.c.b16 %v5120, %v5118
    %v5319 = vpack.c.b16 %v5121, %v5119
    %v5320 = vpack.c.b16 %v5124, %v5122
    %v5321 = vpack.c.b16 %v5125, %v5123
    %v5322 = vpack.c.b16 %v5128, %v5126
    %v5323 = vpack.c.b16 %v5129, %v5127
    %v5324 = vpack.c.b16 %v5132, %v5130
    %v5325 = vpack.c.b16 %v5133, %v5131
    %v5326 = vpack.c.b16 %v5136, %v5134
    %v5327 = vpack.c.b16 %v5137, %v5135
    %v5328 = vpack.c.b16 %v5140, %v5138
    %v5329 = vpack.c.b16 %v5141, %v5139
    %v5330 = vpack.c.b16 %v5144, %v5142
    %v5331 = vpack.c.b16 %v5145, %v5143
    %v5332 = vpack.c.b16 %v5148, %v5146
    %v5333 = vpack.c.b16 %v5149, %v5147
    %v5334 = vpack.c.b16 %v5152, %v5150
    %v5335 = vpack.c.b16 %v5153, %v5151
    %v5336 = vpack.c.b16 %v5156, %v5154
    %v5337 = vpack.c.b16 %v5157, %v5155
    %v5338 = vpack.c.b16 %v5160, %v5158
    %v5339 = vpack.c.b16 %v5161, %v5159
    %v5340 = vpack.c.b16 %v5164, %v5162
    %v5341 = vpack.c.b16 %v5165, %v5163
    %v5342 = vpack.c.b16 %v5168, %v5166
    %v5343 = vpack.c.b16 %v5169, %v5167
    %v5344 = vpack.c.b16 %v5172, %v5170
    %v5345 = vpack.c.b16 %v5173, %v5171
    %v5346 = vpack.c.b16 %v5176, %v5174
    %v5347 = vpack.c.b16 %v5177, %v5175
    %v5348 = vpack.c.b16 %v5180, %v5178
    %v5349 = vpack.c.b16 %v5181, %v5179
    %v5350 = vpack.c.b16 %v5184, %v5182
    %v5351 = vpack.c.b16 %v5185, %v5183
    %v5352 = vpack.c.b16 %v5188, %v5186
    %v5353 = vpack.c.b16 %v5189, %v5187
    %v5354 = vpack.c.b16 %v5192, %v5190
    %v5355 = vpack.c.b16 %v5193, %v5191
    %v5356 = vpack.c.b16 %v5196, %v5194
    %v5357 = vpack.c.b16 %v5197, %v5195
    %v5358 = vpack.c.b16 %v5200, %v5198
    %v5359 = vpack.c.b16 %v5201, %v5199
    %v5360 = vpack.c.b16 %v5204, %v5202
    %v5361 = vpack.c.b16 %v5205, %v5203
    %v5362 = vpack.c.b16 %v5208, %v5206
    %v5363 = vpack.c.b16 %v5209, %v5207
    %v5364 = vpack.c.b16 %v5212, %v5210
    %v5365 = vpack.c.b16 %v5213, %v5211
    %v5366 = vpack.c.b16 %v5216, %v5214
    %v5367 = vpack.c.b16 %v5217, %v5215
    %v5368 = vpack.c.b16 %v5220, %v5218
    %v5369 = vpack.c.b16 %v5221, %v5219
    %v5370 = vpack.c.b16 %v5224, %v5222
    %v5371 = vpack.c.b16 %v5225, %v5223
    %v5372 = vpack.c.b16 %v5228, %v5226
    %v5373 = vpack.c.b16 %v5229, %v5227
    %v5374 = vpack.c.b16 %v5232, %v5230
    %v5375 = vpack.c.b16 %v5233, %v5231
    %v5376 = vpack.c.b16 %v5236, %v5234
    %v5377 = vpack.c.b16 %v5237, %v5235
    %v5378 = vpack.c.b16 %v5240, %v5238
    %v5379 = vpack.c.b16 %v5241, %v5239
    %v5380 = vpack.c.b16 %v5244, %v5242
    %v5381 = vpack.c.b16 %v5245, %v5243
    %v5382 = vpack.c.b16 %v5248, %v5246
    %v5383 = vpack.c.b16 %v5249, %v5247
    %v5384 = vpack.c.b16 %v5252, %v5250
    %v5385 = vpack.c.b16 %v5253, %v5251
    %v5386 = vpack.c.b16 %v5256, %v5254
    %v5387 = vpack.c.b16 %v5257, %v5255
    %v5388 = vpack.c.b16 %v5260, %v5258
    %v5389 = vpack.c.b16 %v5261, %v5259
    %5518 = vmatprep.subr.bf16.mxu0 %v5263
    %5519 = vmatpush1.bf16.msra.mxu0 %v5262
    %5520 = vmatprep.subr.bf16.mxu0 %v5265
    %5521 = vmatpush1.bf16.msra.mxu0 %v5264
    %5522 = vmatprep.subr.bf16.mxu0 %v5267
    %5523 = vmatpush1.bf16.msra.mxu0 %v5266
    %5524 = vmatprep.subr.bf16.mxu0 %v5269
    %5525 = vmatpush1.bf16.msra.mxu0 %v5268
    %5526 = vmatprep.subr.bf16.mxu0 %v5271
    %5527 = vmatpush1.bf16.msra.mxu0 %v5270
    %5528 = vmatprep.subr.bf16.mxu0 %v5273
    %5529 = vmatpush1.bf16.msra.mxu0 %v5272
    %5530 = vmatprep.subr.bf16.mxu0 %v5275
    %5531 = vmatpush1.bf16.msra.mxu0 %v5274
    %5532 = vmatprep.subr.bf16.mxu0 %v5277
    %5533 = vmatpush1.bf16.msra.mxu0 %v5276
    %5534 = vmatprep.subr.bf16.mxu0 %v5279
    %5535 = vmatpush1.bf16.msra.mxu0 %v5278
    %5536 = vmatprep.subr.bf16.mxu0 %v5281
    %5537 = vmatpush1.bf16.msra.mxu0 %v5280
    %5538 = vmatprep.subr.bf16.mxu0 %v5283
    %5539 = vmatpush1.bf16.msra.mxu0 %v5282
    %5540 = vmatprep.subr.bf16.mxu0 %v5285
    %5541 = vmatpush1.bf16.msra.mxu0 %v5284
    %5542 = vmatprep.subr.bf16.mxu0 %v5287
    %5543 = vmatpush1.bf16.msra.mxu0 %v5286
    %5544 = vmatprep.subr.bf16.mxu0 %v5289
    %5545 = vmatpush1.bf16.msra.mxu0 %v5288
    %5546 = vmatprep.subr.bf16.mxu0 %v5291
    %5547 = vmatpush1.bf16.msra.mxu0 %v5290
    %5548 = vmatprep.subr.bf16.mxu0 %v5293
    %5549 = vmatpush1.bf16.msra.mxu0 %v5292
    %5550 = vmatprep.mubr.bf16.mxu0 %v4731
    %5551 = vmatmul.mubr.bf16.gmra.mrb[0].mxu0 %v4730
    %v5552 = vpop.f32.mrb[0].mxu0
    %v5553 = vadd.f32 %v4871, %v5552
    %v5554 = vpop.f32.mrb[0].mxu0
    %v5555 = vadd.f32 %v4875, %v5554
    %v5556 = vpop.f32.mrb[0].mxu0
    %v5557 = vpop.f32.mrb[0].mxu0
    %5558 = vdwg.mxu0
    %5559 = vmatprep.subr.bf16.mxu0 %v5295
    %5560 = vmatpush1.bf16.msra.mxu0 %v5294
    %5561 = vmatprep.subr.bf16.mxu0 %v5297
    %5562 = vmatpush1.bf16.msra.mxu0 %v5296
    %5563 = vmatprep.subr.bf16.mxu0 %v5299
    %5564 = vmatpush1.bf16.msra.mxu0 %v5298
    %5565 = vmatprep.subr.bf16.mxu0 %v5301
    %5566 = vmatpush1.bf16.msra.mxu0 %v5300
    %5567 = vmatprep.subr.bf16.mxu0 %v5303
    %5568 = vmatpush1.bf16.msra.mxu0 %v5302
    %5569 = vmatprep.subr.bf16.mxu0 %v5305
    %5570 = vmatpush1.bf16.msra.mxu0 %v5304
    %5571 = vmatprep.subr.bf16.mxu0 %v5307
    %5572 = vmatpush1.bf16.msra.mxu0 %v5306
    %5573 = vmatprep.subr.bf16.mxu0 %v5309
    %5574 = vmatpush1.bf16.msra.mxu0 %v5308
    %5575 = vmatprep.subr.bf16.mxu0 %v5311
    %5576 = vmatpush1.bf16.msra.mxu0 %v5310
    %5577 = vmatprep.subr.bf16.mxu0 %v5313
    %5578 = vmatpush1.bf16.msra.mxu0 %v5312
    %5579 = vmatprep.subr.bf16.mxu0 %v5315
    %5580 = vmatpush1.bf16.msra.mxu0 %v5314
    %5581 = vmatprep.subr.bf16.mxu0 %v5317
    %5582 = vmatpush1.bf16.msra.mxu0 %v5316
    %5583 = vmatprep.subr.bf16.mxu0 %v5319
    %5584 = vmatpush1.bf16.msra.mxu0 %v5318
    %5585 = vmatprep.subr.bf16.mxu0 %v5321
    %5586 = vmatpush1.bf16.msra.mxu0 %v5320
    %5587 = vmatprep.subr.bf16.mxu0 %v5323
    %5588 = vmatpush1.bf16.msra.mxu0 %v5322
    %5589 = vmatprep.subr.bf16.mxu0 %v5325
    %5590 = vmatpush1.bf16.msra.mxu0 %v5324
    %5591 = vmatprep.mubr.bf16.mxu0 %v4733
    %5592 = vmatmul.mubr.bf16.gmra.mrb[0].mxu0 %v4732
    %v5593 = vpop.f32.mrb[0].mxu0
    %v5594 = vadd.f32 %v5553, %v5593
    %v5595 = vpop.f32.mrb[0].mxu0
    %v5596 = vadd.f32 %v5555, %v5595
    %v5597 = vpop.f32.mrb[0].mxu0
    %v5598 = vpop.f32.mrb[0].mxu0
    %5599 = vdwg.mxu0
    %5600 = vmatprep.subr.bf16.mxu0 %v5327
    %5601 = vmatpush1.bf16.msra.mxu0 %v5326
    %5602 = vmatprep.subr.bf16.mxu0 %v5329
    %5603 = vmatpush1.bf16.msra.mxu0 %v5328
    %5604 = vmatprep.subr.bf16.mxu0 %v5331
    %5605 = vmatpush1.bf16.msra.mxu0 %v5330
    %5606 = vmatprep.subr.bf16.mxu0 %v5333
    %5607 = vmatpush1.bf16.msra.mxu0 %v5332
    %5608 = vmatprep.subr.bf16.mxu0 %v5335
    %5609 = vmatpush1.bf16.msra.mxu0 %v5334
    %5610 = vmatprep.subr.bf16.mxu0 %v5337
    %5611 = vmatpush1.bf16.msra.mxu0 %v5336
    %5612 = vmatprep.subr.bf16.mxu0 %v5339
    %5613 = vmatpush1.bf16.msra.mxu0 %v5338
    %5614 = vmatprep.subr.bf16.mxu0 %v5341
    %5615 = vmatpush1.bf16.msra.mxu0 %v5340
    %5616 = vmatprep.subr.bf16.mxu0 %v5343
    %5617 = vmatpush1.bf16.msra.mxu0 %v5342
    %5618 = vmatprep.subr.bf16.mxu0 %v5345
    %5619 = vmatpush1.bf16.msra.mxu0 %v5344
    %5620 = vmatprep.subr.bf16.mxu0 %v5347
    %5621 = vmatpush1.bf16.msra.mxu0 %v5346
    %5622 = vmatprep.subr.bf16.mxu0 %v5349
    %5623 = vmatpush1.bf16.msra.mxu0 %v5348
    %5624 = vmatprep.subr.bf16.mxu0 %v5351
    %5625 = vmatpush1.bf16.msra.mxu0 %v5350
    %5626 = vmatprep.subr.bf16.mxu0 %v5353
    %5627 = vmatpush1.bf16.msra.mxu0 %v5352
    %5628 = vmatprep.subr.bf16.mxu0 %v5355
    %5629 = vmatpush1.bf16.msra.mxu0 %v5354
    %5630 = vmatprep.subr.bf16.mxu0 %v5357
    %5631 = vmatpush1.bf16.msra.mxu0 %v5356
    %5632 = vmatprep.mubr.bf16.mxu0 %v4735
    %5633 = vmatmul.mubr.bf16.gmra.mrb[0].mxu0 %v4734
    %v5634 = vpop.f32.mrb[0].mxu0
    %v5635 = vadd.f32 %v5594, %v5634
    %v5636 = vpop.f32.mrb[0].mxu0
    %v5637 = vadd.f32 %v5596, %v5636
    %v5638 = vpop.f32.mrb[0].mxu0
    %v5639 = vpop.f32.mrb[0].mxu0
    %5640 = vdwg.mxu0
    %5641 = vmatprep.subr.bf16.mxu0 %v5359
    %5642 = vmatpush1.bf16.msra.mxu0 %v5358
    %5643 = vmatprep.subr.bf16.mxu0 %v5361
    %5644 = vmatpush1.bf16.msra.mxu0 %v5360
    %5645 = vmatprep.subr.bf16.mxu0 %v5363
    %5646 = vmatpush1.bf16.msra.mxu0 %v5362
    %5647 = vmatprep.subr.bf16.mxu0 %v5365
    %5648 = vmatpush1.bf16.msra.mxu0 %v5364
    %5649 = vmatprep.subr.bf16.mxu0 %v5367
    %5650 = vmatpush1.bf16.msra.mxu0 %v5366
    %5651 = vmatprep.subr.bf16.mxu0 %v5369
    %5652 = vmatpush1.bf16.msra.mxu0 %v5368
    %5653 = vmatprep.subr.bf16.mxu0 %v5371
    %5654 = vmatpush1.bf16.msra.mxu0 %v5370
    %5655 = vmatprep.subr.bf16.mxu0 %v5373
    %5656 = vmatpush1.bf16.msra.mxu0 %v5372
    %5657 = vmatprep.subr.bf16.mxu0 %v5375
    %5658 = vmatpush1.bf16.msra.mxu0 %v5374
    %5659 = vmatprep.subr.bf16.mxu0 %v5377
    %5660 = vmatpush1.bf16.msra.mxu0 %v5376
    %5661 = vmatprep.subr.bf16.mxu0 %v5379
    %5662 = vmatpush1.bf16.msra.mxu0 %v5378
    %5663 = vmatprep.subr.bf16.mxu0 %v5381
    %5664 = vmatpush1.bf16.msra.mxu0 %v5380
    %5665 = vmatprep.subr.bf16.mxu0 %v5383
    %5666 = vmatpush1.bf16.msra.mxu0 %v5382
    %5667 = vmatprep.subr.bf16.mxu0 %v5385
    %5668 = vmatpush1.bf16.msra.mxu0 %v5384
    %5669 = vmatprep.subr.bf16.mxu0 %v5387
    %5670 = vmatpush1.bf16.msra.mxu0 %v5386
    %5671 = vmatprep.subr.bf16.mxu0 %v5389
    %5672 = vmatpush1.bf16.msra.mxu0 %v5388
    %5673 = vmatprep.mubr.bf16.mxu0 %v4737
    %5674 = vmatmul.mubr.bf16.gmra.mrb[0].mxu0 %v4736
    %v5675 = vpop.f32.mrb[0].mxu0
    %v5676 = vadd.f32 %v5635, %v5675
    %v5677 = vpop.f32.mrb[0].mxu0
    %v5678 = vadd.f32 %v5637, %v5677
    %v5679 = vpop.f32.mrb[0].mxu0
    %v5680 = vpop.f32.mrb[0].mxu0
    %5681 = vdwg.mxu0
    %v5682 = vmax.f32 %v5676, 0.0
    %v5683 = vmax.f32 %v5678, 0.0
    %v5684 = vpack.c.bf16 %v5682, %v5682
    %v5685 = vpack.c.bf16 %v5683, %v5683
    %v5686 = vld [vmem:[#allocation23] sm:$0xf]
    %v5687 = vld [vmem:[#allocation23 + $0x4] sm:$0xf]
    %v5688 = vld [vmem:[#allocation23 + $0x8] sm:$0xf]
    %v5689 = vld [vmem:[#allocation23 + $0xc] sm:$0xf]
    %v5690 = vld [vmem:[#allocation23 + $0x10] sm:$0xf]
    %v5691 = vld [vmem:[#allocation23 + $0x14] sm:$0xf]
    %v5692 = vld [vmem:[#allocation23 + $0x18] sm:$0xf]
    %v5693 = vld [vmem:[#allocation23 + $0x1c] sm:$0xf]
    %v5694 = vld [vmem:[#allocation23 + $0x20] sm:$0xf]
    %v5695 = vld [vmem:[#allocation23 + $0x24] sm:$0xf]
    %v5696 = vld [vmem:[#allocation23 + $0x28] sm:$0xf]
    %v5697 = vld [vmem:[#allocation23 + $0x2c] sm:$0xf]
    %v5698 = vld [vmem:[#allocation23 + $0x30] sm:$0xf]
    %v5699 = vld [vmem:[#allocation23 + $0x34] sm:$0xf]
    %v5700 = vld [vmem:[#allocation23 + $0x38] sm:$0xf]
    %v5701 = vld [vmem:[#allocation23 + $0x3c] sm:$0xf]
    %v5702 = vld [vmem:[#allocation23 + $0x40] sm:$0xf]
    %v5703 = vld [vmem:[#allocation23 + $0x44] sm:$0xf]
    %v5704 = vld [vmem:[#allocation23 + $0x48] sm:$0xf]
    %v5705 = vld [vmem:[#allocation23 + $0x4c] sm:$0xf]
    %v5706 = vld [vmem:[#allocation23 + $0x50] sm:$0xf]
    %v5707 = vld [vmem:[#allocation23 + $0x54] sm:$0xf]
    %v5708 = vld [vmem:[#allocation23 + $0x58] sm:$0xf]
    %v5709 = vld [vmem:[#allocation23 + $0x5c] sm:$0xf]
    %v5710 = vld [vmem:[#allocation23 + $0x60] sm:$0xf]
    %v5711 = vld [vmem:[#allocation23 + $0x64] sm:$0xf]
    %v5712 = vld [vmem:[#allocation23 + $0x68] sm:$0xf]
    %v5713 = vld [vmem:[#allocation23 + $0x6c] sm:$0xf]
    %v5714 = vld [vmem:[#allocation23 + $0x70] sm:$0xf]
    %v5715 = vld [vmem:[#allocation23 + $0x74] sm:$0xf]
    %v5716 = vld [vmem:[#allocation23 + $0x78] sm:$0xf]
    %v5717 = vld [vmem:[#allocation23 + $0x7c] sm:$0xf]
    %v5718 = vld [vmem:[#allocation25] sm:$0x1]
    %v5720 = vlaneseq
    %v5721 = vshrl.u32 %v5720, 7
    %v5722 = vsub.s32 0, %v5721
    %v5723 = vrot.slane %v5718, %v5722
    %v5757 = vunpack.c.l.b16 %v5686
    %v5758 = vunpack.c.l.b16 %v5687
    %v5759 = vunpack.c.l.b16 %v5688
    %v5760 = vunpack.c.l.b16 %v5689
    %v5761 = vunpack.c.l.b16 %v5690
    %v5762 = vunpack.c.l.b16 %v5691
    %v5763 = vunpack.c.l.b16 %v5692
    %v5764 = vunpack.c.l.b16 %v5693
    %v5765 = vunpack.c.l.b16 %v5694
    %v5766 = vunpack.c.l.b16 %v5695
    %v5767 = vunpack.c.l.b16 %v5696
    %v5768 = vunpack.c.l.b16 %v5697
    %v5769 = vunpack.c.l.b16 %v5698
    %v5770 = vunpack.c.l.b16 %v5699
    %v5771 = vunpack.c.l.b16 %v5700
    %v5772 = vunpack.c.l.b16 %v5701
    %v5773 = vunpack.c.l.b16 %v5702
    %v5774 = vunpack.c.l.b16 %v5703
    %v5775 = vunpack.c.l.b16 %v5704
    %v5776 = vunpack.c.l.b16 %v5705
    %v5777 = vunpack.c.l.b16 %v5706
    %v5778 = vunpack.c.l.b16 %v5707
    %v5779 = vunpack.c.l.b16 %v5708
    %v5780 = vunpack.c.l.b16 %v5709
    %v5781 = vunpack.c.l.b16 %v5710
    %v5782 = vunpack.c.l.b16 %v5711
    %v5783 = vunpack.c.l.b16 %v5712
    %v5784 = vunpack.c.l.b16 %v5713
    %v5785 = vunpack.c.l.b16 %v5714
    %v5786 = vunpack.c.l.b16 %v5715
    %v5787 = vunpack.c.l.b16 %v5716
    %v5788 = vunpack.c.l.b16 %v5717
    %v5789 = vpack.c.b16 %v5758, %v5757
    %v5790 = vpack.c.b16 %v5760, %v5759
    %v5791 = vpack.c.b16 %v5762, %v5761
    %v5792 = vpack.c.b16 %v5764, %v5763
    %v5793 = vpack.c.b16 %v5766, %v5765
    %v5794 = vpack.c.b16 %v5768, %v5767
    %v5795 = vpack.c.b16 %v5770, %v5769
    %v5796 = vpack.c.b16 %v5772, %v5771
    %v5797 = vpack.c.b16 %v5774, %v5773
    %v5798 = vpack.c.b16 %v5776, %v5775
    %v5799 = vpack.c.b16 %v5778, %v5777
    %v5800 = vpack.c.b16 %v5780, %v5779
    %v5801 = vpack.c.b16 %v5782, %v5781
    %v5802 = vpack.c.b16 %v5784, %v5783
    %v5803 = vpack.c.b16 %v5786, %v5785
    %v5804 = vpack.c.b16 %v5788, %v5787
    %5821 = vmatprep.subr.bf16.mxu0 0
    %5822 = vmatpush1.bf16.msra.mxu0 %v5789
    %5823 = vmatprep.subr.bf16.mxu0 0
    %5824 = vmatpush1.bf16.msra.mxu0 %v5790
    %5825 = vmatprep.subr.bf16.mxu0 0
    %5826 = vmatpush1.bf16.msra.mxu0 %v5791
    %5827 = vmatprep.subr.bf16.mxu0 0
    %5828 = vmatpush1.bf16.msra.mxu0 %v5792
    %5829 = vmatprep.subr.bf16.mxu0 0
    %5830 = vmatpush1.bf16.msra.mxu0 %v5793
    %5831 = vmatprep.subr.bf16.mxu0 0
    %5832 = vmatpush1.bf16.msra.mxu0 %v5794
    %5833 = vmatprep.subr.bf16.mxu0 0
    %5834 = vmatpush1.bf16.msra.mxu0 %v5795
    %5835 = vmatprep.subr.bf16.mxu0 0
    %5836 = vmatpush1.bf16.msra.mxu0 %v5796
    %5837 = vmatprep.subr.bf16.mxu0 0
    %5838 = vmatpush1.bf16.msra.mxu0 %v5797
    %5839 = vmatprep.subr.bf16.mxu0 0
    %5840 = vmatpush1.bf16.msra.mxu0 %v5798
    %5841 = vmatprep.subr.bf16.mxu0 0
    %5842 = vmatpush1.bf16.msra.mxu0 %v5799
    %5843 = vmatprep.subr.bf16.mxu0 0
    %5844 = vmatpush1.bf16.msra.mxu0 %v5800
    %5845 = vmatprep.subr.bf16.mxu0 0
    %5846 = vmatpush1.bf16.msra.mxu0 %v5801
    %5847 = vmatprep.subr.bf16.mxu0 0
    %5848 = vmatpush1.bf16.msra.mxu0 %v5802
    %5849 = vmatprep.subr.bf16.mxu0 0
    %5850 = vmatpush1.bf16.msra.mxu0 %v5803
    %5851 = vmatprep.subr.bf16.mxu0 0
    %5852 = vmatpush1.bf16.msra.mxu0 %v5804
    %5853 = vmatprep.mubr.bf16.mxu0 %v5685
    %5854 = vmatmul.mubr.bf16.gmra.mrb[0].mxu0 %v5684
    %v5855 = vpop.f32.mrb[0].mxu0
    %v5856 = vadd.f32 %v5723, %v5855
    %v5857 = vpop.f32.mrb[0].mxu0
    %v5858 = vpop.f32.mrb[0].mxu0
    %v5859 = vpop.f32.mrb[0].mxu0
    %5860 = vdwg.mxu0
    %v5861 = vpack.c.bf16 %v5856, %v5856
    %5862 = vst [vmem:[#allocation26] sm:$0xf] %v5861
    // Predicated region
    $region122: #{tpu_custom_call.1} parent=1 // pred_check
      _
    $region123: #{tpu_custom_call.1} parent=1 // pred_check_branch
      %5864 = sbr.rel (0) target = $region125
    $region124: #{tpu_custom_call.1} parent=1 // pred_region
      %s5866 = ssub.s32 64, 64
      %5867 = vsyncadd [#allocation4], %s5866
      %s5869 = sshll.u32 [#allocation26], 4
      %s5870 = int_to_ptr.vmem [resolvable:$true] %s5869
      %5872 = dma.vmem_to_hbm [thread:$0]  %s5870, 64, %s15, [#allocation4]
    $region125: #{tpu_custom_call.1} parent=1 // pred_fallthru
      _
    // Predicated region
    $region126: #{tpu_custom_call.1} parent=1 // pred_check
      _
    $region127: #{tpu_custom_call.1} parent=1 // pred_check_branch
      %5874 = sbr.rel (0) target = $region129
    $region128: #{tpu_custom_call.1} parent=1 // pred_region
      %5875 = dma.done [#allocation4], 64
    $region129: #{tpu_custom_call.1} parent=1 // pred_fallthru
      _
    %5876 = vsyncpa [#allocation3], 1
    %5877 = vsyncpa [#allocation6], 1
    %5878 = vsyncpa [#allocation9], 1
    %5879 = vsyncpa [#allocation12], 1
    %5880 = vsyncpa [#allocation15], 1
    %5881 = vsyncpa [#allocation18], 1
    %5882 = vsyncpa [#allocation21], 1
    %5883 = vsyncpa [#allocation24], 1
    %5884 = vsyncpa [#allocation4], 1

</llo_original>
